<compile_context>
chip_gen: v6e
topology: v6e:2x2x1
jax: 0.10.0
libtpu: 0.0.40
codegen_flags: <defaults>
</compile_context>

<pallas_src>
import functools

import numpy as np
import jax
import jax.numpy as jnp
from jax.experimental import pallas as pl
from jax.experimental.pallas import tpu as pltpu

LANES = 128  # pad all channel/feature dims to one f32 vreg lane width


# ---------------------------------------------------------------------------
# Static 0/1 selection matrices (numpy, shapes only -> baked constants).
# g2 / g3 gather the im2col rows for conv2 / conv3; gl folds the NCHW flatten
# into 4 "taps" feeding l1.  Per-tap row blocks are padded to multiples of 8
# sublanes so all in-kernel row slices are vreg aligned.
# ---------------------------------------------------------------------------
@functools.lru_cache(maxsize=None)
def _build_selectors(B, H, W):
    OH1, OW1 = (H - 3) // 2 + 1, (W - 3) // 2 + 1
    OH2, OW2 = (OH1 - 3) // 2 + 1, (OW1 - 3) // 2 + 1
    OH3, OW3 = OH2 - 2, OW2 - 2
    M1, M2, M3 = B * OH1 * OW1, B * OH2 * OW2, B * OH3 * OW3
    M1P = -(-M1 // 8) * 8

    def stack(g):  # [ntap, rows, K] -> [ntap * rows_p, K], rows_p multiple of 8
        ntap, rows, K = g.shape
        rows_p = -(-rows // 8) * 8
        out = np.zeros((ntap * rows_p, K), np.float32)
        for t in range(ntap):
            out[t * rows_p:t * rows_p + rows] = g[t]
        return out

    g2 = np.zeros((9, M2, M1P), np.float32)
    g3 = np.zeros((9, M3, M2), np.float32)
    for i in range(3):
        for j in range(3):
            t = i * 3 + j
            for b in range(B):
                for oh in range(OH2):
                    for ow in range(OW2):
                        g2[t, (b * OH2 + oh) * OW2 + ow,
                           (b * OH1 + 2 * oh + i) * OW1 + 2 * ow + j] = 1.0
                for oh in range(OH3):
                    for ow in range(OW3):
                        g3[t, (b * OH3 + oh) * OW3 + ow,
                           (b * OH2 + oh + i) * OW2 + ow + j] = 1.0

    ntap = OH3 * OW3  # flatten of [B, 16, OH3, OW3] feeding l1
    gl = np.zeros((ntap, B, M3), np.float32)
    for t in range(ntap):
        for b in range(B):
            gl[t, b, b * ntap + t] = 1.0

    dims = (OH1, OW1, OH2, OW2, OH3, OW3, M1, M1P, M2, M3, ntap)
    return stack(g2), stack(g3), stack(gl), dims


# ---------------------------------------------------------------------------
# Single fused kernel: conv1 -> conv2 -> conv3 -> l1 -> l2 -> l3 (+ReLUs),
# everything resident in VMEM, only pre1 (x1), pre2 (x2) and logits stored.
# ---------------------------------------------------------------------------
def _make_kernel(m2, m3, bsz):
    def kernel(p1_ref, w1_ref, b1_ref,
               g2_ref, w2_ref, b2_ref,
               g3_ref, w3_ref, b3_ref,
               gl_ref, wl1_ref, bl1_ref,
               wl2_ref, bl2_ref, wl3_ref, bl3_ref,
               x1_ref, x2_ref, out_ref):
        dot = lambda a, b: jnp.dot(a, b, preferred_element_type=jnp.float32)

        def conv_taps(h, g_ref, w_ref, b_ref, rows):
            ntap = w_ref.shape[0]
            rows_p = g_ref.shape[0] // ntap
            r = dot(g_ref[...], h)                    # all tap gathers: one MXU pass
            acc = b_ref[...] + dot(r[0:rows_p], w_ref[0])
            for t in range(1, ntap):                  # static unroll
                acc = acc + dot(r[t * rows_p:(t + 1) * rows_p], w_ref[t])
            return acc[:rows]

        # conv1 (im2col patches precomputed on host)
        pre1 = dot(p1_ref[...], w1_ref[...]) + b1_ref[...]
        x1_ref[...] = pre1
        h1 = jnp.maximum(pre1, 0.0)

        # conv2
        pre2 = conv_taps(h1, g2_ref, w2_ref, b2_ref, m2)
        x2_ref[...] = pre2
        h2 = jnp.maximum(pre2, 0.0)

        # conv3 (pre-activation not needed -> never stored)
        h3 = jnp.maximum(conv_taps(h2, g3_ref, w3_ref, b3_ref, m3), 0.0)

        # flatten + l1 (flatten folded into the selection taps), then l2, l3
        a1 = jnp.maximum(conv_taps(h3, gl_ref, wl1_ref, bl1_ref, bsz), 0.0)
        a2 = jnp.maximum(dot(a1, wl2_ref[...]) + bl2_ref[...], 0.0)
        out_ref[...] = jnp.maximum(dot(a2, wl3_ref[...]) + bl3_ref[...], 0.0)

    return kernel


# ---------------------------------------------------------------------------
# Host glue: 3x3 stride-2 im2col of the NCHW input (strided slicing/reshape),
# feature order c*9 + i*3 + j to match PyTorch OIHW weight flattening.
# ---------------------------------------------------------------------------
def _im2col_s2(x_nchw):
    B, C, H, W = x_nchw.shape
    OH, OW = (H - 3) // 2 + 1, (W - 3) // 2 + 1
    patches = [x_nchw[:, :, i:i + 2 * OH:2, j:j + 2 * OW:2]
               for i in range(3) for j in range(3)]
    p = jnp.stack(patches, axis=2).reshape(B, C * 9, OH, OW)
    return p.transpose(0, 2, 3, 1).reshape(B * OH * OW, C * 9)


@jax.jit
def forward(params, x):
    B, _, H, W = x.shape
    x = x.astype(jnp.float32)
    g2s, g3s, gls, dims = _build_selectors(B, H, W)
    OH1, OW1, OH2, OW2, OH3, OW3, M1, M1P, M2, M3, ntap = dims

    def padw(a):  # zero-pad last two dims up to (LANES, LANES)
        pads = [(0, 0)] * (a.ndim - 2) + [(0, LANES - a.shape[-2]),
                                          (0, LANES - a.shape[-1])]
        return jnp.pad(a, pads)

    def padb(v):  # [n] -> [1, LANES]
        return jnp.pad(v.reshape(1, -1), ((0, 0), (0, LANES - v.shape[0])))

    p1 = _im2col_s2(x)                                          # [M1, 27]
    p1 = jnp.pad(p1, ((0, M1P - M1), (0, LANES - p1.shape[1])))

    # layout-only weight prep: OIHW -> per-tap [Cin, Cout], zero-padded to 128
    w1 = padw(params["cw1"].reshape(8, -1).T)
    w2 = padw(jnp.transpose(params["cw2"], (2, 3, 1, 0)).reshape(9, 8, 16))
    w3 = padw(jnp.transpose(params["cw3"], (2, 3, 1, 0)).reshape(9, 16, 16))
    wl1 = padw(params["lw1"].reshape(16, ntap, 16).transpose(1, 0, 2))
    wl2, wl3 = padw(params["lw2"]), padw(params["lw3"])
    b1, b2, b3 = padb(params["cb1"]), padb(params["cb2"]), padb(params["cb3"])
    bl1, bl2, bl3 = padb(params["lb1"]), padb(params["lb2"]), padb(params["lb3"])

    vmem = pl.BlockSpec(memory_space=pltpu.MemorySpace.VMEM)
    operands = (p1, w1, b1,
                jnp.asarray(g2s), w2, b2,
                jnp.asarray(g3s), w3, b3,
                jnp.asarray(gls), wl1, bl1,
                wl2, bl2, wl3, bl3)

    x1p, x2p, outp = pl.pallas_call(
        _make_kernel(M2, M3, B),
        out_shape=(jax.ShapeDtypeStruct((M1P, LANES), jnp.float32),   # pre-conv1
                   jax.ShapeDtypeStruct((M2, LANES), jnp.float32),    # pre-conv2
                   jax.ShapeDtypeStruct((B, LANES), jnp.float32)),    # logits
        in_specs=[vmem] * len(operands),
        out_specs=(vmem, vmem, vmem),
    )(*operands)

    # un-pad + relayout only the two returned pre-activations back to NCHW
    x1 = x1p[:M1, :8].reshape(B, OH1, OW1, 8).transpose(0, 3, 1, 2)
    x2 = x2p[:, :16].reshape(B, OH2, OW2, 16).transpose(0, 3, 1, 2)
    out = outp[:, :2]
    return out, x1, x2, x


# ---------------------------------------------------------------------------
# Deterministic parameter init (shapes from Experimental_model1.__init__)
# ---------------------------------------------------------------------------
def init_params(key):
    ks = jax.random.split(key, 12)

    def conv_w(k, oc, ic, kh, kw):
        fan_in = ic * kh * kw
        return jax.random.uniform(k, (oc, ic, kh, kw), jnp.float32,
                                  -1.0, 1.0) / jnp.sqrt(fan_in)

    def lin_w(k, i, o):
        return jax.random.uniform(k, (i, o), jnp.float32, -1.0, 1.0) / jnp.sqrt(i)

    def bias(k, n, fan_in):
        return jax.random.uniform(k, (n,), jnp.float32, -1.0, 1.0) / jnp.sqrt(fan_in)

    return dict(
        cw1=conv_w(ks[0], 8, 3, 3, 3),   cb1=bias(ks[1], 8, 3 * 9),
        cw2=conv_w(ks[2], 16, 8, 3, 3),  cb2=bias(ks[3], 16, 8 * 9),
        cw3=conv_w(ks[4], 16, 16, 3, 3), cb3=bias(ks[5], 16, 16 * 9),
        lw1=lin_w(ks[6], 64, 16),        lb1=bias(ks[7], 16, 64),
        lw2=lin_w(ks[8], 16, 8),         lb2=bias(ks[9], 8, 16),
        lw3=lin_w(ks[10], 8, 2),         lb3=bias(ks[11], 2, 8),
    )


# ---------------------------------------------------------------------------
# Pure-JAX reference (mirrors Experimental_model1.forward) for verification
# ---------------------------------------------------------------------------
def forward_ref(params, x):
    def conv(h, w, b, s):
        y = jax.lax.conv_general_dilated(
            h, w, window_strides=s, padding="VALID",
            dimension_numbers=("NCHW", "OIHW", "NCHW"))
        return y + b.reshape(1, -1, 1, 1)

    relu = lambda t: jnp.maximum(t, 0.0)
    x3 = x
    x1 = conv(x, params["cw1"], params["cb1"], (2, 2))
    x2 = conv(relu(x1), params["cw2"], params["cb2"], (2, 2))
    h = relu(conv(relu(x2), params["cw3"], params["cb3"], (1, 1)))
    h = h.reshape(x.shape[0], -1)
    h = relu(h @ params["lw1"] + params["lb1"])
    h = relu(h @ params["lw2"] + params["lb2"])
    h = relu(h @ params["lw3"] + params["lb3"])
    return h, x1, x2, x3


if __name__ == "__main__":
    key = jax.random.PRNGKey(0)
    pkey, xkey = jax.random.split(key)
    params = init_params(pkey)
    # 20x20 input so the flattened conv stack yields exactly 64 features
    # (20 -> conv s2 -> 9 -> conv s2 -> 4 -> conv s1 -> 2; 16*2*2 = 64).
    x = jax.random.normal(xkey, (2, 3, 20, 20), jnp.float32)

    out = forward(params, x)
    out = jax.block_until_ready(out)

    ref = forward_ref(params, x)
    for o, r in zip(out, ref):
        assert o.shape == r.shape, (o.shape, r.shape)
        assert jnp.allclose(o, r, rtol=1e-4, atol=1e-4), float(jnp.max(jnp.abs(o - r)))

    print("KERNEL_OK")
</pallas_src>

<mosaic_0001>
module attributes {stable_mosaic.version = 11 : i64} {
  func.func @kernel(%arg0: memref<168x128xf32, #tpu.memory_space<vmem>>, %arg1: memref<128x128xf32, #tpu.memory_space<vmem>>, %arg2: memref<1x128xf32, #tpu.memory_space<vmem>>, %arg3: memref<288x168xf32, #tpu.memory_space<vmem>>, %arg4: memref<9x128x128xf32, #tpu.memory_space<vmem>>, %arg5: memref<1x128xf32, #tpu.memory_space<vmem>>, %arg6: memref<72x32xf32, #tpu.memory_space<vmem>>, %arg7: memref<9x128x128xf32, #tpu.memory_space<vmem>>, %arg8: memref<1x128xf32, #tpu.memory_space<vmem>>, %arg9: memref<32x8xf32, #tpu.memory_space<vmem>>, %arg10: memref<4x128x128xf32, #tpu.memory_space<vmem>>, %arg11: memref<1x128xf32, #tpu.memory_space<vmem>>, %arg12: memref<128x128xf32, #tpu.memory_space<vmem>>, %arg13: memref<1x128xf32, #tpu.memory_space<vmem>>, %arg14: memref<128x128xf32, #tpu.memory_space<vmem>>, %arg15: memref<1x128xf32, #tpu.memory_space<vmem>>, %arg16: memref<168x128xf32, #tpu.memory_space<vmem>>, %arg17: memref<32x128xf32, #tpu.memory_space<vmem>>, %arg18: memref<2x128xf32, #tpu.memory_space<vmem>>) attributes {dimension_semantics = [], scalar_prefetch = 0 : i64, scratch_operands = 0 : i64, tpu.core_type = #tpu.core_type<tc>} {
    %c0 = arith.constant 0 : index
    %c0_0 = arith.constant 0 : index
    %0 = vector.load %arg0[%c0, %c0_0] : memref<168x128xf32, #tpu.memory_space<vmem>>, vector<168x128xf32>
    %c0_1 = arith.constant 0 : index
    %c0_2 = arith.constant 0 : index
    %1 = vector.load %arg1[%c0_1, %c0_2] : memref<128x128xf32, #tpu.memory_space<vmem>>, vector<128x128xf32>
    %cst = arith.constant dense<0.000000e+00> : vector<168x128xf32>
    %2 = tpu.matmul %0, %1, %cst {dimension_numbers = #tpu.dot_dimension_numbers<[1], [0], [0], [1], [0, 0, 1, 1], [], []>} : vector<168x128xf32>, vector<128x128xf32>, vector<168x128xf32> -> vector<168x128xf32>
    %c0_3 = arith.constant 0 : index
    %c0_4 = arith.constant 0 : index
    %3 = vector.load %arg2[%c0_3, %c0_4] : memref<1x128xf32, #tpu.memory_space<vmem>>, vector<1x128xf32>
    %4 = vector.broadcast %3 : vector<1x128xf32> to vector<168x128xf32>
    %5 = arith.addf %2, %4 : vector<168x128xf32>
    %c0_5 = arith.constant 0 : index
    %c0_6 = arith.constant 0 : index
    %6 = vector.load %arg16[%c0_5, %c0_6] : memref<168x128xf32, #tpu.memory_space<vmem>>, vector<168x128xf32>
    tpu.vector_store %arg16[%c0_5, %c0_6], %5 {strides = array<i32>} : memref<168x128xf32, #tpu.memory_space<vmem>>, vector<168x128xf32>,
    %cst_7 = arith.constant 0.000000e+00 : f32
    %7 = vector.broadcast %cst_7 : f32 to vector<168x128xf32>
    %8 = arith.maximumf %5, %7 : vector<168x128xf32>
    %c0_8 = arith.constant 0 : index
    %c0_9 = arith.constant 0 : index
    %9 = vector.load %arg3[%c0_8, %c0_9] : memref<288x168xf32, #tpu.memory_space<vmem>>, vector<288x168xf32>
    %cst_10 = arith.constant dense<0.000000e+00> : vector<288x128xf32>
    %10 = tpu.matmul %9, %8, %cst_10 {dimension_numbers = #tpu.dot_dimension_numbers<[1], [0], [0], [1], [0, 0, 1, 1], [], []>} : vector<288x168xf32>, vector<168x128xf32>, vector<288x128xf32> -> vector<288x128xf32>
    %c0_11 = arith.constant 0 : index
    %c0_12 = arith.constant 0 : index
    %11 = vector.load %arg5[%c0_11, %c0_12] : memref<1x128xf32, #tpu.memory_space<vmem>>, vector<1x128xf32>
    %12 = vector.extract_strided_slice %10 {offsets = [0, 0], sizes = [32, 128], strides = [1, 1]} : vector<288x128xf32> to vector<32x128xf32>
    %c0_13 = arith.constant 0 : index
    %c0_14 = arith.constant 0 : index
    %c0_15 = arith.constant 0 : index
    %13 = vector.load %arg4[%c0_13, %c0_14, %c0_15] : memref<9x128x128xf32, #tpu.memory_space<vmem>>, vector<1x128x128xf32>
    %14 = vector.shape_cast %13 : vector<1x128x128xf32> to vector<128x128xf32>
    %cst_16 = arith.constant dense<0.000000e+00> : vector<32x128xf32>
    %15 = tpu.matmul %12, %14, %cst_16 {dimension_numbers = #tpu.dot_dimension_numbers<[1], [0], [0], [1], [0, 0, 1, 1], [], []>} : vector<32x128xf32>, vector<128x128xf32>, vector<32x128xf32> -> vector<32x128xf32>
    %16 = vector.broadcast %11 : vector<1x128xf32> to vector<32x128xf32>
    %17 = arith.addf %16, %15 : vector<32x128xf32>
    %18 = vector.extract_strided_slice %10 {offsets = [32, 0], sizes = [32, 128], strides = [1, 1]} : vector<288x128xf32> to vector<32x128xf32>
    %c1 = arith.constant 1 : index
    %c0_17 = arith.constant 0 : index
    %c0_18 = arith.constant 0 : index
    %19 = vector.load %arg4[%c1, %c0_17, %c0_18] : memref<9x128x128xf32, #tpu.memory_space<vmem>>, vector<1x128x128xf32>
    %20 = vector.shape_cast %19 : vector<1x128x128xf32> to vector<128x128xf32>
    %cst_19 = arith.constant dense<0.000000e+00> : vector<32x128xf32>
    %21 = tpu.matmul %18, %20, %cst_19 {dimension_numbers = #tpu.dot_dimension_numbers<[1], [0], [0], [1], [0, 0, 1, 1], [], []>} : vector<32x128xf32>, vector<128x128xf32>, vector<32x128xf32> -> vector<32x128xf32>
    %22 = arith.addf %17, %21 : vector<32x128xf32>
    %23 = vector.extract_strided_slice %10 {offsets = [64, 0], sizes = [32, 128], strides = [1, 1]} : vector<288x128xf32> to vector<32x128xf32>
    %c2 = arith.constant 2 : index
    %c0_20 = arith.constant 0 : index
    %c0_21 = arith.constant 0 : index
    %24 = vector.load %arg4[%c2, %c0_20, %c0_21] : memref<9x128x128xf32, #tpu.memory_space<vmem>>, vector<1x128x128xf32>
    %25 = vector.shape_cast %24 : vector<1x128x128xf32> to vector<128x128xf32>
    %cst_22 = arith.constant dense<0.000000e+00> : vector<32x128xf32>
    %26 = tpu.matmul %23, %25, %cst_22 {dimension_numbers = #tpu.dot_dimension_numbers<[1], [0], [0], [1], [0, 0, 1, 1], [], []>} : vector<32x128xf32>, vector<128x128xf32>, vector<32x128xf32> -> vector<32x128xf32>
    %27 = arith.addf %22, %26 : vector<32x128xf32>
    %28 = vector.extract_strided_slice %10 {offsets = [96, 0], sizes = [32, 128], strides = [1, 1]} : vector<288x128xf32> to vector<32x128xf32>
    %c3 = arith.constant 3 : index
    %c0_23 = arith.constant 0 : index
    %c0_24 = arith.constant 0 : index
    %29 = vector.load %arg4[%c3, %c0_23, %c0_24] : memref<9x128x128xf32, #tpu.memory_space<vmem>>, vector<1x128x128xf32>
    %30 = vector.shape_cast %29 : vector<1x128x128xf32> to vector<128x128xf32>
    %cst_25 = arith.constant dense<0.000000e+00> : vector<32x128xf32>
    %31 = tpu.matmul %28, %30, %cst_25 {dimension_numbers = #tpu.dot_dimension_numbers<[1], [0], [0], [1], [0, 0, 1, 1], [], []>} : vector<32x128xf32>, vector<128x128xf32>, vector<32x128xf32> -> vector<32x128xf32>
    %32 = arith.addf %27, %31 : vector<32x128xf32>
    %33 = vector.extract_strided_slice %10 {offsets = [128, 0], sizes = [32, 128], strides = [1, 1]} : vector<288x128xf32> to vector<32x128xf32>
    %c4 = arith.constant 4 : index
    %c0_26 = arith.constant 0 : index
    %c0_27 = arith.constant 0 : index
    %34 = vector.load %arg4[%c4, %c0_26, %c0_27] : memref<9x128x128xf32, #tpu.memory_space<vmem>>, vector<1x128x128xf32>
    %35 = vector.shape_cast %34 : vector<1x128x128xf32> to vector<128x128xf32>
    %cst_28 = arith.constant dense<0.000000e+00> : vector<32x128xf32>
    %36 = tpu.matmul %33, %35, %cst_28 {dimension_numbers = #tpu.dot_dimension_numbers<[1], [0], [0], [1], [0, 0, 1, 1], [], []>} : vector<32x128xf32>, vector<128x128xf32>, vector<32x128xf32> -> vector<32x128xf32>
    %37 = arith.addf %32, %36 : vector<32x128xf32>
    %38 = vector.extract_strided_slice %10 {offsets = [160, 0], sizes = [32, 128], strides = [1, 1]} : vector<288x128xf32> to vector<32x128xf32>
    %c5 = arith.constant 5 : index
    %c0_29 = arith.constant 0 : index
    %c0_30 = arith.constant 0 : index
    %39 = vector.load %arg4[%c5, %c0_29, %c0_30] : memref<9x128x128xf32, #tpu.memory_space<vmem>>, vector<1x128x128xf32>
    %40 = vector.shape_cast %39 : vector<1x128x128xf32> to vector<128x128xf32>
    %cst_31 = arith.constant dense<0.000000e+00> : vector<32x128xf32>
    %41 = tpu.matmul %38, %40, %cst_31 {dimension_numbers = #tpu.dot_dimension_numbers<[1], [0], [0], [1], [0, 0, 1, 1], [], []>} : vector<32x128xf32>, vector<128x128xf32>, vector<32x128xf32> -> vector<32x128xf32>
    %42 = arith.addf %37, %41 : vector<32x128xf32>
    %43 = vector.extract_strided_slice %10 {offsets = [192, 0], sizes = [32, 128], strides = [1, 1]} : vector<288x128xf32> to vector<32x128xf32>
    %c6 = arith.constant 6 : index
    %c0_32 = arith.constant 0 : index
    %c0_33 = arith.constant 0 : index
    %44 = vector.load %arg4[%c6, %c0_32, %c0_33] : memref<9x128x128xf32, #tpu.memory_space<vmem>>, vector<1x128x128xf32>
    %45 = vector.shape_cast %44 : vector<1x128x128xf32> to vector<128x128xf32>
    %cst_34 = arith.constant dense<0.000000e+00> : vector<32x128xf32>
    %46 = tpu.matmul %43, %45, %cst_34 {dimension_numbers = #tpu.dot_dimension_numbers<[1], [0], [0], [1], [0, 0, 1, 1], [], []>} : vector<32x128xf32>, vector<128x128xf32>, vector<32x128xf32> -> vector<32x128xf32>
    %47 = arith.addf %42, %46 : vector<32x128xf32>
    %48 = vector.extract_strided_slice %10 {offsets = [224, 0], sizes = [32, 128], strides = [1, 1]} : vector<288x128xf32> to vector<32x128xf32>
    %c7 = arith.constant 7 : index
    %c0_35 = arith.constant 0 : index
    %c0_36 = arith.constant 0 : index
    %49 = vector.load %arg4[%c7, %c0_35, %c0_36] : memref<9x128x128xf32, #tpu.memory_space<vmem>>, vector<1x128x128xf32>
    %50 = vector.shape_cast %49 : vector<1x128x128xf32> to vector<128x128xf32>
    %cst_37 = arith.constant dense<0.000000e+00> : vector<32x128xf32>
    %51 = tpu.matmul %48, %50, %cst_37 {dimension_numbers = #tpu.dot_dimension_numbers<[1], [0], [0], [1], [0, 0, 1, 1], [], []>} : vector<32x128xf32>, vector<128x128xf32>, vector<32x128xf32> -> vector<32x128xf32>
    %52 = arith.addf %47, %51 : vector<32x128xf32>
    %53 = vector.extract_strided_slice %10 {offsets = [256, 0], sizes = [32, 128], strides = [1, 1]} : vector<288x128xf32> to vector<32x128xf32>
    %c8 = arith.constant 8 : index
    %c0_38 = arith.constant 0 : index
    %c0_39 = arith.constant 0 : index
    %54 = vector.load %arg4[%c8, %c0_38, %c0_39] : memref<9x128x128xf32, #tpu.memory_space<vmem>>, vector<1x128x128xf32>
    %55 = vector.shape_cast %54 : vector<1x128x128xf32> to vector<128x128xf32>
    %cst_40 = arith.constant dense<0.000000e+00> : vector<32x128xf32>
    %56 = tpu.matmul %53, %55, %cst_40 {dimension_numbers = #tpu.dot_dimension_numbers<[1], [0], [0], [1], [0, 0, 1, 1], [], []>} : vector<32x128xf32>, vector<128x128xf32>, vector<32x128xf32> -> vector<32x128xf32>
    %57 = arith.addf %52, %56 : vector<32x128xf32>
    %c0_41 = arith.constant 0 : index
    %c0_42 = arith.constant 0 : index
    %58 = vector.load %arg17[%c0_41, %c0_42] : memref<32x128xf32, #tpu.memory_space<vmem>>, vector<32x128xf32>
    tpu.vector_store %arg17[%c0_41, %c0_42], %57 {strides = array<i32>} : memref<32x128xf32, #tpu.memory_space<vmem>>, vector<32x128xf32>,
    %cst_43 = arith.constant 0.000000e+00 : f32
    %59 = vector.broadcast %cst_43 : f32 to vector<32x128xf32>
    %60 = arith.maximumf %57, %59 : vector<32x128xf32>
    %c0_44 = arith.constant 0 : index
    %c0_45 = arith.constant 0 : index
    %61 = vector.load %arg6[%c0_44, %c0_45] : memref<72x32xf32, #tpu.memory_space<vmem>>, vector<72x32xf32>
    %cst_46 = arith.constant dense<0.000000e+00> : vector<72x128xf32>
    %62 = tpu.matmul %61, %60, %cst_46 {dimension_numbers = #tpu.dot_dimension_numbers<[1], [0], [0], [1], [0, 0, 1, 1], [], []>} : vector<72x32xf32>, vector<32x128xf32>, vector<72x128xf32> -> vector<72x128xf32>
    %c0_47 = arith.constant 0 : index
    %c0_48 = arith.constant 0 : index
    %63 = vector.load %arg8[%c0_47, %c0_48] : memref<1x128xf32, #tpu.memory_space<vmem>>, vector<1x128xf32>
    %64 = vector.extract_strided_slice %62 {offsets = [0, 0], sizes = [8, 128], strides = [1, 1]} : vector<72x128xf32> to vector<8x128xf32>
    %c0_49 = arith.constant 0 : index
    %c0_50 = arith.constant 0 : index
    %c0_51 = arith.constant 0 : index
    %65 = vector.load %arg7[%c0_49, %c0_50, %c0_51] : memref<9x128x128xf32, #tpu.memory_space<vmem>>, vector<1x128x128xf32>
    %66 = vector.shape_cast %65 : vector<1x128x128xf32> to vector<128x128xf32>
    %cst_52 = arith.constant dense<0.000000e+00> : vector<8x128xf32>
    %67 = tpu.matmul %64, %66, %cst_52 {dimension_numbers = #tpu.dot_dimension_numbers<[1], [0], [0], [1], [0, 0, 1, 1], [], []>} : vector<8x128xf32>, vector<128x128xf32>, vector<8x128xf32> -> vector<8x128xf32>
    %68 = vector.broadcast %63 : vector<1x128xf32> to vector<8x128xf32>
    %69 = arith.addf %68, %67 : vector<8x128xf32>
    %70 = vector.extract_strided_slice %62 {offsets = [8, 0], sizes = [8, 128], strides = [1, 1]} : vector<72x128xf32> to vector<8x128xf32>
    %c1_53 = arith.constant 1 : index
    %c0_54 = arith.constant 0 : index
    %c0_55 = arith.constant 0 : index
    %71 = vector.load %arg7[%c1_53, %c0_54, %c0_55] : memref<9x128x128xf32, #tpu.memory_space<vmem>>, vector<1x128x128xf32>
    %72 = vector.shape_cast %71 : vector<1x128x128xf32> to vector<128x128xf32>
    %cst_56 = arith.constant dense<0.000000e+00> : vector<8x128xf32>
    %73 = tpu.matmul %70, %72, %cst_56 {dimension_numbers = #tpu.dot_dimension_numbers<[1], [0], [0], [1], [0, 0, 1, 1], [], []>} : vector<8x128xf32>, vector<128x128xf32>, vector<8x128xf32> -> vector<8x128xf32>
    %74 = arith.addf %69, %73 : vector<8x128xf32>
    %75 = vector.extract_strided_slice %62 {offsets = [16, 0], sizes = [8, 128], strides = [1, 1]} : vector<72x128xf32> to vector<8x128xf32>
    %c2_57 = arith.constant 2 : index
    %c0_58 = arith.constant 0 : index
    %c0_59 = arith.constant 0 : index
    %76 = vector.load %arg7[%c2_57, %c0_58, %c0_59] : memref<9x128x128xf32, #tpu.memory_space<vmem>>, vector<1x128x128xf32>
    %77 = vector.shape_cast %76 : vector<1x128x128xf32> to vector<128x128xf32>
    %cst_60 = arith.constant dense<0.000000e+00> : vector<8x128xf32>
    %78 = tpu.matmul %75, %77, %cst_60 {dimension_numbers = #tpu.dot_dimension_numbers<[1], [0], [0], [1], [0, 0, 1, 1], [], []>} : vector<8x128xf32>, vector<128x128xf32>, vector<8x128xf32> -> vector<8x128xf32>
    %79 = arith.addf %74, %78 : vector<8x128xf32>
    %80 = vector.extract_strided_slice %62 {offsets = [24, 0], sizes = [8, 128], strides = [1, 1]} : vector<72x128xf32> to vector<8x128xf32>
    %c3_61 = arith.constant 3 : index
    %c0_62 = arith.constant 0 : index
    %c0_63 = arith.constant 0 : index
    %81 = vector.load %arg7[%c3_61, %c0_62, %c0_63] : memref<9x128x128xf32, #tpu.memory_space<vmem>>, vector<1x128x128xf32>
    %82 = vector.shape_cast %81 : vector<1x128x128xf32> to vector<128x128xf32>
    %cst_64 = arith.constant dense<0.000000e+00> : vector<8x128xf32>
    %83 = tpu.matmul %80, %82, %cst_64 {dimension_numbers = #tpu.dot_dimension_numbers<[1], [0], [0], [1], [0, 0, 1, 1], [], []>} : vector<8x128xf32>, vector<128x128xf32>, vector<8x128xf32> -> vector<8x128xf32>
    %84 = arith.addf %79, %83 : vector<8x128xf32>
    %85 = vector.extract_strided_slice %62 {offsets = [32, 0], sizes = [8, 128], strides = [1, 1]} : vector<72x128xf32> to vector<8x128xf32>
    %c4_65 = arith.constant 4 : index
    %c0_66 = arith.constant 0 : index
    %c0_67 = arith.constant 0 : index
    %86 = vector.load %arg7[%c4_65, %c0_66, %c0_67] : memref<9x128x128xf32, #tpu.memory_space<vmem>>, vector<1x128x128xf32>
    %87 = vector.shape_cast %86 : vector<1x128x128xf32> to vector<128x128xf32>
    %cst_68 = arith.constant dense<0.000000e+00> : vector<8x128xf32>
    %88 = tpu.matmul %85, %87, %cst_68 {dimension_numbers = #tpu.dot_dimension_numbers<[1], [0], [0], [1], [0, 0, 1, 1], [], []>} : vector<8x128xf32>, vector<128x128xf32>, vector<8x128xf32> -> vector<8x128xf32>
    %89 = arith.addf %84, %88 : vector<8x128xf32>
    %90 = vector.extract_strided_slice %62 {offsets = [40, 0], sizes = [8, 128], strides = [1, 1]} : vector<72x128xf32> to vector<8x128xf32>
    %c5_69 = arith.constant 5 : index
    %c0_70 = arith.constant 0 : index
    %c0_71 = arith.constant 0 : index
    %91 = vector.load %arg7[%c5_69, %c0_70, %c0_71] : memref<9x128x128xf32, #tpu.memory_space<vmem>>, vector<1x128x128xf32>
    %92 = vector.shape_cast %91 : vector<1x128x128xf32> to vector<128x128xf32>
    %cst_72 = arith.constant dense<0.000000e+00> : vector<8x128xf32>
    %93 = tpu.matmul %90, %92, %cst_72 {dimension_numbers = #tpu.dot_dimension_numbers<[1], [0], [0], [1], [0, 0, 1, 1], [], []>} : vector<8x128xf32>, vector<128x128xf32>, vector<8x128xf32> -> vector<8x128xf32>
    %94 = arith.addf %89, %93 : vector<8x128xf32>
    %95 = vector.extract_strided_slice %62 {offsets = [48, 0], sizes = [8, 128], strides = [1, 1]} : vector<72x128xf32> to vector<8x128xf32>
    %c6_73 = arith.constant 6 : index
    %c0_74 = arith.constant 0 : index
    %c0_75 = arith.constant 0 : index
    %96 = vector.load %arg7[%c6_73, %c0_74, %c0_75] : memref<9x128x128xf32, #tpu.memory_space<vmem>>, vector<1x128x128xf32>
    %97 = vector.shape_cast %96 : vector<1x128x128xf32> to vector<128x128xf32>
    %cst_76 = arith.constant dense<0.000000e+00> : vector<8x128xf32>
    %98 = tpu.matmul %95, %97, %cst_76 {dimension_numbers = #tpu.dot_dimension_numbers<[1], [0], [0], [1], [0, 0, 1, 1], [], []>} : vector<8x128xf32>, vector<128x128xf32>, vector<8x128xf32> -> vector<8x128xf32>
    %99 = arith.addf %94, %98 : vector<8x128xf32>
    %100 = vector.extract_strided_slice %62 {offsets = [56, 0], sizes = [8, 128], strides = [1, 1]} : vector<72x128xf32> to vector<8x128xf32>
    %c7_77 = arith.constant 7 : index
    %c0_78 = arith.constant 0 : index
    %c0_79 = arith.constant 0 : index
    %101 = vector.load %arg7[%c7_77, %c0_78, %c0_79] : memref<9x128x128xf32, #tpu.memory_space<vmem>>, vector<1x128x128xf32>
    %102 = vector.shape_cast %101 : vector<1x128x128xf32> to vector<128x128xf32>
    %cst_80 = arith.constant dense<0.000000e+00> : vector<8x128xf32>
    %103 = tpu.matmul %100, %102, %cst_80 {dimension_numbers = #tpu.dot_dimension_numbers<[1], [0], [0], [1], [0, 0, 1, 1], [], []>} : vector<8x128xf32>, vector<128x128xf32>, vector<8x128xf32> -> vector<8x128xf32>
    %104 = arith.addf %99, %103 : vector<8x128xf32>
    %105 = vector.extract_strided_slice %62 {offsets = [64, 0], sizes = [8, 128], strides = [1, 1]} : vector<72x128xf32> to vector<8x128xf32>
    %c8_81 = arith.constant 8 : index
    %c0_82 = arith.constant 0 : index
    %c0_83 = arith.constant 0 : index
    %106 = vector.load %arg7[%c8_81, %c0_82, %c0_83] : memref<9x128x128xf32, #tpu.memory_space<vmem>>, vector<1x128x128xf32>
    %107 = vector.shape_cast %106 : vector<1x128x128xf32> to vector<128x128xf32>
    %cst_84 = arith.constant dense<0.000000e+00> : vector<8x128xf32>
    %108 = tpu.matmul %105, %107, %cst_84 {dimension_numbers = #tpu.dot_dimension_numbers<[1], [0], [0], [1], [0, 0, 1, 1], [], []>} : vector<8x128xf32>, vector<128x128xf32>, vector<8x128xf32> -> vector<8x128xf32>
    %109 = arith.addf %104, %108 : vector<8x128xf32>
    %cst_85 = arith.constant 0.000000e+00 : f32
    %110 = vector.broadcast %cst_85 : f32 to vector<8x128xf32>
    %111 = arith.maximumf %109, %110 : vector<8x128xf32>
    %c0_86 = arith.constant 0 : index
    %c0_87 = arith.constant 0 : index
    %112 = vector.load %arg9[%c0_86, %c0_87] : memref<32x8xf32, #tpu.memory_space<vmem>>, vector<32x8xf32>
    %cst_88 = arith.constant dense<0.000000e+00> : vector<32x128xf32>
    %113 = tpu.matmul %112, %111, %cst_88 {dimension_numbers = #tpu.dot_dimension_numbers<[1], [0], [0], [1], [0, 0, 1, 1], [], []>} : vector<32x8xf32>, vector<8x128xf32>, vector<32x128xf32> -> vector<32x128xf32>
    %c0_89 = arith.constant 0 : index
    %c0_90 = arith.constant 0 : index
    %114 = vector.load %arg11[%c0_89, %c0_90] : memref<1x128xf32, #tpu.memory_space<vmem>>, vector<1x128xf32>
    %115 = vector.extract_strided_slice %113 {offsets = [0, 0], sizes = [8, 128], strides = [1, 1]} : vector<32x128xf32> to vector<8x128xf32>
    %c0_91 = arith.constant 0 : index
    %c0_92 = arith.constant 0 : index
    %c0_93 = arith.constant 0 : index
    %116 = vector.load %arg10[%c0_91, %c0_92, %c0_93] : memref<4x128x128xf32, #tpu.memory_space<vmem>>, vector<1x128x128xf32>
    %117 = vector.shape_cast %116 : vector<1x128x128xf32> to vector<128x128xf32>
    %cst_94 = arith.constant dense<0.000000e+00> : vector<8x128xf32>
    %118 = tpu.matmul %115, %117, %cst_94 {dimension_numbers = #tpu.dot_dimension_numbers<[1], [0], [0], [1], [0, 0, 1, 1], [], []>} : vector<8x128xf32>, vector<128x128xf32>, vector<8x128xf32> -> vector<8x128xf32>
    %119 = vector.broadcast %114 : vector<1x128xf32> to vector<8x128xf32>
    %120 = arith.addf %119, %118 : vector<8x128xf32>
    %121 = vector.extract_strided_slice %113 {offsets = [8, 0], sizes = [8, 128], strides = [1, 1]} : vector<32x128xf32> to vector<8x128xf32>
    %c1_95 = arith.constant 1 : index
    %c0_96 = arith.constant 0 : index
    %c0_97 = arith.constant 0 : index
    %122 = vector.load %arg10[%c1_95, %c0_96, %c0_97] : memref<4x128x128xf32, #tpu.memory_space<vmem>>, vector<1x128x128xf32>
    %123 = vector.shape_cast %122 : vector<1x128x128xf32> to vector<128x128xf32>
    %cst_98 = arith.constant dense<0.000000e+00> : vector<8x128xf32>
    %124 = tpu.matmul %121, %123, %cst_98 {dimension_numbers = #tpu.dot_dimension_numbers<[1], [0], [0], [1], [0, 0, 1, 1], [], []>} : vector<8x128xf32>, vector<128x128xf32>, vector<8x128xf32> -> vector<8x128xf32>
    %125 = arith.addf %120, %124 : vector<8x128xf32>
    %126 = vector.extract_strided_slice %113 {offsets = [16, 0], sizes = [8, 128], strides = [1, 1]} : vector<32x128xf32> to vector<8x128xf32>
    %c2_99 = arith.constant 2 : index
    %c0_100 = arith.constant 0 : index
    %c0_101 = arith.constant 0 : index
    %127 = vector.load %arg10[%c2_99, %c0_100, %c0_101] : memref<4x128x128xf32, #tpu.memory_space<vmem>>, vector<1x128x128xf32>
    %128 = vector.shape_cast %127 : vector<1x128x128xf32> to vector<128x128xf32>
    %cst_102 = arith.constant dense<0.000000e+00> : vector<8x128xf32>
    %129 = tpu.matmul %126, %128, %cst_102 {dimension_numbers = #tpu.dot_dimension_numbers<[1], [0], [0], [1], [0, 0, 1, 1], [], []>} : vector<8x128xf32>, vector<128x128xf32>, vector<8x128xf32> -> vector<8x128xf32>
    %130 = arith.addf %125, %129 : vector<8x128xf32>
    %131 = vector.extract_strided_slice %113 {offsets = [24, 0], sizes = [8, 128], strides = [1, 1]} : vector<32x128xf32> to vector<8x128xf32>
    %c3_103 = arith.constant 3 : index
    %c0_104 = arith.constant 0 : index
    %c0_105 = arith.constant 0 : index
    %132 = vector.load %arg10[%c3_103, %c0_104, %c0_105] : memref<4x128x128xf32, #tpu.memory_space<vmem>>, vector<1x128x128xf32>
    %133 = vector.shape_cast %132 : vector<1x128x128xf32> to vector<128x128xf32>
    %cst_106 = arith.constant dense<0.000000e+00> : vector<8x128xf32>
    %134 = tpu.matmul %131, %133, %cst_106 {dimension_numbers = #tpu.dot_dimension_numbers<[1], [0], [0], [1], [0, 0, 1, 1], [], []>} : vector<8x128xf32>, vector<128x128xf32>, vector<8x128xf32> -> vector<8x128xf32>
    %135 = arith.addf %130, %134 : vector<8x128xf32>
    %136 = vector.extract_strided_slice %135 {offsets = [0, 0], sizes = [2, 128], strides = [1, 1]} : vector<8x128xf32> to vector<2x128xf32>
    %cst_107 = arith.constant 0.000000e+00 : f32
    %137 = vector.broadcast %cst_107 : f32 to vector<2x128xf32>
    %138 = arith.maximumf %136, %137 : vector<2x128xf32>
    %c0_108 = arith.constant 0 : index
    %c0_109 = arith.constant 0 : index
    %139 = vector.load %arg12[%c0_108, %c0_109] : memref<128x128xf32, #tpu.memory_space<vmem>>, vector<128x128xf32>
    %cst_110 = arith.constant dense<0.000000e+00> : vector<2x128xf32>
    %140 = tpu.matmul %138, %139, %cst_110 {dimension_numbers = #tpu.dot_dimension_numbers<[1], [0], [0], [1], [0, 0, 1, 1], [], []>} : vector<2x128xf32>, vector<128x128xf32>, vector<2x128xf32> -> vector<2x128xf32>
    %c0_111 = arith.constant 0 : index
    %c0_112 = arith.constant 0 : index
    %141 = vector.load %arg13[%c0_111, %c0_112] : memref<1x128xf32, #tpu.memory_space<vmem>>, vector<1x128xf32>
    %142 = vector.broadcast %141 : vector<1x128xf32> to vector<2x128xf32>
    %143 = arith.addf %140, %142 : vector<2x128xf32>
    %cst_113 = arith.constant 0.000000e+00 : f32
    %144 = vector.broadcast %cst_113 : f32 to vector<2x128xf32>
    %145 = arith.maximumf %143, %144 : vector<2x128xf32>
    %c0_114 = arith.constant 0 : index
    %c0_115 = arith.constant 0 : index
    %146 = vector.load %arg14[%c0_114, %c0_115] : memref<128x128xf32, #tpu.memory_space<vmem>>, vector<128x128xf32>
    %cst_116 = arith.constant dense<0.000000e+00> : vector<2x128xf32>
    %147 = tpu.matmul %145, %146, %cst_116 {dimension_numbers = #tpu.dot_dimension_numbers<[1], [0], [0], [1], [0, 0, 1, 1], [], []>} : vector<2x128xf32>, vector<128x128xf32>, vector<2x128xf32> -> vector<2x128xf32>
    %c0_117 = arith.constant 0 : index
    %c0_118 = arith.constant 0 : index
    %148 = vector.load %arg15[%c0_117, %c0_118] : memref<1x128xf32, #tpu.memory_space<vmem>>, vector<1x128xf32>
    %149 = vector.broadcast %148 : vector<1x128xf32> to vector<2x128xf32>
    %150 = arith.addf %147, %149 : vector<2x128xf32>
    %cst_119 = arith.constant 0.000000e+00 : f32
    %151 = vector.broadcast %cst_119 : f32 to vector<2x128xf32>
    %152 = arith.maximumf %150, %151 : vector<2x128xf32>
    %c0_120 = arith.constant 0 : index
    %c0_121 = arith.constant 0 : index
    %153 = vector.load %arg18[%c0_120, %c0_121] : memref<2x128xf32, #tpu.memory_space<vmem>>, vector<2x128xf32>
    tpu.vector_store %arg18[%c0_120, %c0_121], %152 {strides = array<i32>} : memref<2x128xf32, #tpu.memory_space<vmem>>, vector<2x128xf32>,
    return
  }
}

</mosaic_0001>

<llo_original>
// kernel: forward.1
$region0: #{forward.1}
  #allocation0 [shape = 'u32[]', space=smem, size = 0x4, offset = 0x4, fixed_abs, tag = 'smem constant byte address 0x4 - core index']
  #allocation1 [shape = 'u32[144,128]{1,0:T(1,128)}', space=vmem, size = 0x12000, scoped, tag = 'internal scratch']
  %s0 = inlined_call_operand.vmem [shape: f32[168,128], index: 0, kind: input, shape index: {}]
  %s1 = inlined_call_operand.vmem [shape: f32[128,128], index: 1, kind: input, shape index: {}]
  %s2 = inlined_call_operand.vmem [shape: f32[1,128], index: 2, kind: input, shape index: {}]
  %s3 = inlined_call_operand.vmem [shape: f32[288,168], index: 3, kind: input, shape index: {}]
  %s4 = inlined_call_operand.vmem [shape: f32[9,128,128], index: 4, kind: input, shape index: {}]
  %s5 = inlined_call_operand.vmem [shape: f32[1,128], index: 5, kind: input, shape index: {}]
  %s6 = inlined_call_operand.vmem [shape: f32[72,32], index: 6, kind: input, shape index: {}]
  %s7 = inlined_call_operand.vmem [shape: f32[9,128,128], index: 7, kind: input, shape index: {}]
  %s8 = inlined_call_operand.vmem [shape: f32[1,128], index: 8, kind: input, shape index: {}]
  %s9 = inlined_call_operand.vmem [shape: f32[32,8], index: 9, kind: input, shape index: {}]
  %s10 = inlined_call_operand.vmem [shape: f32[4,128,128], index: 10, kind: input, shape index: {}]
  %s11 = inlined_call_operand.vmem [shape: f32[1,128], index: 11, kind: input, shape index: {}]
  %s12 = inlined_call_operand.vmem [shape: f32[128,128], index: 12, kind: input, shape index: {}]
  %s13 = inlined_call_operand.vmem [shape: f32[1,128], index: 13, kind: input, shape index: {}]
  %s14 = inlined_call_operand.vmem [shape: f32[128,128], index: 14, kind: input, shape index: {}]
  %s15 = inlined_call_operand.vmem [shape: f32[1,128], index: 15, kind: input, shape index: {}]
  %s16 = inlined_call_operand.vmem [shape: f32[168,128], index: 16, kind: output, shape index: {0}]
  %s17 = inlined_call_operand.hbm [shape: f32[32,128], index: 17, kind: output, shape index: {1}]
  %s18 = inlined_call_operand.hbm [shape: f32[2,128], index: 18, kind: output, shape index: {2}]
  %19 = xla_tuple %s16, %s17, %s18
  %s20 = sld [smem:[#allocation0]]
  $region90: #{forward.1} parent=0
    _
  %s22 = ssub.s32 1, %s20
  %s23 = scalar_select 0, %s22, %s20
  $region1: #{forward.1} parent=0
    #allocation2 [shape = 'u8[16384]{0}', space=vmem, size = 0x4000, scoped, tag = 'output window, operand 1, single buffered']
    #allocation3 [shape = 's32[1]{0}', space=sflag, size = 0x4, scoped, tag = 'scoped memory for forward.1']
    #allocation4 [shape = 'u8[1024]{0}', space=vmem, size = 0x400, scoped, tag = 'output window, operand 2, single buffered']
    #allocation5 [shape = 's32[1]{0}', space=sflag, size = 0x4, scoped, tag = 'scoped memory for forward.1']
    %24 = vsyncpa [#allocation3], 0
    %25 = vsyncpa [#allocation5], 0
    // Predicated region
    $region2: #{forward.1} parent=1 // pred_check
      _
    $region3: #{forward.1} parent=1 // pred_check_branch
      %27 = sbr.rel (0) target = $region5
    $region4: #{forward.1} parent=1 // pred_region
      _
    $region5: #{forward.1} parent=1 // pred_fallthru
      _
    // Predicated region
    $region6: #{forward.1} parent=1 // pred_check
      _
    $region7: #{forward.1} parent=1 // pred_check_branch
      %29 = sbr.rel (0) target = $region9
    $region8: #{forward.1} parent=1 // pred_region
      _
    $region9: #{forward.1} parent=1 // pred_fallthru
      _
    // Predicated region
    $region10: #{forward.1} parent=1 // pred_check
      _
    $region11: #{forward.1} parent=1 // pred_check_branch
      %31 = sbr.rel (0) target = $region13
    $region12: #{forward.1} parent=1 // pred_region
      _
    $region13: #{forward.1} parent=1 // pred_fallthru
      _
    // Predicated region
    $region14: #{forward.1} parent=1 // pred_check
      _
    $region15: #{forward.1} parent=1 // pred_check_branch
      %33 = sbr.rel (0) target = $region17
    $region16: #{forward.1} parent=1 // pred_region
      _
    $region17: #{forward.1} parent=1 // pred_fallthru
      _
    // Predicated region
    $region18: #{forward.1} parent=1 // pred_check
      _
    $region19: #{forward.1} parent=1 // pred_check_branch
      %35 = sbr.rel (0) target = $region21
    $region20: #{forward.1} parent=1 // pred_region
      _
    $region21: #{forward.1} parent=1 // pred_fallthru
      _
    // Predicated region
    $region22: #{forward.1} parent=1 // pred_check
      _
    $region23: #{forward.1} parent=1 // pred_check_branch
      %37 = sbr.rel (0) target = $region25
    $region24: #{forward.1} parent=1 // pred_region
      _
    $region25: #{forward.1} parent=1 // pred_fallthru
      _
    // Predicated region
    $region26: #{forward.1} parent=1 // pred_check
      _
    $region27: #{forward.1} parent=1 // pred_check_branch
      %39 = sbr.rel (0) target = $region29
    $region28: #{forward.1} parent=1 // pred_region
      _
    $region29: #{forward.1} parent=1 // pred_fallthru
      _
    // Predicated region
    $region30: #{forward.1} parent=1 // pred_check
      _
    $region31: #{forward.1} parent=1 // pred_check_branch
      %41 = sbr.rel (0) target = $region33
    $region32: #{forward.1} parent=1 // pred_region
      _
    $region33: #{forward.1} parent=1 // pred_fallthru
      _
    // Predicated region
    $region34: #{forward.1} parent=1 // pred_check
      _
    $region35: #{forward.1} parent=1 // pred_check_branch
      %43 = sbr.rel (0) target = $region37
    $region36: #{forward.1} parent=1 // pred_region
      _
    $region37: #{forward.1} parent=1 // pred_fallthru
      _
    // Predicated region
    $region38: #{forward.1} parent=1 // pred_check
      _
    $region39: #{forward.1} parent=1 // pred_check_branch
      %45 = sbr.rel (0) target = $region41
    $region40: #{forward.1} parent=1 // pred_region
      _
    $region41: #{forward.1} parent=1 // pred_fallthru
      _
    // Predicated region
    $region42: #{forward.1} parent=1 // pred_check
      _
    $region43: #{forward.1} parent=1 // pred_check_branch
      %47 = sbr.rel (0) target = $region45
    $region44: #{forward.1} parent=1 // pred_region
      _
    $region45: #{forward.1} parent=1 // pred_fallthru
      _
    // Predicated region
    $region46: #{forward.1} parent=1 // pred_check
      _
    $region47: #{forward.1} parent=1 // pred_check_branch
      %49 = sbr.rel (0) target = $region49
    $region48: #{forward.1} parent=1 // pred_region
      _
    $region49: #{forward.1} parent=1 // pred_fallthru
      _
    // Predicated region
    $region50: #{forward.1} parent=1 // pred_check
      _
    $region51: #{forward.1} parent=1 // pred_check_branch
      %51 = sbr.rel (0) target = $region53
    $region52: #{forward.1} parent=1 // pred_region
      _
    $region53: #{forward.1} parent=1 // pred_fallthru
      _
    // Predicated region
    $region54: #{forward.1} parent=1 // pred_check
      _
    $region55: #{forward.1} parent=1 // pred_check_branch
      %53 = sbr.rel (0) target = $region57
    $region56: #{forward.1} parent=1 // pred_region
      _
    $region57: #{forward.1} parent=1 // pred_fallthru
      _
    // Predicated region
    $region58: #{forward.1} parent=1 // pred_check
      _
    $region59: #{forward.1} parent=1 // pred_check_branch
      %55 = sbr.rel (0) target = $region61
    $region60: #{forward.1} parent=1 // pred_region
      _
    $region61: #{forward.1} parent=1 // pred_fallthru
      _
    // Predicated region
    $region62: #{forward.1} parent=1 // pred_check
      _
    $region63: #{forward.1} parent=1 // pred_check_branch
      %57 = sbr.rel (0) target = $region65
    $region64: #{forward.1} parent=1 // pred_region
      _
    $region65: #{forward.1} parent=1 // pred_fallthru
      _
    %v58 = vld [vmem:[%s0] sm:$0xff]
    %v59 = vld [vmem:[%s0 + $0x8] sm:$0xff]
    %v60 = vld [vmem:[%s0 + $0x10] sm:$0xff]
    %v61 = vld [vmem:[%s0 + $0x18] sm:$0xff]
    %v62 = vld [vmem:[%s0 + $0x20] sm:$0xff]
    %v63 = vld [vmem:[%s0 + $0x28] sm:$0xff]
    %v64 = vld [vmem:[%s0 + $0x30] sm:$0xff]
    %v65 = vld [vmem:[%s0 + $0x38] sm:$0xff]
    %v66 = vld [vmem:[%s0 + $0x40] sm:$0xff]
    %v67 = vld [vmem:[%s0 + $0x48] sm:$0xff]
    %v68 = vld [vmem:[%s0 + $0x50] sm:$0xff]
    %v69 = vld [vmem:[%s0 + $0x58] sm:$0xff]
    %v70 = vld [vmem:[%s0 + $0x60] sm:$0xff]
    %v71 = vld [vmem:[%s0 + $0x68] sm:$0xff]
    %v72 = vld [vmem:[%s0 + $0x70] sm:$0xff]
    %v73 = vld [vmem:[%s0 + $0x78] sm:$0xff]
    %v74 = vld [vmem:[%s0 + $0x80] sm:$0xff]
    %v75 = vld [vmem:[%s0 + $0x88] sm:$0xff]
    %v76 = vld [vmem:[%s0 + $0x90] sm:$0xff]
    %v77 = vld [vmem:[%s0 + $0x98] sm:$0xff]
    %v78 = vld [vmem:[%s0 + $0xa0] sm:$0xff]
    %v79 = vld [vmem:[%s1] sm:$0xff]
    %v80 = vld [vmem:[%s1 + $0x8] sm:$0xff]
    %v81 = vld [vmem:[%s1 + $0x10] sm:$0xff]
    %v82 = vld [vmem:[%s1 + $0x18] sm:$0xff]
    %v83 = vld [vmem:[%s1 + $0x20] sm:$0xff]
    %v84 = vld [vmem:[%s1 + $0x28] sm:$0xff]
    %v85 = vld [vmem:[%s1 + $0x30] sm:$0xff]
    %v86 = vld [vmem:[%s1 + $0x38] sm:$0xff]
    %v87 = vld [vmem:[%s1 + $0x40] sm:$0xff]
    %v88 = vld [vmem:[%s1 + $0x48] sm:$0xff]
    %v89 = vld [vmem:[%s1 + $0x50] sm:$0xff]
    %v90 = vld [vmem:[%s1 + $0x58] sm:$0xff]
    %v91 = vld [vmem:[%s1 + $0x60] sm:$0xff]
    %v92 = vld [vmem:[%s1 + $0x68] sm:$0xff]
    %v93 = vld [vmem:[%s1 + $0x70] sm:$0xff]
    %v94 = vld [vmem:[%s1 + $0x78] sm:$0xff]
    %v95 = vld [vmem:[%s2] sm:$0x1]
    %v97 = vlaneseq
    %v98 = vshrl.u32 %v97, 7
    %v99 = vsub.s32 0, %v98
    %v100 = vrot.slane %v95, %v99
    %102 = vmatprep.subr.mxu0 0.0
    %103 = vmatpush1.msra.mxu0 %v94
    %104 = vmatprep.subr.mxu0 0.0
    %105 = vmatpush1.msra.mxu0 %v93
    %106 = vmatprep.subr.mxu0 0.0
    %107 = vmatpush1.msra.mxu0 %v92
    %108 = vmatprep.subr.mxu0 0.0
    %109 = vmatpush1.msra.mxu0 %v91
    %110 = vmatprep.subr.mxu0 0.0
    %111 = vmatpush1.msra.mxu0 %v90
    %112 = vmatprep.subr.mxu0 0.0
    %113 = vmatpush1.msra.mxu0 %v89
    %114 = vmatprep.subr.mxu0 0.0
    %115 = vmatpush1.msra.mxu0 %v88
    %116 = vmatprep.subr.mxu0 0.0
    %117 = vmatpush1.msra.mxu0 %v87
    %118 = vmatprep.subr.mxu0 0.0
    %119 = vmatpush1.msra.mxu0 %v86
    %120 = vmatprep.subr.mxu0 0.0
    %121 = vmatpush1.msra.mxu0 %v85
    %122 = vmatprep.subr.mxu0 0.0
    %123 = vmatpush1.msra.mxu0 %v84
    %124 = vmatprep.subr.mxu0 0.0
    %125 = vmatpush1.msra.mxu0 %v83
    %126 = vmatprep.subr.mxu0 0.0
    %127 = vmatpush1.msra.mxu0 %v82
    %128 = vmatprep.subr.mxu0 0.0
    %129 = vmatpush1.msra.mxu0 %v81
    %130 = vmatprep.subr.mxu0 0.0
    %131 = vmatpush1.msra.mxu0 %v80
    %132 = vmatprep.subr.mxu0 0.0
    %133 = vmatpush1.msra.mxu0 %v79
    %134 = vmatprep.subr.mxu0 0.0
    %135 = vmatpush2.msra.mxu0 0.0
    %136 = vmatprep.subr.mxu0 0.0
    %137 = vmatpush2.msra.mxu0 0.0
    %138 = vmatprep.subr.mxu0 0.0
    %139 = vmatpush2.msra.mxu0 0.0
    %140 = vmatprep.subr.mxu0 0.0
    %141 = vmatpush2.msra.mxu0 0.0
    %142 = vmatprep.subr.mxu0 0.0
    %143 = vmatpush2.msra.mxu0 0.0
    %144 = vmatprep.subr.mxu0 0.0
    %145 = vmatpush2.msra.mxu0 0.0
    %146 = vmatprep.subr.mxu0 0.0
    %147 = vmatpush2.msra.mxu0 0.0
    %148 = vmatprep.subr.mxu0 0.0
    %149 = vmatpush2.msra.mxu0 0.0
    %150 = vmatprep.subr.mxu0 0.0
    %151 = vmatpush2.msra.mxu0 0.0
    %152 = vmatprep.subr.mxu0 0.0
    %153 = vmatpush2.msra.mxu0 0.0
    %154 = vmatprep.subr.mxu0 0.0
    %155 = vmatpush2.msra.mxu0 0.0
    %156 = vmatprep.subr.mxu0 0.0
    %157 = vmatpush2.msra.mxu0 0.0
    %158 = vmatprep.subr.mxu0 0.0
    %159 = vmatpush2.msra.mxu0 0.0
    %160 = vmatprep.subr.mxu0 0.0
    %161 = vmatpush2.msra.mxu0 0.0
    %162 = vmatprep.subr.mxu0 0.0
    %163 = vmatpush2.msra.mxu0 0.0
    %164 = vmatprep.subr.mxu0 0.0
    %165 = vmatpush2.msra.mxu0 0.0
    %166 = vmatprep.mubr.f32.mxu0 0.0
    %167 = vmatmul.mubr.f32.gmra.mxu0 %v58
    %v168 = vpop.f32.mrf.mxu0
    %v169 = vadd.f32 %v100, %v168
    %v170 = vpop.f32.mrf.mxu0
    %171 = vmatprep.mubr.f32.mxu0 0.0
    %172 = vmatmul.mubr.f32.gmra.mxu0 %v59
    %v173 = vpop.f32.mrf.mxu0
    %v174 = vadd.f32 %v100, %v173
    %v175 = vpop.f32.mrf.mxu0
    %176 = vmatprep.mubr.f32.mxu0 0.0
    %177 = vmatmul.mubr.f32.gmra.mxu0 %v60
    %v178 = vpop.f32.mrf.mxu0
    %v179 = vadd.f32 %v100, %v178
    %v180 = vpop.f32.mrf.mxu0
    %181 = vmatprep.mubr.f32.mxu0 0.0
    %182 = vmatmul.mubr.f32.gmra.mxu0 %v61
    %v183 = vpop.f32.mrf.mxu0
    %v184 = vadd.f32 %v100, %v183
    %v185 = vpop.f32.mrf.mxu0
    %186 = vmatprep.mubr.f32.mxu0 0.0
    %187 = vmatmul.mubr.f32.gmra.mxu0 %v62
    %v188 = vpop.f32.mrf.mxu0
    %v189 = vadd.f32 %v100, %v188
    %v190 = vpop.f32.mrf.mxu0
    %191 = vmatprep.mubr.f32.mxu0 0.0
    %192 = vmatmul.mubr.f32.gmra.mxu0 %v63
    %v193 = vpop.f32.mrf.mxu0
    %v194 = vadd.f32 %v100, %v193
    %v195 = vpop.f32.mrf.mxu0
    %196 = vmatprep.mubr.f32.mxu0 0.0
    %197 = vmatmul.mubr.f32.gmra.mxu0 %v64
    %v198 = vpop.f32.mrf.mxu0
    %v199 = vadd.f32 %v100, %v198
    %v200 = vpop.f32.mrf.mxu0
    %201 = vmatprep.mubr.f32.mxu0 0.0
    %202 = vmatmul.mubr.f32.gmra.mxu0 %v65
    %v203 = vpop.f32.mrf.mxu0
    %v204 = vadd.f32 %v100, %v203
    %v205 = vpop.f32.mrf.mxu0
    %206 = vmatprep.mubr.f32.mxu0 0.0
    %207 = vmatmul.mubr.f32.gmra.mxu0 %v66
    %v208 = vpop.f32.mrf.mxu0
    %v209 = vadd.f32 %v100, %v208
    %v210 = vpop.f32.mrf.mxu0
    %211 = vmatprep.mubr.f32.mxu0 0.0
    %212 = vmatmul.mubr.f32.gmra.mxu0 %v67
    %v213 = vpop.f32.mrf.mxu0
    %v214 = vadd.f32 %v100, %v213
    %v215 = vpop.f32.mrf.mxu0
    %216 = vmatprep.mubr.f32.mxu0 0.0
    %217 = vmatmul.mubr.f32.gmra.mxu0 %v68
    %v218 = vpop.f32.mrf.mxu0
    %v219 = vadd.f32 %v100, %v218
    %v220 = vpop.f32.mrf.mxu0
    %221 = vmatprep.mubr.f32.mxu0 0.0
    %222 = vmatmul.mubr.f32.gmra.mxu0 %v69
    %v223 = vpop.f32.mrf.mxu0
    %v224 = vadd.f32 %v100, %v223
    %v225 = vpop.f32.mrf.mxu0
    %226 = vmatprep.mubr.f32.mxu0 0.0
    %227 = vmatmul.mubr.f32.gmra.mxu0 %v70
    %v228 = vpop.f32.mrf.mxu0
    %v229 = vadd.f32 %v100, %v228
    %v230 = vpop.f32.mrf.mxu0
    %231 = vmatprep.mubr.f32.mxu0 0.0
    %232 = vmatmul.mubr.f32.gmra.mxu0 %v71
    %v233 = vpop.f32.mrf.mxu0
    %v234 = vadd.f32 %v100, %v233
    %v235 = vpop.f32.mrf.mxu0
    %236 = vmatprep.mubr.f32.mxu0 0.0
    %237 = vmatmul.mubr.f32.gmra.mxu0 %v72
    %v238 = vpop.f32.mrf.mxu0
    %v239 = vadd.f32 %v100, %v238
    %v240 = vpop.f32.mrf.mxu0
    %241 = vmatprep.mubr.f32.mxu0 0.0
    %242 = vmatmul.mubr.f32.gmra.mxu0 %v73
    %v243 = vpop.f32.mrf.mxu0
    %v244 = vadd.f32 %v100, %v243
    %v245 = vpop.f32.mrf.mxu0
    %246 = vmatprep.mubr.f32.mxu0 0.0
    %247 = vmatmul.mubr.f32.gmra.mxu0 %v74
    %v248 = vpop.f32.mrf.mxu0
    %v249 = vadd.f32 %v100, %v248
    %v250 = vpop.f32.mrf.mxu0
    %251 = vmatprep.mubr.f32.mxu0 0.0
    %252 = vmatmul.mubr.f32.gmra.mxu0 %v75
    %v253 = vpop.f32.mrf.mxu0
    %v254 = vadd.f32 %v100, %v253
    %v255 = vpop.f32.mrf.mxu0
    %256 = vmatprep.mubr.f32.mxu0 0.0
    %257 = vmatmul.mubr.f32.gmra.mxu0 %v76
    %v258 = vpop.f32.mrf.mxu0
    %v259 = vadd.f32 %v100, %v258
    %v260 = vpop.f32.mrf.mxu0
    %261 = vmatprep.mubr.f32.mxu0 0.0
    %262 = vmatmul.mubr.f32.gmra.mxu0 %v77
    %v263 = vpop.f32.mrf.mxu0
    %v264 = vadd.f32 %v100, %v263
    %v265 = vpop.f32.mrf.mxu0
    %266 = vmatprep.mubr.f32.mxu0 0.0
    %267 = vmatmul.mubr.f32.gmra.mxu0 %v78
    %v268 = vpop.f32.mrf.mxu0
    %v269 = vadd.f32 %v100, %v268
    %v270 = vpop.f32.mrf.mxu0
    %271 = vdwg.mxu0
    %272 = vst [vmem:[%s16] sm:$0xff] %v169
    %273 = vst [vmem:[%s16 + $0x8] sm:$0xff] %v174
    %274 = vst [vmem:[%s16 + $0x10] sm:$0xff] %v179
    %275 = vst [vmem:[%s16 + $0x18] sm:$0xff] %v184
    %276 = vst [vmem:[%s16 + $0x20] sm:$0xff] %v189
    %277 = vst [vmem:[%s16 + $0x28] sm:$0xff] %v194
    %278 = vst [vmem:[%s16 + $0x30] sm:$0xff] %v199
    %279 = vst [vmem:[%s16 + $0x38] sm:$0xff] %v204
    %280 = vst [vmem:[%s16 + $0x40] sm:$0xff] %v209
    %281 = vst [vmem:[%s16 + $0x48] sm:$0xff] %v214
    %282 = vst [vmem:[%s16 + $0x50] sm:$0xff] %v219
    %283 = vst [vmem:[%s16 + $0x58] sm:$0xff] %v224
    %284 = vst [vmem:[%s16 + $0x60] sm:$0xff] %v229
    %285 = vst [vmem:[%s16 + $0x68] sm:$0xff] %v234
    %286 = vst [vmem:[%s16 + $0x70] sm:$0xff] %v239
    %287 = vst [vmem:[%s16 + $0x78] sm:$0xff] %v244
    %288 = vst [vmem:[%s16 + $0x80] sm:$0xff] %v249
    %289 = vst [vmem:[%s16 + $0x88] sm:$0xff] %v254
    %290 = vst [vmem:[%s16 + $0x90] sm:$0xff] %v259
    %291 = vst [vmem:[%s16 + $0x98] sm:$0xff] %v264
    %292 = vst [vmem:[%s16 + $0xa0] sm:$0xff] %v269
    %v293 = vmax.f32 %v169, 0.0
    %v294 = vmax.f32 %v174, 0.0
    %v295 = vmax.f32 %v179, 0.0
    %v296 = vmax.f32 %v184, 0.0
    %v297 = vmax.f32 %v189, 0.0
    %v298 = vmax.f32 %v194, 0.0
    %v299 = vmax.f32 %v199, 0.0
    %v300 = vmax.f32 %v204, 0.0
    %v301 = vmax.f32 %v209, 0.0
    %v302 = vmax.f32 %v214, 0.0
    %v303 = vmax.f32 %v219, 0.0
    %v304 = vmax.f32 %v224, 0.0
    %v305 = vmax.f32 %v229, 0.0
    %v306 = vmax.f32 %v234, 0.0
    %v307 = vmax.f32 %v239, 0.0
    %v308 = vmax.f32 %v244, 0.0
    %v309 = vmax.f32 %v249, 0.0
    %v310 = vmax.f32 %v254, 0.0
    %v311 = vmax.f32 %v259, 0.0
    %v312 = vmax.f32 %v264, 0.0
    %v313 = vmax.f32 %v269, 0.0
    %v314 = vld [vmem:[%s3] sm:$0xff]
    %v315 = vld [vmem:[%s3 + $0x8] sm:$0xff]
    %v316 = vld [vmem:[%s3 + $0x10] sm:$0xff]
    %v317 = vld [vmem:[%s3 + $0x18] sm:$0xff]
    %v318 = vld [vmem:[%s3 + $0x20] sm:$0xff]
    %v319 = vld [vmem:[%s3 + $0x28] sm:$0xff]
    %v320 = vld [vmem:[%s3 + $0x30] sm:$0xff]
    %v321 = vld [vmem:[%s3 + $0x38] sm:$0xff]
    %v322 = vld [vmem:[%s3 + $0x40] sm:$0xff]
    %v323 = vld [vmem:[%s3 + $0x48] sm:$0xff]
    %v324 = vld [vmem:[%s3 + $0x50] sm:$0xff]
    %v325 = vld [vmem:[%s3 + $0x58] sm:$0xff]
    %v326 = vld [vmem:[%s3 + $0x60] sm:$0xff]
    %v327 = vld [vmem:[%s3 + $0x68] sm:$0xff]
    %v328 = vld [vmem:[%s3 + $0x70] sm:$0xff]
    %v329 = vld [vmem:[%s3 + $0x78] sm:$0xff]
    %v330 = vld [vmem:[%s3 + $0x80] sm:$0xff]
    %v331 = vld [vmem:[%s3 + $0x88] sm:$0xff]
    %v332 = vld [vmem:[%s3 + $0x90] sm:$0xff]
    %v333 = vld [vmem:[%s3 + $0x98] sm:$0xff]
    %v334 = vld [vmem:[%s3 + $0xa0] sm:$0xff]
    %v335 = vld [vmem:[%s3 + $0xa8] sm:$0xff]
    %v336 = vld [vmem:[%s3 + $0xb0] sm:$0xff]
    %v337 = vld [vmem:[%s3 + $0xb8] sm:$0xff]
    %v338 = vld [vmem:[%s3 + $0xc0] sm:$0xff]
    %v339 = vld [vmem:[%s3 + $0xc8] sm:$0xff]
    %v340 = vld [vmem:[%s3 + $0xd0] sm:$0xff]
    %v341 = vld [vmem:[%s3 + $0xd8] sm:$0xff]
    %v342 = vld [vmem:[%s3 + $0xe0] sm:$0xff]
    %v343 = vld [vmem:[%s3 + $0xe8] sm:$0xff]
    %v344 = vld [vmem:[%s3 + $0xf0] sm:$0xff]
    %v345 = vld [vmem:[%s3 + $0xf8] sm:$0xff]
    %v346 = vld [vmem:[%s3 + $0x100] sm:$0xff]
    %v347 = vld [vmem:[%s3 + $0x108] sm:$0xff]
    %v348 = vld [vmem:[%s3 + $0x110] sm:$0xff]
    %v349 = vld [vmem:[%s3 + $0x118] sm:$0xff]
    %v350 = vld [vmem:[%s3 + $0x120] sm:$0xff]
    %v351 = vld [vmem:[%s3 + $0x128] sm:$0xff]
    %v352 = vld [vmem:[%s3 + $0x130] sm:$0xff]
    %v353 = vld [vmem:[%s3 + $0x138] sm:$0xff]
    %v354 = vld [vmem:[%s3 + $0x140] sm:$0xff]
    %v355 = vld [vmem:[%s3 + $0x148] sm:$0xff]
    %v356 = vld [vmem:[%s3 + $0x150] sm:$0xff]
    %v357 = vld [vmem:[%s3 + $0x158] sm:$0xff]
    %v358 = vld [vmem:[%s3 + $0x160] sm:$0xff]
    %v359 = vld [vmem:[%s3 + $0x168] sm:$0xff]
    %v360 = vld [vmem:[%s3 + $0x170] sm:$0xff]
    %v361 = vld [vmem:[%s3 + $0x178] sm:$0xff]
    %v362 = vld [vmem:[%s3 + $0x180] sm:$0xff]
    %v363 = vld [vmem:[%s3 + $0x188] sm:$0xff]
    %v364 = vld [vmem:[%s3 + $0x190] sm:$0xff]
    %v365 = vld [vmem:[%s3 + $0x198] sm:$0xff]
    %v366 = vld [vmem:[%s3 + $0x1a0] sm:$0xff]
    %v367 = vld [vmem:[%s3 + $0x1a8] sm:$0xff]
    %v368 = vld [vmem:[%s3 + $0x1b0] sm:$0xff]
    %v369 = vld [vmem:[%s3 + $0x1b8] sm:$0xff]
    %v370 = vld [vmem:[%s3 + $0x1c0] sm:$0xff]
    %v371 = vld [vmem:[%s3 + $0x1c8] sm:$0xff]
    %v372 = vld [vmem:[%s3 + $0x1d0] sm:$0xff]
    %v373 = vld [vmem:[%s3 + $0x1d8] sm:$0xff]
    %v374 = vld [vmem:[%s3 + $0x1e0] sm:$0xff]
    %v375 = vld [vmem:[%s3 + $0x1e8] sm:$0xff]
    %v376 = vld [vmem:[%s3 + $0x1f0] sm:$0xff]
    %v377 = vld [vmem:[%s3 + $0x1f8] sm:$0xff]
    %v378 = vld [vmem:[%s3 + $0x200] sm:$0xff]
    %v379 = vld [vmem:[%s3 + $0x208] sm:$0xff]
    %v380 = vld [vmem:[%s3 + $0x210] sm:$0xff]
    %v381 = vld [vmem:[%s3 + $0x218] sm:$0xff]
    %v382 = vld [vmem:[%s3 + $0x220] sm:$0xff]
    %v383 = vld [vmem:[%s3 + $0x228] sm:$0xff]
    %v384 = vld [vmem:[%s3 + $0x230] sm:$0xff]
    %v385 = vld [vmem:[%s3 + $0x238] sm:$0xff]
    %vm386 = vcmask 326656
    %v388 = vsel %vm386, %v315, 0
    %v391 = vsel %vm386, %v317, 0
    %v394 = vsel %vm386, %v319, 0
    %v397 = vsel %vm386, %v321, 0
    %v400 = vsel %vm386, %v323, 0
    %v403 = vsel %vm386, %v325, 0
    %v406 = vsel %vm386, %v327, 0
    %v409 = vsel %vm386, %v329, 0
    %v412 = vsel %vm386, %v331, 0
    %v415 = vsel %vm386, %v333, 0
    %v418 = vsel %vm386, %v335, 0
    %v421 = vsel %vm386, %v337, 0
    %v424 = vsel %vm386, %v339, 0
    %v427 = vsel %vm386, %v341, 0
    %v430 = vsel %vm386, %v343, 0
    %v433 = vsel %vm386, %v345, 0
    %v436 = vsel %vm386, %v347, 0
    %v439 = vsel %vm386, %v349, 0
    %v442 = vsel %vm386, %v351, 0
    %v445 = vsel %vm386, %v353, 0
    %v448 = vsel %vm386, %v355, 0
    %v451 = vsel %vm386, %v357, 0
    %v454 = vsel %vm386, %v359, 0
    %v457 = vsel %vm386, %v361, 0
    %v460 = vsel %vm386, %v363, 0
    %v463 = vsel %vm386, %v365, 0
    %v466 = vsel %vm386, %v367, 0
    %v469 = vsel %vm386, %v369, 0
    %v472 = vsel %vm386, %v371, 0
    %v475 = vsel %vm386, %v373, 0
    %v478 = vsel %vm386, %v375, 0
    %v481 = vsel %vm386, %v377, 0
    %v484 = vsel %vm386, %v379, 0
    %v487 = vsel %vm386, %v381, 0
    %v490 = vsel %vm386, %v383, 0
    %v493 = vsel %vm386, %v385, 0
    %495 = vmatprep.subr.mxu0 0.0
    %496 = vmatpush1.msra.mxu0 %v308
    %497 = vmatprep.subr.mxu0 0.0
    %498 = vmatpush1.msra.mxu0 %v307
    %499 = vmatprep.subr.mxu0 0.0
    %500 = vmatpush1.msra.mxu0 %v306
    %501 = vmatprep.subr.mxu0 0.0
    %502 = vmatpush1.msra.mxu0 %v305
    %503 = vmatprep.subr.mxu0 0.0
    %504 = vmatpush1.msra.mxu0 %v304
    %505 = vmatprep.subr.mxu0 0.0
    %506 = vmatpush1.msra.mxu0 %v303
    %507 = vmatprep.subr.mxu0 0.0
    %508 = vmatpush1.msra.mxu0 %v302
    %509 = vmatprep.subr.mxu0 0.0
    %510 = vmatpush1.msra.mxu0 %v301
    %511 = vmatprep.subr.mxu0 0.0
    %512 = vmatpush1.msra.mxu0 %v300
    %513 = vmatprep.subr.mxu0 0.0
    %514 = vmatpush1.msra.mxu0 %v299
    %515 = vmatprep.subr.mxu0 0.0
    %516 = vmatpush1.msra.mxu0 %v298
    %517 = vmatprep.subr.mxu0 0.0
    %518 = vmatpush1.msra.mxu0 %v297
    %519 = vmatprep.subr.mxu0 0.0
    %520 = vmatpush1.msra.mxu0 %v296
    %521 = vmatprep.subr.mxu0 0.0
    %522 = vmatpush1.msra.mxu0 %v295
    %523 = vmatprep.subr.mxu0 0.0
    %524 = vmatpush1.msra.mxu0 %v294
    %525 = vmatprep.subr.mxu0 0.0
    %526 = vmatpush1.msra.mxu0 %v293
    %527 = vmatprep.subr.mxu0 0.0
    %528 = vmatpush2.msra.mxu0 0.0
    %529 = vmatprep.subr.mxu0 0.0
    %530 = vmatpush2.msra.mxu0 0.0
    %531 = vmatprep.subr.mxu0 0.0
    %532 = vmatpush2.msra.mxu0 0.0
    %533 = vmatprep.subr.mxu0 0.0
    %534 = vmatpush2.msra.mxu0 0.0
    %535 = vmatprep.subr.mxu0 0.0
    %536 = vmatpush2.msra.mxu0 0.0
    %537 = vmatprep.subr.mxu0 0.0
    %538 = vmatpush2.msra.mxu0 0.0
    %539 = vmatprep.subr.mxu0 0.0
    %540 = vmatpush2.msra.mxu0 0.0
    %541 = vmatprep.subr.mxu0 0.0
    %542 = vmatpush2.msra.mxu0 0.0
    %543 = vmatprep.subr.mxu0 0.0
    %544 = vmatpush2.msra.mxu0 0.0
    %545 = vmatprep.subr.mxu0 0.0
    %546 = vmatpush2.msra.mxu0 0.0
    %547 = vmatprep.subr.mxu0 0.0
    %548 = vmatpush2.msra.mxu0 0.0
    %549 = vmatprep.subr.mxu0 0.0
    %550 = vmatpush2.msra.mxu0 %v313
    %551 = vmatprep.subr.mxu0 0.0
    %552 = vmatpush2.msra.mxu0 %v312
    %553 = vmatprep.subr.mxu0 0.0
    %554 = vmatpush2.msra.mxu0 %v311
    %555 = vmatprep.subr.mxu0 0.0
    %556 = vmatpush2.msra.mxu0 %v310
    %557 = vmatprep.subr.mxu0 0.0
    %558 = vmatpush2.msra.mxu0 %v309
    %559 = vmatprep.mubr.f32.mxu0 %v388
    %560 = vmatmul.mubr.f32.gmra.mxu0 %v314
    %v561 = vpop.f32.mrf.mxu0
    %v562 = vadd.f32 0.0, %v561
    %v563 = vpop.f32.mrf.mxu0
    %564 = vmatprep.mubr.f32.mxu0 %v391
    %565 = vmatmul.mubr.f32.gmra.mxu0 %v316
    %v566 = vpop.f32.mrf.mxu0
    %v567 = vadd.f32 0.0, %v566
    %v568 = vpop.f32.mrf.mxu0
    %569 = vmatprep.mubr.f32.mxu0 %v394
    %570 = vmatmul.mubr.f32.gmra.mxu0 %v318
    %v571 = vpop.f32.mrf.mxu0
    %v572 = vadd.f32 0.0, %v571
    %v573 = vpop.f32.mrf.mxu0
    %574 = vmatprep.mubr.f32.mxu0 %v397
    %575 = vmatmul.mubr.f32.gmra.mxu0 %v320
    %v576 = vpop.f32.mrf.mxu0
    %v577 = vadd.f32 0.0, %v576
    %v578 = vpop.f32.mrf.mxu0
    %579 = vmatprep.mubr.f32.mxu0 %v400
    %580 = vmatmul.mubr.f32.gmra.mxu0 %v322
    %v581 = vpop.f32.mrf.mxu0
    %v582 = vadd.f32 0.0, %v581
    %v583 = vpop.f32.mrf.mxu0
    %584 = vmatprep.mubr.f32.mxu0 %v403
    %585 = vmatmul.mubr.f32.gmra.mxu0 %v324
    %v586 = vpop.f32.mrf.mxu0
    %v587 = vadd.f32 0.0, %v586
    %v588 = vpop.f32.mrf.mxu0
    %589 = vmatprep.mubr.f32.mxu0 %v406
    %590 = vmatmul.mubr.f32.gmra.mxu0 %v326
    %v591 = vpop.f32.mrf.mxu0
    %v592 = vadd.f32 0.0, %v591
    %v593 = vpop.f32.mrf.mxu0
    %594 = vmatprep.mubr.f32.mxu0 %v409
    %595 = vmatmul.mubr.f32.gmra.mxu0 %v328
    %v596 = vpop.f32.mrf.mxu0
    %v597 = vadd.f32 0.0, %v596
    %v598 = vpop.f32.mrf.mxu0
    %599 = vmatprep.mubr.f32.mxu0 %v412
    %600 = vmatmul.mubr.f32.gmra.mxu0 %v330
    %v601 = vpop.f32.mrf.mxu0
    %v602 = vadd.f32 0.0, %v601
    %v603 = vpop.f32.mrf.mxu0
    %604 = vmatprep.mubr.f32.mxu0 %v415
    %605 = vmatmul.mubr.f32.gmra.mxu0 %v332
    %v606 = vpop.f32.mrf.mxu0
    %v607 = vadd.f32 0.0, %v606
    %v608 = vpop.f32.mrf.mxu0
    %609 = vmatprep.mubr.f32.mxu0 %v418
    %610 = vmatmul.mubr.f32.gmra.mxu0 %v334
    %v611 = vpop.f32.mrf.mxu0
    %v612 = vadd.f32 0.0, %v611
    %v613 = vpop.f32.mrf.mxu0
    %614 = vmatprep.mubr.f32.mxu0 %v421
    %615 = vmatmul.mubr.f32.gmra.mxu0 %v336
    %v616 = vpop.f32.mrf.mxu0
    %v617 = vadd.f32 0.0, %v616
    %v618 = vpop.f32.mrf.mxu0
    %619 = vmatprep.mubr.f32.mxu0 %v424
    %620 = vmatmul.mubr.f32.gmra.mxu0 %v338
    %v621 = vpop.f32.mrf.mxu0
    %v622 = vadd.f32 0.0, %v621
    %v623 = vpop.f32.mrf.mxu0
    %624 = vmatprep.mubr.f32.mxu0 %v427
    %625 = vmatmul.mubr.f32.gmra.mxu0 %v340
    %v626 = vpop.f32.mrf.mxu0
    %v627 = vadd.f32 0.0, %v626
    %v628 = vpop.f32.mrf.mxu0
    %629 = vmatprep.mubr.f32.mxu0 %v430
    %630 = vmatmul.mubr.f32.gmra.mxu0 %v342
    %v631 = vpop.f32.mrf.mxu0
    %v632 = vadd.f32 0.0, %v631
    %v633 = vpop.f32.mrf.mxu0
    %634 = vmatprep.mubr.f32.mxu0 %v433
    %635 = vmatmul.mubr.f32.gmra.mxu0 %v344
    %v636 = vpop.f32.mrf.mxu0
    %v637 = vadd.f32 0.0, %v636
    %v638 = vpop.f32.mrf.mxu0
    %639 = vmatprep.mubr.f32.mxu0 %v436
    %640 = vmatmul.mubr.f32.gmra.mxu0 %v346
    %v641 = vpop.f32.mrf.mxu0
    %v642 = vadd.f32 0.0, %v641
    %v643 = vpop.f32.mrf.mxu0
    %644 = vmatprep.mubr.f32.mxu0 %v439
    %645 = vmatmul.mubr.f32.gmra.mxu0 %v348
    %v646 = vpop.f32.mrf.mxu0
    %v647 = vadd.f32 0.0, %v646
    %v648 = vpop.f32.mrf.mxu0
    %649 = vmatprep.mubr.f32.mxu0 %v442
    %650 = vmatmul.mubr.f32.gmra.mxu0 %v350
    %v651 = vpop.f32.mrf.mxu0
    %v652 = vadd.f32 0.0, %v651
    %v653 = vpop.f32.mrf.mxu0
    %654 = vmatprep.mubr.f32.mxu0 %v445
    %655 = vmatmul.mubr.f32.gmra.mxu0 %v352
    %v656 = vpop.f32.mrf.mxu0
    %v657 = vadd.f32 0.0, %v656
    %v658 = vpop.f32.mrf.mxu0
    %659 = vmatprep.mubr.f32.mxu0 %v448
    %660 = vmatmul.mubr.f32.gmra.mxu0 %v354
    %v661 = vpop.f32.mrf.mxu0
    %v662 = vadd.f32 0.0, %v661
    %v663 = vpop.f32.mrf.mxu0
    %664 = vmatprep.mubr.f32.mxu0 %v451
    %665 = vmatmul.mubr.f32.gmra.mxu0 %v356
    %v666 = vpop.f32.mrf.mxu0
    %v667 = vadd.f32 0.0, %v666
    %v668 = vpop.f32.mrf.mxu0
    %669 = vmatprep.mubr.f32.mxu0 %v454
    %670 = vmatmul.mubr.f32.gmra.mxu0 %v358
    %v671 = vpop.f32.mrf.mxu0
    %v672 = vadd.f32 0.0, %v671
    %v673 = vpop.f32.mrf.mxu0
    %674 = vmatprep.mubr.f32.mxu0 %v457
    %675 = vmatmul.mubr.f32.gmra.mxu0 %v360
    %v676 = vpop.f32.mrf.mxu0
    %v677 = vadd.f32 0.0, %v676
    %v678 = vpop.f32.mrf.mxu0
    %679 = vmatprep.mubr.f32.mxu0 %v460
    %680 = vmatmul.mubr.f32.gmra.mxu0 %v362
    %v681 = vpop.f32.mrf.mxu0
    %v682 = vadd.f32 0.0, %v681
    %v683 = vpop.f32.mrf.mxu0
    %684 = vmatprep.mubr.f32.mxu0 %v463
    %685 = vmatmul.mubr.f32.gmra.mxu0 %v364
    %v686 = vpop.f32.mrf.mxu0
    %v687 = vadd.f32 0.0, %v686
    %v688 = vpop.f32.mrf.mxu0
    %689 = vmatprep.mubr.f32.mxu0 %v466
    %690 = vmatmul.mubr.f32.gmra.mxu0 %v366
    %v691 = vpop.f32.mrf.mxu0
    %v692 = vadd.f32 0.0, %v691
    %v693 = vpop.f32.mrf.mxu0
    %694 = vmatprep.mubr.f32.mxu0 %v469
    %695 = vmatmul.mubr.f32.gmra.mxu0 %v368
    %v696 = vpop.f32.mrf.mxu0
    %v697 = vadd.f32 0.0, %v696
    %v698 = vpop.f32.mrf.mxu0
    %699 = vmatprep.mubr.f32.mxu0 %v472
    %700 = vmatmul.mubr.f32.gmra.mxu0 %v370
    %v701 = vpop.f32.mrf.mxu0
    %v702 = vadd.f32 0.0, %v701
    %v703 = vpop.f32.mrf.mxu0
    %704 = vmatprep.mubr.f32.mxu0 %v475
    %705 = vmatmul.mubr.f32.gmra.mxu0 %v372
    %v706 = vpop.f32.mrf.mxu0
    %v707 = vadd.f32 0.0, %v706
    %v708 = vpop.f32.mrf.mxu0
    %709 = vmatprep.mubr.f32.mxu0 %v478
    %710 = vmatmul.mubr.f32.gmra.mxu0 %v374
    %v711 = vpop.f32.mrf.mxu0
    %v712 = vadd.f32 0.0, %v711
    %v713 = vpop.f32.mrf.mxu0
    %714 = vmatprep.mubr.f32.mxu0 %v481
    %715 = vmatmul.mubr.f32.gmra.mxu0 %v376
    %v716 = vpop.f32.mrf.mxu0
    %v717 = vadd.f32 0.0, %v716
    %v718 = vpop.f32.mrf.mxu0
    %719 = vmatprep.mubr.f32.mxu0 %v484
    %720 = vmatmul.mubr.f32.gmra.mxu0 %v378
    %v721 = vpop.f32.mrf.mxu0
    %v722 = vadd.f32 0.0, %v721
    %v723 = vpop.f32.mrf.mxu0
    %724 = vmatprep.mubr.f32.mxu0 %v487
    %725 = vmatmul.mubr.f32.gmra.mxu0 %v380
    %v726 = vpop.f32.mrf.mxu0
    %v727 = vadd.f32 0.0, %v726
    %v728 = vpop.f32.mrf.mxu0
    %729 = vmatprep.mubr.f32.mxu0 %v490
    %730 = vmatmul.mubr.f32.gmra.mxu0 %v382
    %v731 = vpop.f32.mrf.mxu0
    %v732 = vadd.f32 0.0, %v731
    %v733 = vpop.f32.mrf.mxu0
    %734 = vmatprep.mubr.f32.mxu0 %v493
    %735 = vmatmul.mubr.f32.gmra.mxu0 %v384
    %v736 = vpop.f32.mrf.mxu0
    %v737 = vadd.f32 0.0, %v736
    %v738 = vpop.f32.mrf.mxu0
    %739 = vdwg.mxu0
    %v740 = vld [vmem:[%s5] sm:$0x1]
    %v741 = vld [vmem:[%s4] sm:$0xff]
    %v742 = vld [vmem:[%s4 + $0x8] sm:$0xff]
    %v743 = vld [vmem:[%s4 + $0x10] sm:$0xff]
    %v744 = vld [vmem:[%s4 + $0x18] sm:$0xff]
    %v745 = vld [vmem:[%s4 + $0x20] sm:$0xff]
    %v746 = vld [vmem:[%s4 + $0x28] sm:$0xff]
    %v747 = vld [vmem:[%s4 + $0x30] sm:$0xff]
    %v748 = vld [vmem:[%s4 + $0x38] sm:$0xff]
    %v749 = vld [vmem:[%s4 + $0x40] sm:$0xff]
    %v750 = vld [vmem:[%s4 + $0x48] sm:$0xff]
    %v751 = vld [vmem:[%s4 + $0x50] sm:$0xff]
    %v752 = vld [vmem:[%s4 + $0x58] sm:$0xff]
    %v753 = vld [vmem:[%s4 + $0x60] sm:$0xff]
    %v754 = vld [vmem:[%s4 + $0x68] sm:$0xff]
    %v755 = vld [vmem:[%s4 + $0x70] sm:$0xff]
    %v756 = vld [vmem:[%s4 + $0x78] sm:$0xff]
    %757 = vmatprep.subr.mxu0 0.0
    %758 = vmatpush1.msra.mxu0 %v756
    %759 = vmatprep.subr.mxu0 0.0
    %760 = vmatpush1.msra.mxu0 %v755
    %761 = vmatprep.subr.mxu0 0.0
    %762 = vmatpush1.msra.mxu0 %v754
    %763 = vmatprep.subr.mxu0 0.0
    %764 = vmatpush1.msra.mxu0 %v753
    %765 = vmatprep.subr.mxu0 0.0
    %766 = vmatpush1.msra.mxu0 %v752
    %767 = vmatprep.subr.mxu0 0.0
    %768 = vmatpush1.msra.mxu0 %v751
    %769 = vmatprep.subr.mxu0 0.0
    %770 = vmatpush1.msra.mxu0 %v750
    %771 = vmatprep.subr.mxu0 0.0
    %772 = vmatpush1.msra.mxu0 %v749
    %773 = vmatprep.subr.mxu0 0.0
    %774 = vmatpush1.msra.mxu0 %v748
    %775 = vmatprep.subr.mxu0 0.0
    %776 = vmatpush1.msra.mxu0 %v747
    %777 = vmatprep.subr.mxu0 0.0
    %778 = vmatpush1.msra.mxu0 %v746
    %779 = vmatprep.subr.mxu0 0.0
    %780 = vmatpush1.msra.mxu0 %v745
    %781 = vmatprep.subr.mxu0 0.0
    %782 = vmatpush1.msra.mxu0 %v744
    %783 = vmatprep.subr.mxu0 0.0
    %784 = vmatpush1.msra.mxu0 %v743
    %785 = vmatprep.subr.mxu0 0.0
    %786 = vmatpush1.msra.mxu0 %v742
    %787 = vmatprep.subr.mxu0 0.0
    %788 = vmatpush1.msra.mxu0 %v741
    %789 = vmatprep.subr.mxu0 0.0
    %790 = vmatpush2.msra.mxu0 0.0
    %791 = vmatprep.subr.mxu0 0.0
    %792 = vmatpush2.msra.mxu0 0.0
    %793 = vmatprep.subr.mxu0 0.0
    %794 = vmatpush2.msra.mxu0 0.0
    %795 = vmatprep.subr.mxu0 0.0
    %796 = vmatpush2.msra.mxu0 0.0
    %797 = vmatprep.subr.mxu0 0.0
    %798 = vmatpush2.msra.mxu0 0.0
    %799 = vmatprep.subr.mxu0 0.0
    %800 = vmatpush2.msra.mxu0 0.0
    %801 = vmatprep.subr.mxu0 0.0
    %802 = vmatpush2.msra.mxu0 0.0
    %803 = vmatprep.subr.mxu0 0.0
    %804 = vmatpush2.msra.mxu0 0.0
    %805 = vmatprep.subr.mxu0 0.0
    %806 = vmatpush2.msra.mxu0 0.0
    %807 = vmatprep.subr.mxu0 0.0
    %808 = vmatpush2.msra.mxu0 0.0
    %809 = vmatprep.subr.mxu0 0.0
    %810 = vmatpush2.msra.mxu0 0.0
    %811 = vmatprep.subr.mxu0 0.0
    %812 = vmatpush2.msra.mxu0 0.0
    %813 = vmatprep.subr.mxu0 0.0
    %814 = vmatpush2.msra.mxu0 0.0
    %815 = vmatprep.subr.mxu0 0.0
    %816 = vmatpush2.msra.mxu0 0.0
    %817 = vmatprep.subr.mxu0 0.0
    %818 = vmatpush2.msra.mxu0 0.0
    %819 = vmatprep.subr.mxu0 0.0
    %820 = vmatpush2.msra.mxu0 0.0
    %821 = vmatprep.mubr.f32.mxu0 0.0
    %822 = vmatmul.mubr.f32.gmra.mxu0 %v562
    %v823 = vpop.f32.mrf.mxu0
    %v824 = vadd.f32 0.0, %v823
    %v825 = vpop.f32.mrf.mxu0
    %826 = vmatprep.mubr.f32.mxu0 0.0
    %827 = vmatmul.mubr.f32.gmra.mxu0 %v567
    %v828 = vpop.f32.mrf.mxu0
    %v829 = vadd.f32 0.0, %v828
    %v830 = vpop.f32.mrf.mxu0
    %831 = vmatprep.mubr.f32.mxu0 0.0
    %832 = vmatmul.mubr.f32.gmra.mxu0 %v572
    %v833 = vpop.f32.mrf.mxu0
    %v834 = vadd.f32 0.0, %v833
    %v835 = vpop.f32.mrf.mxu0
    %836 = vmatprep.mubr.f32.mxu0 0.0
    %837 = vmatmul.mubr.f32.gmra.mxu0 %v577
    %v838 = vpop.f32.mrf.mxu0
    %v839 = vadd.f32 0.0, %v838
    %v840 = vpop.f32.mrf.mxu0
    %841 = vdwg.mxu0
    %v843 = vlaneseq
    %v844 = vshrl.u32 %v843, 7
    %v845 = vsub.s32 0, %v844
    %v846 = vrot.slane %v740, %v845
    %v848 = vadd.f32 %v846, %v824
    %v849 = vadd.f32 %v846, %v829
    %v850 = vadd.f32 %v846, %v834
    %v851 = vadd.f32 %v846, %v839
    %s852 = scalar_lea.vmem %s4, 128
    %v853 = vld [vmem:[%s852] sm:$0xff]
    %v854 = vld [vmem:[%s852 + $0x8] sm:$0xff]
    %v855 = vld [vmem:[%s852 + $0x10] sm:$0xff]
    %v856 = vld [vmem:[%s852 + $0x18] sm:$0xff]
    %v857 = vld [vmem:[%s852 + $0x20] sm:$0xff]
    %v858 = vld [vmem:[%s852 + $0x28] sm:$0xff]
    %v859 = vld [vmem:[%s852 + $0x30] sm:$0xff]
    %v860 = vld [vmem:[%s852 + $0x38] sm:$0xff]
    %v861 = vld [vmem:[%s852 + $0x40] sm:$0xff]
    %v862 = vld [vmem:[%s852 + $0x48] sm:$0xff]
    %v863 = vld [vmem:[%s852 + $0x50] sm:$0xff]
    %v864 = vld [vmem:[%s852 + $0x58] sm:$0xff]
    %v865 = vld [vmem:[%s852 + $0x60] sm:$0xff]
    %v866 = vld [vmem:[%s852 + $0x68] sm:$0xff]
    %v867 = vld [vmem:[%s852 + $0x70] sm:$0xff]
    %v868 = vld [vmem:[%s852 + $0x78] sm:$0xff]
    %869 = vmatprep.subr.mxu0 0.0
    %870 = vmatpush1.msra.mxu0 %v868
    %871 = vmatprep.subr.mxu0 0.0
    %872 = vmatpush1.msra.mxu0 %v867
    %873 = vmatprep.subr.mxu0 0.0
    %874 = vmatpush1.msra.mxu0 %v866
    %875 = vmatprep.subr.mxu0 0.0
    %876 = vmatpush1.msra.mxu0 %v865
    %877 = vmatprep.subr.mxu0 0.0
    %878 = vmatpush1.msra.mxu0 %v864
    %879 = vmatprep.subr.mxu0 0.0
    %880 = vmatpush1.msra.mxu0 %v863
    %881 = vmatprep.subr.mxu0 0.0
    %882 = vmatpush1.msra.mxu0 %v862
    %883 = vmatprep.subr.mxu0 0.0
    %884 = vmatpush1.msra.mxu0 %v861
    %885 = vmatprep.subr.mxu0 0.0
    %886 = vmatpush1.msra.mxu0 %v860
    %887 = vmatprep.subr.mxu0 0.0
    %888 = vmatpush1.msra.mxu0 %v859
    %889 = vmatprep.subr.mxu0 0.0
    %890 = vmatpush1.msra.mxu0 %v858
    %891 = vmatprep.subr.mxu0 0.0
    %892 = vmatpush1.msra.mxu0 %v857
    %893 = vmatprep.subr.mxu0 0.0
    %894 = vmatpush1.msra.mxu0 %v856
    %895 = vmatprep.subr.mxu0 0.0
    %896 = vmatpush1.msra.mxu0 %v855
    %897 = vmatprep.subr.mxu0 0.0
    %898 = vmatpush1.msra.mxu0 %v854
    %899 = vmatprep.subr.mxu0 0.0
    %900 = vmatpush1.msra.mxu0 %v853
    %901 = vmatprep.subr.mxu0 0.0
    %902 = vmatpush2.msra.mxu0 0.0
    %903 = vmatprep.subr.mxu0 0.0
    %904 = vmatpush2.msra.mxu0 0.0
    %905 = vmatprep.subr.mxu0 0.0
    %906 = vmatpush2.msra.mxu0 0.0
    %907 = vmatprep.subr.mxu0 0.0
    %908 = vmatpush2.msra.mxu0 0.0
    %909 = vmatprep.subr.mxu0 0.0
    %910 = vmatpush2.msra.mxu0 0.0
    %911 = vmatprep.subr.mxu0 0.0
    %912 = vmatpush2.msra.mxu0 0.0
    %913 = vmatprep.subr.mxu0 0.0
    %914 = vmatpush2.msra.mxu0 0.0
    %915 = vmatprep.subr.mxu0 0.0
    %916 = vmatpush2.msra.mxu0 0.0
    %917 = vmatprep.subr.mxu0 0.0
    %918 = vmatpush2.msra.mxu0 0.0
    %919 = vmatprep.subr.mxu0 0.0
    %920 = vmatpush2.msra.mxu0 0.0
    %921 = vmatprep.subr.mxu0 0.0
    %922 = vmatpush2.msra.mxu0 0.0
    %923 = vmatprep.subr.mxu0 0.0
    %924 = vmatpush2.msra.mxu0 0.0
    %925 = vmatprep.subr.mxu0 0.0
    %926 = vmatpush2.msra.mxu0 0.0
    %927 = vmatprep.subr.mxu0 0.0
    %928 = vmatpush2.msra.mxu0 0.0
    %929 = vmatprep.subr.mxu0 0.0
    %930 = vmatpush2.msra.mxu0 0.0
    %931 = vmatprep.subr.mxu0 0.0
    %932 = vmatpush2.msra.mxu0 0.0
    %933 = vmatprep.mubr.f32.mxu0 0.0
    %934 = vmatmul.mubr.f32.gmra.mxu0 %v582
    %v935 = vpop.f32.mrf.mxu0
    %v936 = vadd.f32 0.0, %v935
    %v937 = vpop.f32.mrf.mxu0
    %938 = vmatprep.mubr.f32.mxu0 0.0
    %939 = vmatmul.mubr.f32.gmra.mxu0 %v587
    %v940 = vpop.f32.mrf.mxu0
    %v941 = vadd.f32 0.0, %v940
    %v942 = vpop.f32.mrf.mxu0
    %943 = vmatprep.mubr.f32.mxu0 0.0
    %944 = vmatmul.mubr.f32.gmra.mxu0 %v592
    %v945 = vpop.f32.mrf.mxu0
    %v946 = vadd.f32 0.0, %v945
    %v947 = vpop.f32.mrf.mxu0
    %948 = vmatprep.mubr.f32.mxu0 0.0
    %949 = vmatmul.mubr.f32.gmra.mxu0 %v597
    %v950 = vpop.f32.mrf.mxu0
    %v951 = vadd.f32 0.0, %v950
    %v952 = vpop.f32.mrf.mxu0
    %953 = vdwg.mxu0
    %v954 = vadd.f32 %v848, %v936
    %v955 = vadd.f32 %v849, %v941
    %v956 = vadd.f32 %v850, %v946
    %v957 = vadd.f32 %v851, %v951
    %s958 = scalar_lea.vmem %s4, 256
    %v959 = vld [vmem:[%s958] sm:$0xff]
    %v960 = vld [vmem:[%s958 + $0x8] sm:$0xff]
    %v961 = vld [vmem:[%s958 + $0x10] sm:$0xff]
    %v962 = vld [vmem:[%s958 + $0x18] sm:$0xff]
    %v963 = vld [vmem:[%s958 + $0x20] sm:$0xff]
    %v964 = vld [vmem:[%s958 + $0x28] sm:$0xff]
    %v965 = vld [vmem:[%s958 + $0x30] sm:$0xff]
    %v966 = vld [vmem:[%s958 + $0x38] sm:$0xff]
    %v967 = vld [vmem:[%s958 + $0x40] sm:$0xff]
    %v968 = vld [vmem:[%s958 + $0x48] sm:$0xff]
    %v969 = vld [vmem:[%s958 + $0x50] sm:$0xff]
    %v970 = vld [vmem:[%s958 + $0x58] sm:$0xff]
    %v971 = vld [vmem:[%s958 + $0x60] sm:$0xff]
    %v972 = vld [vmem:[%s958 + $0x68] sm:$0xff]
    %v973 = vld [vmem:[%s958 + $0x70] sm:$0xff]
    %v974 = vld [vmem:[%s958 + $0x78] sm:$0xff]
    %975 = vmatprep.subr.mxu0 0.0
    %976 = vmatpush1.msra.mxu0 %v974
    %977 = vmatprep.subr.mxu0 0.0
    %978 = vmatpush1.msra.mxu0 %v973
    %979 = vmatprep.subr.mxu0 0.0
    %980 = vmatpush1.msra.mxu0 %v972
    %981 = vmatprep.subr.mxu0 0.0
    %982 = vmatpush1.msra.mxu0 %v971
    %983 = vmatprep.subr.mxu0 0.0
    %984 = vmatpush1.msra.mxu0 %v970
    %985 = vmatprep.subr.mxu0 0.0
    %986 = vmatpush1.msra.mxu0 %v969
    %987 = vmatprep.subr.mxu0 0.0
    %988 = vmatpush1.msra.mxu0 %v968
    %989 = vmatprep.subr.mxu0 0.0
    %990 = vmatpush1.msra.mxu0 %v967
    %991 = vmatprep.subr.mxu0 0.0
    %992 = vmatpush1.msra.mxu0 %v966
    %993 = vmatprep.subr.mxu0 0.0
    %994 = vmatpush1.msra.mxu0 %v965
    %995 = vmatprep.subr.mxu0 0.0
    %996 = vmatpush1.msra.mxu0 %v964
    %997 = vmatprep.subr.mxu0 0.0
    %998 = vmatpush1.msra.mxu0 %v963
    %999 = vmatprep.subr.mxu0 0.0
    %1000 = vmatpush1.msra.mxu0 %v962
    %1001 = vmatprep.subr.mxu0 0.0
    %1002 = vmatpush1.msra.mxu0 %v961
    %1003 = vmatprep.subr.mxu0 0.0
    %1004 = vmatpush1.msra.mxu0 %v960
    %1005 = vmatprep.subr.mxu0 0.0
    %1006 = vmatpush1.msra.mxu0 %v959
    %1007 = vmatprep.subr.mxu0 0.0
    %1008 = vmatpush2.msra.mxu0 0.0
    %1009 = vmatprep.subr.mxu0 0.0
    %1010 = vmatpush2.msra.mxu0 0.0
    %1011 = vmatprep.subr.mxu0 0.0
    %1012 = vmatpush2.msra.mxu0 0.0
    %1013 = vmatprep.subr.mxu0 0.0
    %1014 = vmatpush2.msra.mxu0 0.0
    %1015 = vmatprep.subr.mxu0 0.0
    %1016 = vmatpush2.msra.mxu0 0.0
    %1017 = vmatprep.subr.mxu0 0.0
    %1018 = vmatpush2.msra.mxu0 0.0
    %1019 = vmatprep.subr.mxu0 0.0
    %1020 = vmatpush2.msra.mxu0 0.0
    %1021 = vmatprep.subr.mxu0 0.0
    %1022 = vmatpush2.msra.mxu0 0.0
    %1023 = vmatprep.subr.mxu0 0.0
    %1024 = vmatpush2.msra.mxu0 0.0
    %1025 = vmatprep.subr.mxu0 0.0
    %1026 = vmatpush2.msra.mxu0 0.0
    %1027 = vmatprep.subr.mxu0 0.0
    %1028 = vmatpush2.msra.mxu0 0.0
    %1029 = vmatprep.subr.mxu0 0.0
    %1030 = vmatpush2.msra.mxu0 0.0
    %1031 = vmatprep.subr.mxu0 0.0
    %1032 = vmatpush2.msra.mxu0 0.0
    %1033 = vmatprep.subr.mxu0 0.0
    %1034 = vmatpush2.msra.mxu0 0.0
    %1035 = vmatprep.subr.mxu0 0.0
    %1036 = vmatpush2.msra.mxu0 0.0
    %1037 = vmatprep.subr.mxu0 0.0
    %1038 = vmatpush2.msra.mxu0 0.0
    %1039 = vmatprep.mubr.f32.mxu0 0.0
    %1040 = vmatmul.mubr.f32.gmra.mxu0 %v602
    %v1041 = vpop.f32.mrf.mxu0
    %v1042 = vadd.f32 0.0, %v1041
    %v1043 = vpop.f32.mrf.mxu0
    %1044 = vmatprep.mubr.f32.mxu0 0.0
    %1045 = vmatmul.mubr.f32.gmra.mxu0 %v607
    %v1046 = vpop.f32.mrf.mxu0
    %v1047 = vadd.f32 0.0, %v1046
    %v1048 = vpop.f32.mrf.mxu0
    %1049 = vmatprep.mubr.f32.mxu0 0.0
    %1050 = vmatmul.mubr.f32.gmra.mxu0 %v612
    %v1051 = vpop.f32.mrf.mxu0
    %v1052 = vadd.f32 0.0, %v1051
    %v1053 = vpop.f32.mrf.mxu0
    %1054 = vmatprep.mubr.f32.mxu0 0.0
    %1055 = vmatmul.mubr.f32.gmra.mxu0 %v617
    %v1056 = vpop.f32.mrf.mxu0
    %v1057 = vadd.f32 0.0, %v1056
    %v1058 = vpop.f32.mrf.mxu0
    %1059 = vdwg.mxu0
    %v1060 = vadd.f32 %v954, %v1042
    %v1061 = vadd.f32 %v955, %v1047
    %v1062 = vadd.f32 %v956, %v1052
    %v1063 = vadd.f32 %v957, %v1057
    %s1064 = scalar_lea.vmem %s4, 384
    %v1065 = vld [vmem:[%s1064] sm:$0xff]
    %v1066 = vld [vmem:[%s1064 + $0x8] sm:$0xff]
    %v1067 = vld [vmem:[%s1064 + $0x10] sm:$0xff]
    %v1068 = vld [vmem:[%s1064 + $0x18] sm:$0xff]
    %v1069 = vld [vmem:[%s1064 + $0x20] sm:$0xff]
    %v1070 = vld [vmem:[%s1064 + $0x28] sm:$0xff]
    %v1071 = vld [vmem:[%s1064 + $0x30] sm:$0xff]
    %v1072 = vld [vmem:[%s1064 + $0x38] sm:$0xff]
    %v1073 = vld [vmem:[%s1064 + $0x40] sm:$0xff]
    %v1074 = vld [vmem:[%s1064 + $0x48] sm:$0xff]
    %v1075 = vld [vmem:[%s1064 + $0x50] sm:$0xff]
    %v1076 = vld [vmem:[%s1064 + $0x58] sm:$0xff]
    %v1077 = vld [vmem:[%s1064 + $0x60] sm:$0xff]
    %v1078 = vld [vmem:[%s1064 + $0x68] sm:$0xff]
    %v1079 = vld [vmem:[%s1064 + $0x70] sm:$0xff]
    %v1080 = vld [vmem:[%s1064 + $0x78] sm:$0xff]
    %1081 = vmatprep.subr.mxu0 0.0
    %1082 = vmatpush1.msra.mxu0 %v1080
    %1083 = vmatprep.subr.mxu0 0.0
    %1084 = vmatpush1.msra.mxu0 %v1079
    %1085 = vmatprep.subr.mxu0 0.0
    %1086 = vmatpush1.msra.mxu0 %v1078
    %1087 = vmatprep.subr.mxu0 0.0
    %1088 = vmatpush1.msra.mxu0 %v1077
    %1089 = vmatprep.subr.mxu0 0.0
    %1090 = vmatpush1.msra.mxu0 %v1076
    %1091 = vmatprep.subr.mxu0 0.0
    %1092 = vmatpush1.msra.mxu0 %v1075
    %1093 = vmatprep.subr.mxu0 0.0
    %1094 = vmatpush1.msra.mxu0 %v1074
    %1095 = vmatprep.subr.mxu0 0.0
    %1096 = vmatpush1.msra.mxu0 %v1073
    %1097 = vmatprep.subr.mxu0 0.0
    %1098 = vmatpush1.msra.mxu0 %v1072
    %1099 = vmatprep.subr.mxu0 0.0
    %1100 = vmatpush1.msra.mxu0 %v1071
    %1101 = vmatprep.subr.mxu0 0.0
    %1102 = vmatpush1.msra.mxu0 %v1070
    %1103 = vmatprep.subr.mxu0 0.0
    %1104 = vmatpush1.msra.mxu0 %v1069
    %1105 = vmatprep.subr.mxu0 0.0
    %1106 = vmatpush1.msra.mxu0 %v1068
    %1107 = vmatprep.subr.mxu0 0.0
    %1108 = vmatpush1.msra.mxu0 %v1067
    %1109 = vmatprep.subr.mxu0 0.0
    %1110 = vmatpush1.msra.mxu0 %v1066
    %1111 = vmatprep.subr.mxu0 0.0
    %1112 = vmatpush1.msra.mxu0 %v1065
    %1113 = vmatprep.subr.mxu0 0.0
    %1114 = vmatpush2.msra.mxu0 0.0
    %1115 = vmatprep.subr.mxu0 0.0
    %1116 = vmatpush2.msra.mxu0 0.0
    %1117 = vmatprep.subr.mxu0 0.0
    %1118 = vmatpush2.msra.mxu0 0.0
    %1119 = vmatprep.subr.mxu0 0.0
    %1120 = vmatpush2.msra.mxu0 0.0
    %1121 = vmatprep.subr.mxu0 0.0
    %1122 = vmatpush2.msra.mxu0 0.0
    %1123 = vmatprep.subr.mxu0 0.0
    %1124 = vmatpush2.msra.mxu0 0.0
    %1125 = vmatprep.subr.mxu0 0.0
    %1126 = vmatpush2.msra.mxu0 0.0
    %1127 = vmatprep.subr.mxu0 0.0
    %1128 = vmatpush2.msra.mxu0 0.0
    %1129 = vmatprep.subr.mxu0 0.0
    %1130 = vmatpush2.msra.mxu0 0.0
    %1131 = vmatprep.subr.mxu0 0.0
    %1132 = vmatpush2.msra.mxu0 0.0
    %1133 = vmatprep.subr.mxu0 0.0
    %1134 = vmatpush2.msra.mxu0 0.0
    %1135 = vmatprep.subr.mxu0 0.0
    %1136 = vmatpush2.msra.mxu0 0.0
    %1137 = vmatprep.subr.mxu0 0.0
    %1138 = vmatpush2.msra.mxu0 0.0
    %1139 = vmatprep.subr.mxu0 0.0
    %1140 = vmatpush2.msra.mxu0 0.0
    %1141 = vmatprep.subr.mxu0 0.0
    %1142 = vmatpush2.msra.mxu0 0.0
    %1143 = vmatprep.subr.mxu0 0.0
    %1144 = vmatpush2.msra.mxu0 0.0
    %1145 = vmatprep.mubr.f32.mxu0 0.0
    %1146 = vmatmul.mubr.f32.gmra.mxu0 %v622
    %v1147 = vpop.f32.mrf.mxu0
    %v1148 = vadd.f32 0.0, %v1147
    %v1149 = vpop.f32.mrf.mxu0
    %1150 = vmatprep.mubr.f32.mxu0 0.0
    %1151 = vmatmul.mubr.f32.gmra.mxu0 %v627
    %v1152 = vpop.f32.mrf.mxu0
    %v1153 = vadd.f32 0.0, %v1152
    %v1154 = vpop.f32.mrf.mxu0
    %1155 = vmatprep.mubr.f32.mxu0 0.0
    %1156 = vmatmul.mubr.f32.gmra.mxu0 %v632
    %v1157 = vpop.f32.mrf.mxu0
    %v1158 = vadd.f32 0.0, %v1157
    %v1159 = vpop.f32.mrf.mxu0
    %1160 = vmatprep.mubr.f32.mxu0 0.0
    %1161 = vmatmul.mubr.f32.gmra.mxu0 %v637
    %v1162 = vpop.f32.mrf.mxu0
    %v1163 = vadd.f32 0.0, %v1162
    %v1164 = vpop.f32.mrf.mxu0
    %1165 = vdwg.mxu0
    %v1166 = vadd.f32 %v1060, %v1148
    %v1167 = vadd.f32 %v1061, %v1153
    %v1168 = vadd.f32 %v1062, %v1158
    %v1169 = vadd.f32 %v1063, %v1163
    %s1170 = scalar_lea.vmem %s4, 512
    %v1171 = vld [vmem:[%s1170] sm:$0xff]
    %v1172 = vld [vmem:[%s1170 + $0x8] sm:$0xff]
    %v1173 = vld [vmem:[%s1170 + $0x10] sm:$0xff]
    %v1174 = vld [vmem:[%s1170 + $0x18] sm:$0xff]
    %v1175 = vld [vmem:[%s1170 + $0x20] sm:$0xff]
    %v1176 = vld [vmem:[%s1170 + $0x28] sm:$0xff]
    %v1177 = vld [vmem:[%s1170 + $0x30] sm:$0xff]
    %v1178 = vld [vmem:[%s1170 + $0x38] sm:$0xff]
    %v1179 = vld [vmem:[%s1170 + $0x40] sm:$0xff]
    %v1180 = vld [vmem:[%s1170 + $0x48] sm:$0xff]
    %v1181 = vld [vmem:[%s1170 + $0x50] sm:$0xff]
    %v1182 = vld [vmem:[%s1170 + $0x58] sm:$0xff]
    %v1183 = vld [vmem:[%s1170 + $0x60] sm:$0xff]
    %v1184 = vld [vmem:[%s1170 + $0x68] sm:$0xff]
    %v1185 = vld [vmem:[%s1170 + $0x70] sm:$0xff]
    %v1186 = vld [vmem:[%s1170 + $0x78] sm:$0xff]
    %1187 = vmatprep.subr.mxu0 0.0
    %1188 = vmatpush1.msra.mxu0 %v1186
    %1189 = vmatprep.subr.mxu0 0.0
    %1190 = vmatpush1.msra.mxu0 %v1185
    %1191 = vmatprep.subr.mxu0 0.0
    %1192 = vmatpush1.msra.mxu0 %v1184
    %1193 = vmatprep.subr.mxu0 0.0
    %1194 = vmatpush1.msra.mxu0 %v1183
    %1195 = vmatprep.subr.mxu0 0.0
    %1196 = vmatpush1.msra.mxu0 %v1182
    %1197 = vmatprep.subr.mxu0 0.0
    %1198 = vmatpush1.msra.mxu0 %v1181
    %1199 = vmatprep.subr.mxu0 0.0
    %1200 = vmatpush1.msra.mxu0 %v1180
    %1201 = vmatprep.subr.mxu0 0.0
    %1202 = vmatpush1.msra.mxu0 %v1179
    %1203 = vmatprep.subr.mxu0 0.0
    %1204 = vmatpush1.msra.mxu0 %v1178
    %1205 = vmatprep.subr.mxu0 0.0
    %1206 = vmatpush1.msra.mxu0 %v1177
    %1207 = vmatprep.subr.mxu0 0.0
    %1208 = vmatpush1.msra.mxu0 %v1176
    %1209 = vmatprep.subr.mxu0 0.0
    %1210 = vmatpush1.msra.mxu0 %v1175
    %1211 = vmatprep.subr.mxu0 0.0
    %1212 = vmatpush1.msra.mxu0 %v1174
    %1213 = vmatprep.subr.mxu0 0.0
    %1214 = vmatpush1.msra.mxu0 %v1173
    %1215 = vmatprep.subr.mxu0 0.0
    %1216 = vmatpush1.msra.mxu0 %v1172
    %1217 = vmatprep.subr.mxu0 0.0
    %1218 = vmatpush1.msra.mxu0 %v1171
    %1219 = vmatprep.subr.mxu0 0.0
    %1220 = vmatpush2.msra.mxu0 0.0
    %1221 = vmatprep.subr.mxu0 0.0
    %1222 = vmatpush2.msra.mxu0 0.0
    %1223 = vmatprep.subr.mxu0 0.0
    %1224 = vmatpush2.msra.mxu0 0.0
    %1225 = vmatprep.subr.mxu0 0.0
    %1226 = vmatpush2.msra.mxu0 0.0
    %1227 = vmatprep.subr.mxu0 0.0
    %1228 = vmatpush2.msra.mxu0 0.0
    %1229 = vmatprep.subr.mxu0 0.0
    %1230 = vmatpush2.msra.mxu0 0.0
    %1231 = vmatprep.subr.mxu0 0.0
    %1232 = vmatpush2.msra.mxu0 0.0
    %1233 = vmatprep.subr.mxu0 0.0
    %1234 = vmatpush2.msra.mxu0 0.0
    %1235 = vmatprep.subr.mxu0 0.0
    %1236 = vmatpush2.msra.mxu0 0.0
    %1237 = vmatprep.subr.mxu0 0.0
    %1238 = vmatpush2.msra.mxu0 0.0
    %1239 = vmatprep.subr.mxu0 0.0
    %1240 = vmatpush2.msra.mxu0 0.0
    %1241 = vmatprep.subr.mxu0 0.0
    %1242 = vmatpush2.msra.mxu0 0.0
    %1243 = vmatprep.subr.mxu0 0.0
    %1244 = vmatpush2.msra.mxu0 0.0
    %1245 = vmatprep.subr.mxu0 0.0
    %1246 = vmatpush2.msra.mxu0 0.0
    %1247 = vmatprep.subr.mxu0 0.0
    %1248 = vmatpush2.msra.mxu0 0.0
    %1249 = vmatprep.subr.mxu0 0.0
    %1250 = vmatpush2.msra.mxu0 0.0
    %1251 = vmatprep.mubr.f32.mxu0 0.0
    %1252 = vmatmul.mubr.f32.gmra.mxu0 %v642
    %v1253 = vpop.f32.mrf.mxu0
    %v1254 = vadd.f32 0.0, %v1253
    %v1255 = vpop.f32.mrf.mxu0
    %1256 = vmatprep.mubr.f32.mxu0 0.0
    %1257 = vmatmul.mubr.f32.gmra.mxu0 %v647
    %v1258 = vpop.f32.mrf.mxu0
    %v1259 = vadd.f32 0.0, %v1258
    %v1260 = vpop.f32.mrf.mxu0
    %1261 = vmatprep.mubr.f32.mxu0 0.0
    %1262 = vmatmul.mubr.f32.gmra.mxu0 %v652
    %v1263 = vpop.f32.mrf.mxu0
    %v1264 = vadd.f32 0.0, %v1263
    %v1265 = vpop.f32.mrf.mxu0
    %1266 = vmatprep.mubr.f32.mxu0 0.0
    %1267 = vmatmul.mubr.f32.gmra.mxu0 %v657
    %v1268 = vpop.f32.mrf.mxu0
    %v1269 = vadd.f32 0.0, %v1268
    %v1270 = vpop.f32.mrf.mxu0
    %1271 = vdwg.mxu0
    %v1272 = vadd.f32 %v1166, %v1254
    %v1273 = vadd.f32 %v1167, %v1259
    %v1274 = vadd.f32 %v1168, %v1264
    %v1275 = vadd.f32 %v1169, %v1269
    %s1276 = scalar_lea.vmem %s4, 640
    %v1277 = vld [vmem:[%s1276] sm:$0xff]
    %v1278 = vld [vmem:[%s1276 + $0x8] sm:$0xff]
    %v1279 = vld [vmem:[%s1276 + $0x10] sm:$0xff]
    %v1280 = vld [vmem:[%s1276 + $0x18] sm:$0xff]
    %v1281 = vld [vmem:[%s1276 + $0x20] sm:$0xff]
    %v1282 = vld [vmem:[%s1276 + $0x28] sm:$0xff]
    %v1283 = vld [vmem:[%s1276 + $0x30] sm:$0xff]
    %v1284 = vld [vmem:[%s1276 + $0x38] sm:$0xff]
    %v1285 = vld [vmem:[%s1276 + $0x40] sm:$0xff]
    %v1286 = vld [vmem:[%s1276 + $0x48] sm:$0xff]
    %v1287 = vld [vmem:[%s1276 + $0x50] sm:$0xff]
    %v1288 = vld [vmem:[%s1276 + $0x58] sm:$0xff]
    %v1289 = vld [vmem:[%s1276 + $0x60] sm:$0xff]
    %v1290 = vld [vmem:[%s1276 + $0x68] sm:$0xff]
    %v1291 = vld [vmem:[%s1276 + $0x70] sm:$0xff]
    %v1292 = vld [vmem:[%s1276 + $0x78] sm:$0xff]
    %1293 = vmatprep.subr.mxu0 0.0
    %1294 = vmatpush1.msra.mxu0 %v1292
    %1295 = vmatprep.subr.mxu0 0.0
    %1296 = vmatpush1.msra.mxu0 %v1291
    %1297 = vmatprep.subr.mxu0 0.0
    %1298 = vmatpush1.msra.mxu0 %v1290
    %1299 = vmatprep.subr.mxu0 0.0
    %1300 = vmatpush1.msra.mxu0 %v1289
    %1301 = vmatprep.subr.mxu0 0.0
    %1302 = vmatpush1.msra.mxu0 %v1288
    %1303 = vmatprep.subr.mxu0 0.0
    %1304 = vmatpush1.msra.mxu0 %v1287
    %1305 = vmatprep.subr.mxu0 0.0
    %1306 = vmatpush1.msra.mxu0 %v1286
    %1307 = vmatprep.subr.mxu0 0.0
    %1308 = vmatpush1.msra.mxu0 %v1285
    %1309 = vmatprep.subr.mxu0 0.0
    %1310 = vmatpush1.msra.mxu0 %v1284
    %1311 = vmatprep.subr.mxu0 0.0
    %1312 = vmatpush1.msra.mxu0 %v1283
    %1313 = vmatprep.subr.mxu0 0.0
    %1314 = vmatpush1.msra.mxu0 %v1282
    %1315 = vmatprep.subr.mxu0 0.0
    %1316 = vmatpush1.msra.mxu0 %v1281
    %1317 = vmatprep.subr.mxu0 0.0
    %1318 = vmatpush1.msra.mxu0 %v1280
    %1319 = vmatprep.subr.mxu0 0.0
    %1320 = vmatpush1.msra.mxu0 %v1279
    %1321 = vmatprep.subr.mxu0 0.0
    %1322 = vmatpush1.msra.mxu0 %v1278
    %1323 = vmatprep.subr.mxu0 0.0
    %1324 = vmatpush1.msra.mxu0 %v1277
    %1325 = vmatprep.subr.mxu0 0.0
    %1326 = vmatpush2.msra.mxu0 0.0
    %1327 = vmatprep.subr.mxu0 0.0
    %1328 = vmatpush2.msra.mxu0 0.0
    %1329 = vmatprep.subr.mxu0 0.0
    %1330 = vmatpush2.msra.mxu0 0.0
    %1331 = vmatprep.subr.mxu0 0.0
    %1332 = vmatpush2.msra.mxu0 0.0
    %1333 = vmatprep.subr.mxu0 0.0
    %1334 = vmatpush2.msra.mxu0 0.0
    %1335 = vmatprep.subr.mxu0 0.0
    %1336 = vmatpush2.msra.mxu0 0.0
    %1337 = vmatprep.subr.mxu0 0.0
    %1338 = vmatpush2.msra.mxu0 0.0
    %1339 = vmatprep.subr.mxu0 0.0
    %1340 = vmatpush2.msra.mxu0 0.0
    %1341 = vmatprep.subr.mxu0 0.0
    %1342 = vmatpush2.msra.mxu0 0.0
    %1343 = vmatprep.subr.mxu0 0.0
    %1344 = vmatpush2.msra.mxu0 0.0
    %1345 = vmatprep.subr.mxu0 0.0
    %1346 = vmatpush2.msra.mxu0 0.0
    %1347 = vmatprep.subr.mxu0 0.0
    %1348 = vmatpush2.msra.mxu0 0.0
    %1349 = vmatprep.subr.mxu0 0.0
    %1350 = vmatpush2.msra.mxu0 0.0
    %1351 = vmatprep.subr.mxu0 0.0
    %1352 = vmatpush2.msra.mxu0 0.0
    %1353 = vmatprep.subr.mxu0 0.0
    %1354 = vmatpush2.msra.mxu0 0.0
    %1355 = vmatprep.subr.mxu0 0.0
    %1356 = vmatpush2.msra.mxu0 0.0
    %1357 = vmatprep.mubr.f32.mxu0 0.0
    %1358 = vmatmul.mubr.f32.gmra.mxu0 %v662
    %v1359 = vpop.f32.mrf.mxu0
    %v1360 = vadd.f32 0.0, %v1359
    %v1361 = vpop.f32.mrf.mxu0
    %1362 = vmatprep.mubr.f32.mxu0 0.0
    %1363 = vmatmul.mubr.f32.gmra.mxu0 %v667
    %v1364 = vpop.f32.mrf.mxu0
    %v1365 = vadd.f32 0.0, %v1364
    %v1366 = vpop.f32.mrf.mxu0
    %1367 = vmatprep.mubr.f32.mxu0 0.0
    %1368 = vmatmul.mubr.f32.gmra.mxu0 %v672
    %v1369 = vpop.f32.mrf.mxu0
    %v1370 = vadd.f32 0.0, %v1369
    %v1371 = vpop.f32.mrf.mxu0
    %1372 = vmatprep.mubr.f32.mxu0 0.0
    %1373 = vmatmul.mubr.f32.gmra.mxu0 %v677
    %v1374 = vpop.f32.mrf.mxu0
    %v1375 = vadd.f32 0.0, %v1374
    %v1376 = vpop.f32.mrf.mxu0
    %1377 = vdwg.mxu0
    %v1378 = vadd.f32 %v1272, %v1360
    %v1379 = vadd.f32 %v1273, %v1365
    %v1380 = vadd.f32 %v1274, %v1370
    %v1381 = vadd.f32 %v1275, %v1375
    %s1382 = scalar_lea.vmem %s4, 768
    %v1383 = vld [vmem:[%s1382] sm:$0xff]
    %v1384 = vld [vmem:[%s1382 + $0x8] sm:$0xff]
    %v1385 = vld [vmem:[%s1382 + $0x10] sm:$0xff]
    %v1386 = vld [vmem:[%s1382 + $0x18] sm:$0xff]
    %v1387 = vld [vmem:[%s1382 + $0x20] sm:$0xff]
    %v1388 = vld [vmem:[%s1382 + $0x28] sm:$0xff]
    %v1389 = vld [vmem:[%s1382 + $0x30] sm:$0xff]
    %v1390 = vld [vmem:[%s1382 + $0x38] sm:$0xff]
    %v1391 = vld [vmem:[%s1382 + $0x40] sm:$0xff]
    %v1392 = vld [vmem:[%s1382 + $0x48] sm:$0xff]
    %v1393 = vld [vmem:[%s1382 + $0x50] sm:$0xff]
    %v1394 = vld [vmem:[%s1382 + $0x58] sm:$0xff]
    %v1395 = vld [vmem:[%s1382 + $0x60] sm:$0xff]
    %v1396 = vld [vmem:[%s1382 + $0x68] sm:$0xff]
    %v1397 = vld [vmem:[%s1382 + $0x70] sm:$0xff]
    %v1398 = vld [vmem:[%s1382 + $0x78] sm:$0xff]
    %1399 = vmatprep.subr.mxu0 0.0
    %1400 = vmatpush1.msra.mxu0 %v1398
    %1401 = vmatprep.subr.mxu0 0.0
    %1402 = vmatpush1.msra.mxu0 %v1397
    %1403 = vmatprep.subr.mxu0 0.0
    %1404 = vmatpush1.msra.mxu0 %v1396
    %1405 = vmatprep.subr.mxu0 0.0
    %1406 = vmatpush1.msra.mxu0 %v1395
    %1407 = vmatprep.subr.mxu0 0.0
    %1408 = vmatpush1.msra.mxu0 %v1394
    %1409 = vmatprep.subr.mxu0 0.0
    %1410 = vmatpush1.msra.mxu0 %v1393
    %1411 = vmatprep.subr.mxu0 0.0
    %1412 = vmatpush1.msra.mxu0 %v1392
    %1413 = vmatprep.subr.mxu0 0.0
    %1414 = vmatpush1.msra.mxu0 %v1391
    %1415 = vmatprep.subr.mxu0 0.0
    %1416 = vmatpush1.msra.mxu0 %v1390
    %1417 = vmatprep.subr.mxu0 0.0
    %1418 = vmatpush1.msra.mxu0 %v1389
    %1419 = vmatprep.subr.mxu0 0.0
    %1420 = vmatpush1.msra.mxu0 %v1388
    %1421 = vmatprep.subr.mxu0 0.0
    %1422 = vmatpush1.msra.mxu0 %v1387
    %1423 = vmatprep.subr.mxu0 0.0
    %1424 = vmatpush1.msra.mxu0 %v1386
    %1425 = vmatprep.subr.mxu0 0.0
    %1426 = vmatpush1.msra.mxu0 %v1385
    %1427 = vmatprep.subr.mxu0 0.0
    %1428 = vmatpush1.msra.mxu0 %v1384
    %1429 = vmatprep.subr.mxu0 0.0
    %1430 = vmatpush1.msra.mxu0 %v1383
    %1431 = vmatprep.subr.mxu0 0.0
    %1432 = vmatpush2.msra.mxu0 0.0
    %1433 = vmatprep.subr.mxu0 0.0
    %1434 = vmatpush2.msra.mxu0 0.0
    %1435 = vmatprep.subr.mxu0 0.0
    %1436 = vmatpush2.msra.mxu0 0.0
    %1437 = vmatprep.subr.mxu0 0.0
    %1438 = vmatpush2.msra.mxu0 0.0
    %1439 = vmatprep.subr.mxu0 0.0
    %1440 = vmatpush2.msra.mxu0 0.0
    %1441 = vmatprep.subr.mxu0 0.0
    %1442 = vmatpush2.msra.mxu0 0.0
    %1443 = vmatprep.subr.mxu0 0.0
    %1444 = vmatpush2.msra.mxu0 0.0
    %1445 = vmatprep.subr.mxu0 0.0
    %1446 = vmatpush2.msra.mxu0 0.0
    %1447 = vmatprep.subr.mxu0 0.0
    %1448 = vmatpush2.msra.mxu0 0.0
    %1449 = vmatprep.subr.mxu0 0.0
    %1450 = vmatpush2.msra.mxu0 0.0
    %1451 = vmatprep.subr.mxu0 0.0
    %1452 = vmatpush2.msra.mxu0 0.0
    %1453 = vmatprep.subr.mxu0 0.0
    %1454 = vmatpush2.msra.mxu0 0.0
    %1455 = vmatprep.subr.mxu0 0.0
    %1456 = vmatpush2.msra.mxu0 0.0
    %1457 = vmatprep.subr.mxu0 0.0
    %1458 = vmatpush2.msra.mxu0 0.0
    %1459 = vmatprep.subr.mxu0 0.0
    %1460 = vmatpush2.msra.mxu0 0.0
    %1461 = vmatprep.subr.mxu0 0.0
    %1462 = vmatpush2.msra.mxu0 0.0
    %1463 = vmatprep.mubr.f32.mxu0 0.0
    %1464 = vmatmul.mubr.f32.gmra.mxu0 %v682
    %v1465 = vpop.f32.mrf.mxu0
    %v1466 = vadd.f32 0.0, %v1465
    %v1467 = vpop.f32.mrf.mxu0
    %1468 = vmatprep.mubr.f32.mxu0 0.0
    %1469 = vmatmul.mubr.f32.gmra.mxu0 %v687
    %v1470 = vpop.f32.mrf.mxu0
    %v1471 = vadd.f32 0.0, %v1470
    %v1472 = vpop.f32.mrf.mxu0
    %1473 = vmatprep.mubr.f32.mxu0 0.0
    %1474 = vmatmul.mubr.f32.gmra.mxu0 %v692
    %v1475 = vpop.f32.mrf.mxu0
    %v1476 = vadd.f32 0.0, %v1475
    %v1477 = vpop.f32.mrf.mxu0
    %1478 = vmatprep.mubr.f32.mxu0 0.0
    %1479 = vmatmul.mubr.f32.gmra.mxu0 %v697
    %v1480 = vpop.f32.mrf.mxu0
    %v1481 = vadd.f32 0.0, %v1480
    %v1482 = vpop.f32.mrf.mxu0
    %1483 = vdwg.mxu0
    %v1484 = vadd.f32 %v1378, %v1466
    %v1485 = vadd.f32 %v1379, %v1471
    %v1486 = vadd.f32 %v1380, %v1476
    %v1487 = vadd.f32 %v1381, %v1481
    %s1488 = scalar_lea.vmem %s4, 896
    %v1489 = vld [vmem:[%s1488] sm:$0xff]
    %v1490 = vld [vmem:[%s1488 + $0x8] sm:$0xff]
    %v1491 = vld [vmem:[%s1488 + $0x10] sm:$0xff]
    %v1492 = vld [vmem:[%s1488 + $0x18] sm:$0xff]
    %v1493 = vld [vmem:[%s1488 + $0x20] sm:$0xff]
    %v1494 = vld [vmem:[%s1488 + $0x28] sm:$0xff]
    %v1495 = vld [vmem:[%s1488 + $0x30] sm:$0xff]
    %v1496 = vld [vmem:[%s1488 + $0x38] sm:$0xff]
    %v1497 = vld [vmem:[%s1488 + $0x40] sm:$0xff]
    %v1498 = vld [vmem:[%s1488 + $0x48] sm:$0xff]
    %v1499 = vld [vmem:[%s1488 + $0x50] sm:$0xff]
    %v1500 = vld [vmem:[%s1488 + $0x58] sm:$0xff]
    %v1501 = vld [vmem:[%s1488 + $0x60] sm:$0xff]
    %v1502 = vld [vmem:[%s1488 + $0x68] sm:$0xff]
    %v1503 = vld [vmem:[%s1488 + $0x70] sm:$0xff]
    %v1504 = vld [vmem:[%s1488 + $0x78] sm:$0xff]
    %1505 = vmatprep.subr.mxu0 0.0
    %1506 = vmatpush1.msra.mxu0 %v1504
    %1507 = vmatprep.subr.mxu0 0.0
    %1508 = vmatpush1.msra.mxu0 %v1503
    %1509 = vmatprep.subr.mxu0 0.0
    %1510 = vmatpush1.msra.mxu0 %v1502
    %1511 = vmatprep.subr.mxu0 0.0
    %1512 = vmatpush1.msra.mxu0 %v1501
    %1513 = vmatprep.subr.mxu0 0.0
    %1514 = vmatpush1.msra.mxu0 %v1500
    %1515 = vmatprep.subr.mxu0 0.0
    %1516 = vmatpush1.msra.mxu0 %v1499
    %1517 = vmatprep.subr.mxu0 0.0
    %1518 = vmatpush1.msra.mxu0 %v1498
    %1519 = vmatprep.subr.mxu0 0.0
    %1520 = vmatpush1.msra.mxu0 %v1497
    %1521 = vmatprep.subr.mxu0 0.0
    %1522 = vmatpush1.msra.mxu0 %v1496
    %1523 = vmatprep.subr.mxu0 0.0
    %1524 = vmatpush1.msra.mxu0 %v1495
    %1525 = vmatprep.subr.mxu0 0.0
    %1526 = vmatpush1.msra.mxu0 %v1494
    %1527 = vmatprep.subr.mxu0 0.0
    %1528 = vmatpush1.msra.mxu0 %v1493
    %1529 = vmatprep.subr.mxu0 0.0
    %1530 = vmatpush1.msra.mxu0 %v1492
    %1531 = vmatprep.subr.mxu0 0.0
    %1532 = vmatpush1.msra.mxu0 %v1491
    %1533 = vmatprep.subr.mxu0 0.0
    %1534 = vmatpush1.msra.mxu0 %v1490
    %1535 = vmatprep.subr.mxu0 0.0
    %1536 = vmatpush1.msra.mxu0 %v1489
    %1537 = vmatprep.subr.mxu0 0.0
    %1538 = vmatpush2.msra.mxu0 0.0
    %1539 = vmatprep.subr.mxu0 0.0
    %1540 = vmatpush2.msra.mxu0 0.0
    %1541 = vmatprep.subr.mxu0 0.0
    %1542 = vmatpush2.msra.mxu0 0.0
    %1543 = vmatprep.subr.mxu0 0.0
    %1544 = vmatpush2.msra.mxu0 0.0
    %1545 = vmatprep.subr.mxu0 0.0
    %1546 = vmatpush2.msra.mxu0 0.0
    %1547 = vmatprep.subr.mxu0 0.0
    %1548 = vmatpush2.msra.mxu0 0.0
    %1549 = vmatprep.subr.mxu0 0.0
    %1550 = vmatpush2.msra.mxu0 0.0
    %1551 = vmatprep.subr.mxu0 0.0
    %1552 = vmatpush2.msra.mxu0 0.0
    %1553 = vmatprep.subr.mxu0 0.0
    %1554 = vmatpush2.msra.mxu0 0.0
    %1555 = vmatprep.subr.mxu0 0.0
    %1556 = vmatpush2.msra.mxu0 0.0
    %1557 = vmatprep.subr.mxu0 0.0
    %1558 = vmatpush2.msra.mxu0 0.0
    %1559 = vmatprep.subr.mxu0 0.0
    %1560 = vmatpush2.msra.mxu0 0.0
    %1561 = vmatprep.subr.mxu0 0.0
    %1562 = vmatpush2.msra.mxu0 0.0
    %1563 = vmatprep.subr.mxu0 0.0
    %1564 = vmatpush2.msra.mxu0 0.0
    %1565 = vmatprep.subr.mxu0 0.0
    %1566 = vmatpush2.msra.mxu0 0.0
    %1567 = vmatprep.subr.mxu0 0.0
    %1568 = vmatpush2.msra.mxu0 0.0
    %1569 = vmatprep.mubr.f32.mxu0 0.0
    %1570 = vmatmul.mubr.f32.gmra.mxu0 %v702
    %v1571 = vpop.f32.mrf.mxu0
    %v1572 = vadd.f32 0.0, %v1571
    %v1573 = vpop.f32.mrf.mxu0
    %1574 = vmatprep.mubr.f32.mxu0 0.0
    %1575 = vmatmul.mubr.f32.gmra.mxu0 %v707
    %v1576 = vpop.f32.mrf.mxu0
    %v1577 = vadd.f32 0.0, %v1576
    %v1578 = vpop.f32.mrf.mxu0
    %1579 = vmatprep.mubr.f32.mxu0 0.0
    %1580 = vmatmul.mubr.f32.gmra.mxu0 %v712
    %v1581 = vpop.f32.mrf.mxu0
    %v1582 = vadd.f32 0.0, %v1581
    %v1583 = vpop.f32.mrf.mxu0
    %1584 = vmatprep.mubr.f32.mxu0 0.0
    %1585 = vmatmul.mubr.f32.gmra.mxu0 %v717
    %v1586 = vpop.f32.mrf.mxu0
    %v1587 = vadd.f32 0.0, %v1586
    %v1588 = vpop.f32.mrf.mxu0
    %1589 = vdwg.mxu0
    %v1590 = vadd.f32 %v1484, %v1572
    %v1591 = vadd.f32 %v1485, %v1577
    %v1592 = vadd.f32 %v1486, %v1582
    %v1593 = vadd.f32 %v1487, %v1587
    %s1594 = scalar_lea.vmem %s4, 1024
    %v1595 = vld [vmem:[%s1594] sm:$0xff]
    %v1596 = vld [vmem:[%s1594 + $0x8] sm:$0xff]
    %v1597 = vld [vmem:[%s1594 + $0x10] sm:$0xff]
    %v1598 = vld [vmem:[%s1594 + $0x18] sm:$0xff]
    %v1599 = vld [vmem:[%s1594 + $0x20] sm:$0xff]
    %v1600 = vld [vmem:[%s1594 + $0x28] sm:$0xff]
    %v1601 = vld [vmem:[%s1594 + $0x30] sm:$0xff]
    %v1602 = vld [vmem:[%s1594 + $0x38] sm:$0xff]
    %v1603 = vld [vmem:[%s1594 + $0x40] sm:$0xff]
    %v1604 = vld [vmem:[%s1594 + $0x48] sm:$0xff]
    %v1605 = vld [vmem:[%s1594 + $0x50] sm:$0xff]
    %v1606 = vld [vmem:[%s1594 + $0x58] sm:$0xff]
    %v1607 = vld [vmem:[%s1594 + $0x60] sm:$0xff]
    %v1608 = vld [vmem:[%s1594 + $0x68] sm:$0xff]
    %v1609 = vld [vmem:[%s1594 + $0x70] sm:$0xff]
    %v1610 = vld [vmem:[%s1594 + $0x78] sm:$0xff]
    %1611 = vmatprep.subr.mxu0 0.0
    %1612 = vmatpush1.msra.mxu0 %v1610
    %1613 = vmatprep.subr.mxu0 0.0
    %1614 = vmatpush1.msra.mxu0 %v1609
    %1615 = vmatprep.subr.mxu0 0.0
    %1616 = vmatpush1.msra.mxu0 %v1608
    %1617 = vmatprep.subr.mxu0 0.0
    %1618 = vmatpush1.msra.mxu0 %v1607
    %1619 = vmatprep.subr.mxu0 0.0
    %1620 = vmatpush1.msra.mxu0 %v1606
    %1621 = vmatprep.subr.mxu0 0.0
    %1622 = vmatpush1.msra.mxu0 %v1605
    %1623 = vmatprep.subr.mxu0 0.0
    %1624 = vmatpush1.msra.mxu0 %v1604
    %1625 = vmatprep.subr.mxu0 0.0
    %1626 = vmatpush1.msra.mxu0 %v1603
    %1627 = vmatprep.subr.mxu0 0.0
    %1628 = vmatpush1.msra.mxu0 %v1602
    %1629 = vmatprep.subr.mxu0 0.0
    %1630 = vmatpush1.msra.mxu0 %v1601
    %1631 = vmatprep.subr.mxu0 0.0
    %1632 = vmatpush1.msra.mxu0 %v1600
    %1633 = vmatprep.subr.mxu0 0.0
    %1634 = vmatpush1.msra.mxu0 %v1599
    %1635 = vmatprep.subr.mxu0 0.0
    %1636 = vmatpush1.msra.mxu0 %v1598
    %1637 = vmatprep.subr.mxu0 0.0
    %1638 = vmatpush1.msra.mxu0 %v1597
    %1639 = vmatprep.subr.mxu0 0.0
    %1640 = vmatpush1.msra.mxu0 %v1596
    %1641 = vmatprep.subr.mxu0 0.0
    %1642 = vmatpush1.msra.mxu0 %v1595
    %1643 = vmatprep.subr.mxu0 0.0
    %1644 = vmatpush2.msra.mxu0 0.0
    %1645 = vmatprep.subr.mxu0 0.0
    %1646 = vmatpush2.msra.mxu0 0.0
    %1647 = vmatprep.subr.mxu0 0.0
    %1648 = vmatpush2.msra.mxu0 0.0
    %1649 = vmatprep.subr.mxu0 0.0
    %1650 = vmatpush2.msra.mxu0 0.0
    %1651 = vmatprep.subr.mxu0 0.0
    %1652 = vmatpush2.msra.mxu0 0.0
    %1653 = vmatprep.subr.mxu0 0.0
    %1654 = vmatpush2.msra.mxu0 0.0
    %1655 = vmatprep.subr.mxu0 0.0
    %1656 = vmatpush2.msra.mxu0 0.0
    %1657 = vmatprep.subr.mxu0 0.0
    %1658 = vmatpush2.msra.mxu0 0.0
    %1659 = vmatprep.subr.mxu0 0.0
    %1660 = vmatpush2.msra.mxu0 0.0
    %1661 = vmatprep.subr.mxu0 0.0
    %1662 = vmatpush2.msra.mxu0 0.0
    %1663 = vmatprep.subr.mxu0 0.0
    %1664 = vmatpush2.msra.mxu0 0.0
    %1665 = vmatprep.subr.mxu0 0.0
    %1666 = vmatpush2.msra.mxu0 0.0
    %1667 = vmatprep.subr.mxu0 0.0
    %1668 = vmatpush2.msra.mxu0 0.0
    %1669 = vmatprep.subr.mxu0 0.0
    %1670 = vmatpush2.msra.mxu0 0.0
    %1671 = vmatprep.subr.mxu0 0.0
    %1672 = vmatpush2.msra.mxu0 0.0
    %1673 = vmatprep.subr.mxu0 0.0
    %1674 = vmatpush2.msra.mxu0 0.0
    %1675 = vmatprep.mubr.f32.mxu0 0.0
    %1676 = vmatmul.mubr.f32.gmra.mxu0 %v722
    %v1677 = vpop.f32.mrf.mxu0
    %v1678 = vadd.f32 0.0, %v1677
    %v1679 = vpop.f32.mrf.mxu0
    %1680 = vmatprep.mubr.f32.mxu0 0.0
    %1681 = vmatmul.mubr.f32.gmra.mxu0 %v727
    %v1682 = vpop.f32.mrf.mxu0
    %v1683 = vadd.f32 0.0, %v1682
    %v1684 = vpop.f32.mrf.mxu0
    %1685 = vmatprep.mubr.f32.mxu0 0.0
    %1686 = vmatmul.mubr.f32.gmra.mxu0 %v732
    %v1687 = vpop.f32.mrf.mxu0
    %v1688 = vadd.f32 0.0, %v1687
    %v1689 = vpop.f32.mrf.mxu0
    %1690 = vmatprep.mubr.f32.mxu0 0.0
    %1691 = vmatmul.mubr.f32.gmra.mxu0 %v737
    %v1692 = vpop.f32.mrf.mxu0
    %v1693 = vadd.f32 0.0, %v1692
    %v1694 = vpop.f32.mrf.mxu0
    %1695 = vdwg.mxu0
    %v1696 = vadd.f32 %v1590, %v1678
    %v1697 = vadd.f32 %v1591, %v1683
    %v1698 = vadd.f32 %v1592, %v1688
    %v1699 = vadd.f32 %v1593, %v1693
    %1700 = vst [vmem:[#allocation2] sm:$0xff] %v1696
    %1701 = vst [vmem:[#allocation2 + $0x8] sm:$0xff] %v1697
    %1702 = vst [vmem:[#allocation2 + $0x10] sm:$0xff] %v1698
    %1703 = vst [vmem:[#allocation2 + $0x18] sm:$0xff] %v1699
    %v1704 = vmax.f32 %v1696, 0.0
    %v1705 = vmax.f32 %v1697, 0.0
    %v1706 = vmax.f32 %v1698, 0.0
    %v1707 = vmax.f32 %v1699, 0.0
    %v1708 = vld [vmem:[%s6] sm:$0xff]
    %v1709 = vld [vmem:[%s6 + $0x8] sm:$0xff]
    %v1710 = vld [vmem:[%s6 + $0x10] sm:$0xff]
    %v1711 = vld [vmem:[%s6 + $0x18] sm:$0xff]
    %v1712 = vld [vmem:[%s6 + $0x20] sm:$0xff]
    %v1713 = vld [vmem:[%s6 + $0x28] sm:$0xff]
    %v1714 = vld [vmem:[%s6 + $0x30] sm:$0xff]
    %v1715 = vld [vmem:[%s6 + $0x38] sm:$0xff]
    %v1716 = vld [vmem:[%s6 + $0x40] sm:$0xff]
    %vm1717 = vcmask 261120
    %v1719 = vsel %vm1717, %v1708, 0
    %v1722 = vsel %vm1717, %v1709, 0
    %v1725 = vsel %vm1717, %v1710, 0
    %v1728 = vsel %vm1717, %v1711, 0
    %v1731 = vsel %vm1717, %v1712, 0
    %v1734 = vsel %vm1717, %v1713, 0
    %v1737 = vsel %vm1717, %v1714, 0
    %v1740 = vsel %vm1717, %v1715, 0
    %v1743 = vsel %vm1717, %v1716, 0
    %1745 = vmatprep.subr.mxu0 0.0
    %1746 = vmatpush1.msra.mxu0 0.0
    %1747 = vmatprep.subr.mxu0 0.0
    %1748 = vmatpush1.msra.mxu0 0.0
    %1749 = vmatprep.subr.mxu0 0.0
    %1750 = vmatpush1.msra.mxu0 0.0
    %1751 = vmatprep.subr.mxu0 0.0
    %1752 = vmatpush1.msra.mxu0 0.0
    %1753 = vmatprep.subr.mxu0 0.0
    %1754 = vmatpush1.msra.mxu0 0.0
    %1755 = vmatprep.subr.mxu0 0.0
    %1756 = vmatpush1.msra.mxu0 0.0
    %1757 = vmatprep.subr.mxu0 0.0
    %1758 = vmatpush1.msra.mxu0 0.0
    %1759 = vmatprep.subr.mxu0 0.0
    %1760 = vmatpush1.msra.mxu0 0.0
    %1761 = vmatprep.subr.mxu0 0.0
    %1762 = vmatpush1.msra.mxu0 0.0
    %1763 = vmatprep.subr.mxu0 0.0
    %1764 = vmatpush1.msra.mxu0 0.0
    %1765 = vmatprep.subr.mxu0 0.0
    %1766 = vmatpush1.msra.mxu0 0.0
    %1767 = vmatprep.subr.mxu0 0.0
    %1768 = vmatpush1.msra.mxu0 0.0
    %1769 = vmatprep.subr.mxu0 0.0
    %1770 = vmatpush1.msra.mxu0 %v1707
    %1771 = vmatprep.subr.mxu0 0.0
    %1772 = vmatpush1.msra.mxu0 %v1706
    %1773 = vmatprep.subr.mxu0 0.0
    %1774 = vmatpush1.msra.mxu0 %v1705
    %1775 = vmatprep.subr.mxu0 0.0
    %1776 = vmatpush1.msra.mxu0 %v1704
    %1777 = vmatprep.subr.mxu0 0.0
    %1778 = vmatpush2.msra.mxu0 0.0
    %1779 = vmatprep.subr.mxu0 0.0
    %1780 = vmatpush2.msra.mxu0 0.0
    %1781 = vmatprep.subr.mxu0 0.0
    %1782 = vmatpush2.msra.mxu0 0.0
    %1783 = vmatprep.subr.mxu0 0.0
    %1784 = vmatpush2.msra.mxu0 0.0
    %1785 = vmatprep.subr.mxu0 0.0
    %1786 = vmatpush2.msra.mxu0 0.0
    %1787 = vmatprep.subr.mxu0 0.0
    %1788 = vmatpush2.msra.mxu0 0.0
    %1789 = vmatprep.subr.mxu0 0.0
    %1790 = vmatpush2.msra.mxu0 0.0
    %1791 = vmatprep.subr.mxu0 0.0
    %1792 = vmatpush2.msra.mxu0 0.0
    %1793 = vmatprep.subr.mxu0 0.0
    %1794 = vmatpush2.msra.mxu0 0.0
    %1795 = vmatprep.subr.mxu0 0.0
    %1796 = vmatpush2.msra.mxu0 0.0
    %1797 = vmatprep.subr.mxu0 0.0
    %1798 = vmatpush2.msra.mxu0 0.0
    %1799 = vmatprep.subr.mxu0 0.0
    %1800 = vmatpush2.msra.mxu0 0.0
    %1801 = vmatprep.subr.mxu0 0.0
    %1802 = vmatpush2.msra.mxu0 0.0
    %1803 = vmatprep.subr.mxu0 0.0
    %1804 = vmatpush2.msra.mxu0 0.0
    %1805 = vmatprep.subr.mxu0 0.0
    %1806 = vmatpush2.msra.mxu0 0.0
    %1807 = vmatprep.subr.mxu0 0.0
    %1808 = vmatpush2.msra.mxu0 0.0
    %1809 = vmatprep.mubr.f32.mxu0 0.0
    %1810 = vmatmul.mubr.f32.gmra.mxu0 %v1719
    %v1811 = vpop.f32.mrf.mxu0
    %v1812 = vadd.f32 0.0, %v1811
    %v1813 = vpop.f32.mrf.mxu0
    %1814 = vmatprep.mubr.f32.mxu0 0.0
    %1815 = vmatmul.mubr.f32.gmra.mxu0 %v1722
    %v1816 = vpop.f32.mrf.mxu0
    %v1817 = vadd.f32 0.0, %v1816
    %v1818 = vpop.f32.mrf.mxu0
    %1819 = vmatprep.mubr.f32.mxu0 0.0
    %1820 = vmatmul.mubr.f32.gmra.mxu0 %v1725
    %v1821 = vpop.f32.mrf.mxu0
    %v1822 = vadd.f32 0.0, %v1821
    %v1823 = vpop.f32.mrf.mxu0
    %1824 = vmatprep.mubr.f32.mxu0 0.0
    %1825 = vmatmul.mubr.f32.gmra.mxu0 %v1728
    %v1826 = vpop.f32.mrf.mxu0
    %v1827 = vadd.f32 0.0, %v1826
    %v1828 = vpop.f32.mrf.mxu0
    %1829 = vmatprep.mubr.f32.mxu0 0.0
    %1830 = vmatmul.mubr.f32.gmra.mxu0 %v1731
    %v1831 = vpop.f32.mrf.mxu0
    %v1832 = vadd.f32 0.0, %v1831
    %v1833 = vpop.f32.mrf.mxu0
    %1834 = vmatprep.mubr.f32.mxu0 0.0
    %1835 = vmatmul.mubr.f32.gmra.mxu0 %v1734
    %v1836 = vpop.f32.mrf.mxu0
    %v1837 = vadd.f32 0.0, %v1836
    %v1838 = vpop.f32.mrf.mxu0
    %1839 = vmatprep.mubr.f32.mxu0 0.0
    %1840 = vmatmul.mubr.f32.gmra.mxu0 %v1737
    %v1841 = vpop.f32.mrf.mxu0
    %v1842 = vadd.f32 0.0, %v1841
    %v1843 = vpop.f32.mrf.mxu0
    %1844 = vmatprep.mubr.f32.mxu0 0.0
    %1845 = vmatmul.mubr.f32.gmra.mxu0 %v1740
    %v1846 = vpop.f32.mrf.mxu0
    %v1847 = vadd.f32 0.0, %v1846
    %v1848 = vpop.f32.mrf.mxu0
    %1849 = vmatprep.mubr.f32.mxu0 0.0
    %1850 = vmatmul.mubr.f32.gmra.mxu0 %v1743
    %v1851 = vpop.f32.mrf.mxu0
    %v1852 = vadd.f32 0.0, %v1851
    %v1853 = vpop.f32.mrf.mxu0
    %1854 = vdwg.mxu0
    %v1855 = vld [vmem:[%s8] sm:$0x1]
    %v1856 = vld [vmem:[%s7] sm:$0xff]
    %v1857 = vld [vmem:[%s7 + $0x8] sm:$0xff]
    %v1858 = vld [vmem:[%s7 + $0x10] sm:$0xff]
    %v1859 = vld [vmem:[%s7 + $0x18] sm:$0xff]
    %v1860 = vld [vmem:[%s7 + $0x20] sm:$0xff]
    %v1861 = vld [vmem:[%s7 + $0x28] sm:$0xff]
    %v1862 = vld [vmem:[%s7 + $0x30] sm:$0xff]
    %v1863 = vld [vmem:[%s7 + $0x38] sm:$0xff]
    %v1864 = vld [vmem:[%s7 + $0x40] sm:$0xff]
    %v1865 = vld [vmem:[%s7 + $0x48] sm:$0xff]
    %v1866 = vld [vmem:[%s7 + $0x50] sm:$0xff]
    %v1867 = vld [vmem:[%s7 + $0x58] sm:$0xff]
    %v1868 = vld [vmem:[%s7 + $0x60] sm:$0xff]
    %v1869 = vld [vmem:[%s7 + $0x68] sm:$0xff]
    %v1870 = vld [vmem:[%s7 + $0x70] sm:$0xff]
    %v1871 = vld [vmem:[%s7 + $0x78] sm:$0xff]
    %1872 = vmatprep.subr.mxu0 0.0
    %1873 = vmatpush1.msra.mxu0 %v1871
    %1874 = vmatprep.subr.mxu0 0.0
    %1875 = vmatpush1.msra.mxu0 %v1870
    %1876 = vmatprep.subr.mxu0 0.0
    %1877 = vmatpush1.msra.mxu0 %v1869
    %1878 = vmatprep.subr.mxu0 0.0
    %1879 = vmatpush1.msra.mxu0 %v1868
    %1880 = vmatprep.subr.mxu0 0.0
    %1881 = vmatpush1.msra.mxu0 %v1867
    %1882 = vmatprep.subr.mxu0 0.0
    %1883 = vmatpush1.msra.mxu0 %v1866
    %1884 = vmatprep.subr.mxu0 0.0
    %1885 = vmatpush1.msra.mxu0 %v1865
    %1886 = vmatprep.subr.mxu0 0.0
    %1887 = vmatpush1.msra.mxu0 %v1864
    %1888 = vmatprep.subr.mxu0 0.0
    %1889 = vmatpush1.msra.mxu0 %v1863
    %1890 = vmatprep.subr.mxu0 0.0
    %1891 = vmatpush1.msra.mxu0 %v1862
    %1892 = vmatprep.subr.mxu0 0.0
    %1893 = vmatpush1.msra.mxu0 %v1861
    %1894 = vmatprep.subr.mxu0 0.0
    %1895 = vmatpush1.msra.mxu0 %v1860
    %1896 = vmatprep.subr.mxu0 0.0
    %1897 = vmatpush1.msra.mxu0 %v1859
    %1898 = vmatprep.subr.mxu0 0.0
    %1899 = vmatpush1.msra.mxu0 %v1858
    %1900 = vmatprep.subr.mxu0 0.0
    %1901 = vmatpush1.msra.mxu0 %v1857
    %1902 = vmatprep.subr.mxu0 0.0
    %1903 = vmatpush1.msra.mxu0 %v1856
    %1904 = vmatprep.subr.mxu0 0.0
    %1905 = vmatpush2.msra.mxu0 0.0
    %1906 = vmatprep.subr.mxu0 0.0
    %1907 = vmatpush2.msra.mxu0 0.0
    %1908 = vmatprep.subr.mxu0 0.0
    %1909 = vmatpush2.msra.mxu0 0.0
    %1910 = vmatprep.subr.mxu0 0.0
    %1911 = vmatpush2.msra.mxu0 0.0
    %1912 = vmatprep.subr.mxu0 0.0
    %1913 = vmatpush2.msra.mxu0 0.0
    %1914 = vmatprep.subr.mxu0 0.0
    %1915 = vmatpush2.msra.mxu0 0.0
    %1916 = vmatprep.subr.mxu0 0.0
    %1917 = vmatpush2.msra.mxu0 0.0
    %1918 = vmatprep.subr.mxu0 0.0
    %1919 = vmatpush2.msra.mxu0 0.0
    %1920 = vmatprep.subr.mxu0 0.0
    %1921 = vmatpush2.msra.mxu0 0.0
    %1922 = vmatprep.subr.mxu0 0.0
    %1923 = vmatpush2.msra.mxu0 0.0
    %1924 = vmatprep.subr.mxu0 0.0
    %1925 = vmatpush2.msra.mxu0 0.0
    %1926 = vmatprep.subr.mxu0 0.0
    %1927 = vmatpush2.msra.mxu0 0.0
    %1928 = vmatprep.subr.mxu0 0.0
    %1929 = vmatpush2.msra.mxu0 0.0
    %1930 = vmatprep.subr.mxu0 0.0
    %1931 = vmatpush2.msra.mxu0 0.0
    %1932 = vmatprep.subr.mxu0 0.0
    %1933 = vmatpush2.msra.mxu0 0.0
    %1934 = vmatprep.subr.mxu0 0.0
    %1935 = vmatpush2.msra.mxu0 0.0
    %1936 = vmatprep.mubr.f32.mxu0 0.0
    %1937 = vmatmul.mubr.f32.gmra.mxu0 %v1812
    %v1938 = vpop.f32.mrf.mxu0
    %v1939 = vadd.f32 0.0, %v1938
    %v1940 = vpop.f32.mrf.mxu0
    %1941 = vdwg.mxu0
    %v1943 = vlaneseq
    %v1944 = vshrl.u32 %v1943, 7
    %v1945 = vsub.s32 0, %v1944
    %v1946 = vrot.slane %v1855, %v1945
    %v1948 = vadd.f32 %v1946, %v1939
    %s1949 = scalar_lea.vmem %s7, 128
    %v1950 = vld [vmem:[%s1949] sm:$0xff]
    %v1951 = vld [vmem:[%s1949 + $0x8] sm:$0xff]
    %v1952 = vld [vmem:[%s1949 + $0x10] sm:$0xff]
    %v1953 = vld [vmem:[%s1949 + $0x18] sm:$0xff]
    %v1954 = vld [vmem:[%s1949 + $0x20] sm:$0xff]
    %v1955 = vld [vmem:[%s1949 + $0x28] sm:$0xff]
    %v1956 = vld [vmem:[%s1949 + $0x30] sm:$0xff]
    %v1957 = vld [vmem:[%s1949 + $0x38] sm:$0xff]
    %v1958 = vld [vmem:[%s1949 + $0x40] sm:$0xff]
    %v1959 = vld [vmem:[%s1949 + $0x48] sm:$0xff]
    %v1960 = vld [vmem:[%s1949 + $0x50] sm:$0xff]
    %v1961 = vld [vmem:[%s1949 + $0x58] sm:$0xff]
    %v1962 = vld [vmem:[%s1949 + $0x60] sm:$0xff]
    %v1963 = vld [vmem:[%s1949 + $0x68] sm:$0xff]
    %v1964 = vld [vmem:[%s1949 + $0x70] sm:$0xff]
    %v1965 = vld [vmem:[%s1949 + $0x78] sm:$0xff]
    %1966 = vmatprep.subr.mxu0 0.0
    %1967 = vmatpush1.msra.mxu0 %v1965
    %1968 = vmatprep.subr.mxu0 0.0
    %1969 = vmatpush1.msra.mxu0 %v1964
    %1970 = vmatprep.subr.mxu0 0.0
    %1971 = vmatpush1.msra.mxu0 %v1963
    %1972 = vmatprep.subr.mxu0 0.0
    %1973 = vmatpush1.msra.mxu0 %v1962
    %1974 = vmatprep.subr.mxu0 0.0
    %1975 = vmatpush1.msra.mxu0 %v1961
    %1976 = vmatprep.subr.mxu0 0.0
    %1977 = vmatpush1.msra.mxu0 %v1960
    %1978 = vmatprep.subr.mxu0 0.0
    %1979 = vmatpush1.msra.mxu0 %v1959
    %1980 = vmatprep.subr.mxu0 0.0
    %1981 = vmatpush1.msra.mxu0 %v1958
    %1982 = vmatprep.subr.mxu0 0.0
    %1983 = vmatpush1.msra.mxu0 %v1957
    %1984 = vmatprep.subr.mxu0 0.0
    %1985 = vmatpush1.msra.mxu0 %v1956
    %1986 = vmatprep.subr.mxu0 0.0
    %1987 = vmatpush1.msra.mxu0 %v1955
    %1988 = vmatprep.subr.mxu0 0.0
    %1989 = vmatpush1.msra.mxu0 %v1954
    %1990 = vmatprep.subr.mxu0 0.0
    %1991 = vmatpush1.msra.mxu0 %v1953
    %1992 = vmatprep.subr.mxu0 0.0
    %1993 = vmatpush1.msra.mxu0 %v1952
    %1994 = vmatprep.subr.mxu0 0.0
    %1995 = vmatpush1.msra.mxu0 %v1951
    %1996 = vmatprep.subr.mxu0 0.0
    %1997 = vmatpush1.msra.mxu0 %v1950
    %1998 = vmatprep.subr.mxu0 0.0
    %1999 = vmatpush2.msra.mxu0 0.0
    %2000 = vmatprep.subr.mxu0 0.0
    %2001 = vmatpush2.msra.mxu0 0.0
    %2002 = vmatprep.subr.mxu0 0.0
    %2003 = vmatpush2.msra.mxu0 0.0
    %2004 = vmatprep.subr.mxu0 0.0
    %2005 = vmatpush2.msra.mxu0 0.0
    %2006 = vmatprep.subr.mxu0 0.0
    %2007 = vmatpush2.msra.mxu0 0.0
    %2008 = vmatprep.subr.mxu0 0.0
    %2009 = vmatpush2.msra.mxu0 0.0
    %2010 = vmatprep.subr.mxu0 0.0
    %2011 = vmatpush2.msra.mxu0 0.0
    %2012 = vmatprep.subr.mxu0 0.0
    %2013 = vmatpush2.msra.mxu0 0.0
    %2014 = vmatprep.subr.mxu0 0.0
    %2015 = vmatpush2.msra.mxu0 0.0
    %2016 = vmatprep.subr.mxu0 0.0
    %2017 = vmatpush2.msra.mxu0 0.0
    %2018 = vmatprep.subr.mxu0 0.0
    %2019 = vmatpush2.msra.mxu0 0.0
    %2020 = vmatprep.subr.mxu0 0.0
    %2021 = vmatpush2.msra.mxu0 0.0
    %2022 = vmatprep.subr.mxu0 0.0
    %2023 = vmatpush2.msra.mxu0 0.0
    %2024 = vmatprep.subr.mxu0 0.0
    %2025 = vmatpush2.msra.mxu0 0.0
    %2026 = vmatprep.subr.mxu0 0.0
    %2027 = vmatpush2.msra.mxu0 0.0
    %2028 = vmatprep.subr.mxu0 0.0
    %2029 = vmatpush2.msra.mxu0 0.0
    %2030 = vmatprep.mubr.f32.mxu0 0.0
    %2031 = vmatmul.mubr.f32.gmra.mxu0 %v1817
    %v2032 = vpop.f32.mrf.mxu0
    %v2033 = vadd.f32 0.0, %v2032
    %v2034 = vpop.f32.mrf.mxu0
    %2035 = vdwg.mxu0
    %v2036 = vadd.f32 %v1948, %v2033
    %s2037 = scalar_lea.vmem %s7, 256
    %v2038 = vld [vmem:[%s2037] sm:$0xff]
    %v2039 = vld [vmem:[%s2037 + $0x8] sm:$0xff]
    %v2040 = vld [vmem:[%s2037 + $0x10] sm:$0xff]
    %v2041 = vld [vmem:[%s2037 + $0x18] sm:$0xff]
    %v2042 = vld [vmem:[%s2037 + $0x20] sm:$0xff]
    %v2043 = vld [vmem:[%s2037 + $0x28] sm:$0xff]
    %v2044 = vld [vmem:[%s2037 + $0x30] sm:$0xff]
    %v2045 = vld [vmem:[%s2037 + $0x38] sm:$0xff]
    %v2046 = vld [vmem:[%s2037 + $0x40] sm:$0xff]
    %v2047 = vld [vmem:[%s2037 + $0x48] sm:$0xff]
    %v2048 = vld [vmem:[%s2037 + $0x50] sm:$0xff]
    %v2049 = vld [vmem:[%s2037 + $0x58] sm:$0xff]
    %v2050 = vld [vmem:[%s2037 + $0x60] sm:$0xff]
    %v2051 = vld [vmem:[%s2037 + $0x68] sm:$0xff]
    %v2052 = vld [vmem:[%s2037 + $0x70] sm:$0xff]
    %v2053 = vld [vmem:[%s2037 + $0x78] sm:$0xff]
    %2054 = vmatprep.subr.mxu0 0.0
    %2055 = vmatpush1.msra.mxu0 %v2053
    %2056 = vmatprep.subr.mxu0 0.0
    %2057 = vmatpush1.msra.mxu0 %v2052
    %2058 = vmatprep.subr.mxu0 0.0
    %2059 = vmatpush1.msra.mxu0 %v2051
    %2060 = vmatprep.subr.mxu0 0.0
    %2061 = vmatpush1.msra.mxu0 %v2050
    %2062 = vmatprep.subr.mxu0 0.0
    %2063 = vmatpush1.msra.mxu0 %v2049
    %2064 = vmatprep.subr.mxu0 0.0
    %2065 = vmatpush1.msra.mxu0 %v2048
    %2066 = vmatprep.subr.mxu0 0.0
    %2067 = vmatpush1.msra.mxu0 %v2047
    %2068 = vmatprep.subr.mxu0 0.0
    %2069 = vmatpush1.msra.mxu0 %v2046
    %2070 = vmatprep.subr.mxu0 0.0
    %2071 = vmatpush1.msra.mxu0 %v2045
    %2072 = vmatprep.subr.mxu0 0.0
    %2073 = vmatpush1.msra.mxu0 %v2044
    %2074 = vmatprep.subr.mxu0 0.0
    %2075 = vmatpush1.msra.mxu0 %v2043
    %2076 = vmatprep.subr.mxu0 0.0
    %2077 = vmatpush1.msra.mxu0 %v2042
    %2078 = vmatprep.subr.mxu0 0.0
    %2079 = vmatpush1.msra.mxu0 %v2041
    %2080 = vmatprep.subr.mxu0 0.0
    %2081 = vmatpush1.msra.mxu0 %v2040
    %2082 = vmatprep.subr.mxu0 0.0
    %2083 = vmatpush1.msra.mxu0 %v2039
    %2084 = vmatprep.subr.mxu0 0.0
    %2085 = vmatpush1.msra.mxu0 %v2038
    %2086 = vmatprep.subr.mxu0 0.0
    %2087 = vmatpush2.msra.mxu0 0.0
    %2088 = vmatprep.subr.mxu0 0.0
    %2089 = vmatpush2.msra.mxu0 0.0
    %2090 = vmatprep.subr.mxu0 0.0
    %2091 = vmatpush2.msra.mxu0 0.0
    %2092 = vmatprep.subr.mxu0 0.0
    %2093 = vmatpush2.msra.mxu0 0.0
    %2094 = vmatprep.subr.mxu0 0.0
    %2095 = vmatpush2.msra.mxu0 0.0
    %2096 = vmatprep.subr.mxu0 0.0
    %2097 = vmatpush2.msra.mxu0 0.0
    %2098 = vmatprep.subr.mxu0 0.0
    %2099 = vmatpush2.msra.mxu0 0.0
    %2100 = vmatprep.subr.mxu0 0.0
    %2101 = vmatpush2.msra.mxu0 0.0
    %2102 = vmatprep.subr.mxu0 0.0
    %2103 = vmatpush2.msra.mxu0 0.0
    %2104 = vmatprep.subr.mxu0 0.0
    %2105 = vmatpush2.msra.mxu0 0.0
    %2106 = vmatprep.subr.mxu0 0.0
    %2107 = vmatpush2.msra.mxu0 0.0
    %2108 = vmatprep.subr.mxu0 0.0
    %2109 = vmatpush2.msra.mxu0 0.0
    %2110 = vmatprep.subr.mxu0 0.0
    %2111 = vmatpush2.msra.mxu0 0.0
    %2112 = vmatprep.subr.mxu0 0.0
    %2113 = vmatpush2.msra.mxu0 0.0
    %2114 = vmatprep.subr.mxu0 0.0
    %2115 = vmatpush2.msra.mxu0 0.0
    %2116 = vmatprep.subr.mxu0 0.0
    %2117 = vmatpush2.msra.mxu0 0.0
    %2118 = vmatprep.mubr.f32.mxu0 0.0
    %2119 = vmatmul.mubr.f32.gmra.mxu0 %v1822
    %v2120 = vpop.f32.mrf.mxu0
    %v2121 = vadd.f32 0.0, %v2120
    %v2122 = vpop.f32.mrf.mxu0
    %2123 = vdwg.mxu0
    %v2124 = vadd.f32 %v2036, %v2121
    %s2125 = scalar_lea.vmem %s7, 384
    %v2126 = vld [vmem:[%s2125] sm:$0xff]
    %v2127 = vld [vmem:[%s2125 + $0x8] sm:$0xff]
    %v2128 = vld [vmem:[%s2125 + $0x10] sm:$0xff]
    %v2129 = vld [vmem:[%s2125 + $0x18] sm:$0xff]
    %v2130 = vld [vmem:[%s2125 + $0x20] sm:$0xff]
    %v2131 = vld [vmem:[%s2125 + $0x28] sm:$0xff]
    %v2132 = vld [vmem:[%s2125 + $0x30] sm:$0xff]
    %v2133 = vld [vmem:[%s2125 + $0x38] sm:$0xff]
    %v2134 = vld [vmem:[%s2125 + $0x40] sm:$0xff]
    %v2135 = vld [vmem:[%s2125 + $0x48] sm:$0xff]
    %v2136 = vld [vmem:[%s2125 + $0x50] sm:$0xff]
    %v2137 = vld [vmem:[%s2125 + $0x58] sm:$0xff]
    %v2138 = vld [vmem:[%s2125 + $0x60] sm:$0xff]
    %v2139 = vld [vmem:[%s2125 + $0x68] sm:$0xff]
    %v2140 = vld [vmem:[%s2125 + $0x70] sm:$0xff]
    %v2141 = vld [vmem:[%s2125 + $0x78] sm:$0xff]
    %2142 = vmatprep.subr.mxu0 0.0
    %2143 = vmatpush1.msra.mxu0 %v2141
    %2144 = vmatprep.subr.mxu0 0.0
    %2145 = vmatpush1.msra.mxu0 %v2140
    %2146 = vmatprep.subr.mxu0 0.0
    %2147 = vmatpush1.msra.mxu0 %v2139
    %2148 = vmatprep.subr.mxu0 0.0
    %2149 = vmatpush1.msra.mxu0 %v2138
    %2150 = vmatprep.subr.mxu0 0.0
    %2151 = vmatpush1.msra.mxu0 %v2137
    %2152 = vmatprep.subr.mxu0 0.0
    %2153 = vmatpush1.msra.mxu0 %v2136
    %2154 = vmatprep.subr.mxu0 0.0
    %2155 = vmatpush1.msra.mxu0 %v2135
    %2156 = vmatprep.subr.mxu0 0.0
    %2157 = vmatpush1.msra.mxu0 %v2134
    %2158 = vmatprep.subr.mxu0 0.0
    %2159 = vmatpush1.msra.mxu0 %v2133
    %2160 = vmatprep.subr.mxu0 0.0
    %2161 = vmatpush1.msra.mxu0 %v2132
    %2162 = vmatprep.subr.mxu0 0.0
    %2163 = vmatpush1.msra.mxu0 %v2131
    %2164 = vmatprep.subr.mxu0 0.0
    %2165 = vmatpush1.msra.mxu0 %v2130
    %2166 = vmatprep.subr.mxu0 0.0
    %2167 = vmatpush1.msra.mxu0 %v2129
    %2168 = vmatprep.subr.mxu0 0.0
    %2169 = vmatpush1.msra.mxu0 %v2128
    %2170 = vmatprep.subr.mxu0 0.0
    %2171 = vmatpush1.msra.mxu0 %v2127
    %2172 = vmatprep.subr.mxu0 0.0
    %2173 = vmatpush1.msra.mxu0 %v2126
    %2174 = vmatprep.subr.mxu0 0.0
    %2175 = vmatpush2.msra.mxu0 0.0
    %2176 = vmatprep.subr.mxu0 0.0
    %2177 = vmatpush2.msra.mxu0 0.0
    %2178 = vmatprep.subr.mxu0 0.0
    %2179 = vmatpush2.msra.mxu0 0.0
    %2180 = vmatprep.subr.mxu0 0.0
    %2181 = vmatpush2.msra.mxu0 0.0
    %2182 = vmatprep.subr.mxu0 0.0
    %2183 = vmatpush2.msra.mxu0 0.0
    %2184 = vmatprep.subr.mxu0 0.0
    %2185 = vmatpush2.msra.mxu0 0.0
    %2186 = vmatprep.subr.mxu0 0.0
    %2187 = vmatpush2.msra.mxu0 0.0
    %2188 = vmatprep.subr.mxu0 0.0
    %2189 = vmatpush2.msra.mxu0 0.0
    %2190 = vmatprep.subr.mxu0 0.0
    %2191 = vmatpush2.msra.mxu0 0.0
    %2192 = vmatprep.subr.mxu0 0.0
    %2193 = vmatpush2.msra.mxu0 0.0
    %2194 = vmatprep.subr.mxu0 0.0
    %2195 = vmatpush2.msra.mxu0 0.0
    %2196 = vmatprep.subr.mxu0 0.0
    %2197 = vmatpush2.msra.mxu0 0.0
    %2198 = vmatprep.subr.mxu0 0.0
    %2199 = vmatpush2.msra.mxu0 0.0
    %2200 = vmatprep.subr.mxu0 0.0
    %2201 = vmatpush2.msra.mxu0 0.0
    %2202 = vmatprep.subr.mxu0 0.0
    %2203 = vmatpush2.msra.mxu0 0.0
    %2204 = vmatprep.subr.mxu0 0.0
    %2205 = vmatpush2.msra.mxu0 0.0
    %2206 = vmatprep.mubr.f32.mxu0 0.0
    %2207 = vmatmul.mubr.f32.gmra.mxu0 %v1827
    %v2208 = vpop.f32.mrf.mxu0
    %v2209 = vadd.f32 0.0, %v2208
    %v2210 = vpop.f32.mrf.mxu0
    %2211 = vdwg.mxu0
    %v2212 = vadd.f32 %v2124, %v2209
    %s2213 = scalar_lea.vmem %s7, 512
    %v2214 = vld [vmem:[%s2213] sm:$0xff]
    %v2215 = vld [vmem:[%s2213 + $0x8] sm:$0xff]
    %v2216 = vld [vmem:[%s2213 + $0x10] sm:$0xff]
    %v2217 = vld [vmem:[%s2213 + $0x18] sm:$0xff]
    %v2218 = vld [vmem:[%s2213 + $0x20] sm:$0xff]
    %v2219 = vld [vmem:[%s2213 + $0x28] sm:$0xff]
    %v2220 = vld [vmem:[%s2213 + $0x30] sm:$0xff]
    %v2221 = vld [vmem:[%s2213 + $0x38] sm:$0xff]
    %v2222 = vld [vmem:[%s2213 + $0x40] sm:$0xff]
    %v2223 = vld [vmem:[%s2213 + $0x48] sm:$0xff]
    %v2224 = vld [vmem:[%s2213 + $0x50] sm:$0xff]
    %v2225 = vld [vmem:[%s2213 + $0x58] sm:$0xff]
    %v2226 = vld [vmem:[%s2213 + $0x60] sm:$0xff]
    %v2227 = vld [vmem:[%s2213 + $0x68] sm:$0xff]
    %v2228 = vld [vmem:[%s2213 + $0x70] sm:$0xff]
    %v2229 = vld [vmem:[%s2213 + $0x78] sm:$0xff]
    %2230 = vmatprep.subr.mxu0 0.0
    %2231 = vmatpush1.msra.mxu0 %v2229
    %2232 = vmatprep.subr.mxu0 0.0
    %2233 = vmatpush1.msra.mxu0 %v2228
    %2234 = vmatprep.subr.mxu0 0.0
    %2235 = vmatpush1.msra.mxu0 %v2227
    %2236 = vmatprep.subr.mxu0 0.0
    %2237 = vmatpush1.msra.mxu0 %v2226
    %2238 = vmatprep.subr.mxu0 0.0
    %2239 = vmatpush1.msra.mxu0 %v2225
    %2240 = vmatprep.subr.mxu0 0.0
    %2241 = vmatpush1.msra.mxu0 %v2224
    %2242 = vmatprep.subr.mxu0 0.0
    %2243 = vmatpush1.msra.mxu0 %v2223
    %2244 = vmatprep.subr.mxu0 0.0
    %2245 = vmatpush1.msra.mxu0 %v2222
    %2246 = vmatprep.subr.mxu0 0.0
    %2247 = vmatpush1.msra.mxu0 %v2221
    %2248 = vmatprep.subr.mxu0 0.0
    %2249 = vmatpush1.msra.mxu0 %v2220
    %2250 = vmatprep.subr.mxu0 0.0
    %2251 = vmatpush1.msra.mxu0 %v2219
    %2252 = vmatprep.subr.mxu0 0.0
    %2253 = vmatpush1.msra.mxu0 %v2218
    %2254 = vmatprep.subr.mxu0 0.0
    %2255 = vmatpush1.msra.mxu0 %v2217
    %2256 = vmatprep.subr.mxu0 0.0
    %2257 = vmatpush1.msra.mxu0 %v2216
    %2258 = vmatprep.subr.mxu0 0.0
    %2259 = vmatpush1.msra.mxu0 %v2215
    %2260 = vmatprep.subr.mxu0 0.0
    %2261 = vmatpush1.msra.mxu0 %v2214
    %2262 = vmatprep.subr.mxu0 0.0
    %2263 = vmatpush2.msra.mxu0 0.0
    %2264 = vmatprep.subr.mxu0 0.0
    %2265 = vmatpush2.msra.mxu0 0.0
    %2266 = vmatprep.subr.mxu0 0.0
    %2267 = vmatpush2.msra.mxu0 0.0
    %2268 = vmatprep.subr.mxu0 0.0
    %2269 = vmatpush2.msra.mxu0 0.0
    %2270 = vmatprep.subr.mxu0 0.0
    %2271 = vmatpush2.msra.mxu0 0.0
    %2272 = vmatprep.subr.mxu0 0.0
    %2273 = vmatpush2.msra.mxu0 0.0
    %2274 = vmatprep.subr.mxu0 0.0
    %2275 = vmatpush2.msra.mxu0 0.0
    %2276 = vmatprep.subr.mxu0 0.0
    %2277 = vmatpush2.msra.mxu0 0.0
    %2278 = vmatprep.subr.mxu0 0.0
    %2279 = vmatpush2.msra.mxu0 0.0
    %2280 = vmatprep.subr.mxu0 0.0
    %2281 = vmatpush2.msra.mxu0 0.0
    %2282 = vmatprep.subr.mxu0 0.0
    %2283 = vmatpush2.msra.mxu0 0.0
    %2284 = vmatprep.subr.mxu0 0.0
    %2285 = vmatpush2.msra.mxu0 0.0
    %2286 = vmatprep.subr.mxu0 0.0
    %2287 = vmatpush2.msra.mxu0 0.0
    %2288 = vmatprep.subr.mxu0 0.0
    %2289 = vmatpush2.msra.mxu0 0.0
    %2290 = vmatprep.subr.mxu0 0.0
    %2291 = vmatpush2.msra.mxu0 0.0
    %2292 = vmatprep.subr.mxu0 0.0
    %2293 = vmatpush2.msra.mxu0 0.0
    %2294 = vmatprep.mubr.f32.mxu0 0.0
    %2295 = vmatmul.mubr.f32.gmra.mxu0 %v1832
    %v2296 = vpop.f32.mrf.mxu0
    %v2297 = vadd.f32 0.0, %v2296
    %v2298 = vpop.f32.mrf.mxu0
    %2299 = vdwg.mxu0
    %v2300 = vadd.f32 %v2212, %v2297
    %s2301 = scalar_lea.vmem %s7, 640
    %v2302 = vld [vmem:[%s2301] sm:$0xff]
    %v2303 = vld [vmem:[%s2301 + $0x8] sm:$0xff]
    %v2304 = vld [vmem:[%s2301 + $0x10] sm:$0xff]
    %v2305 = vld [vmem:[%s2301 + $0x18] sm:$0xff]
    %v2306 = vld [vmem:[%s2301 + $0x20] sm:$0xff]
    %v2307 = vld [vmem:[%s2301 + $0x28] sm:$0xff]
    %v2308 = vld [vmem:[%s2301 + $0x30] sm:$0xff]
    %v2309 = vld [vmem:[%s2301 + $0x38] sm:$0xff]
    %v2310 = vld [vmem:[%s2301 + $0x40] sm:$0xff]
    %v2311 = vld [vmem:[%s2301 + $0x48] sm:$0xff]
    %v2312 = vld [vmem:[%s2301 + $0x50] sm:$0xff]
    %v2313 = vld [vmem:[%s2301 + $0x58] sm:$0xff]
    %v2314 = vld [vmem:[%s2301 + $0x60] sm:$0xff]
    %v2315 = vld [vmem:[%s2301 + $0x68] sm:$0xff]
    %v2316 = vld [vmem:[%s2301 + $0x70] sm:$0xff]
    %v2317 = vld [vmem:[%s2301 + $0x78] sm:$0xff]
    %2318 = vmatprep.subr.mxu0 0.0
    %2319 = vmatpush1.msra.mxu0 %v2317
    %2320 = vmatprep.subr.mxu0 0.0
    %2321 = vmatpush1.msra.mxu0 %v2316
    %2322 = vmatprep.subr.mxu0 0.0
    %2323 = vmatpush1.msra.mxu0 %v2315
    %2324 = vmatprep.subr.mxu0 0.0
    %2325 = vmatpush1.msra.mxu0 %v2314
    %2326 = vmatprep.subr.mxu0 0.0
    %2327 = vmatpush1.msra.mxu0 %v2313
    %2328 = vmatprep.subr.mxu0 0.0
    %2329 = vmatpush1.msra.mxu0 %v2312
    %2330 = vmatprep.subr.mxu0 0.0
    %2331 = vmatpush1.msra.mxu0 %v2311
    %2332 = vmatprep.subr.mxu0 0.0
    %2333 = vmatpush1.msra.mxu0 %v2310
    %2334 = vmatprep.subr.mxu0 0.0
    %2335 = vmatpush1.msra.mxu0 %v2309
    %2336 = vmatprep.subr.mxu0 0.0
    %2337 = vmatpush1.msra.mxu0 %v2308
    %2338 = vmatprep.subr.mxu0 0.0
    %2339 = vmatpush1.msra.mxu0 %v2307
    %2340 = vmatprep.subr.mxu0 0.0
    %2341 = vmatpush1.msra.mxu0 %v2306
    %2342 = vmatprep.subr.mxu0 0.0
    %2343 = vmatpush1.msra.mxu0 %v2305
    %2344 = vmatprep.subr.mxu0 0.0
    %2345 = vmatpush1.msra.mxu0 %v2304
    %2346 = vmatprep.subr.mxu0 0.0
    %2347 = vmatpush1.msra.mxu0 %v2303
    %2348 = vmatprep.subr.mxu0 0.0
    %2349 = vmatpush1.msra.mxu0 %v2302
    %2350 = vmatprep.subr.mxu0 0.0
    %2351 = vmatpush2.msra.mxu0 0.0
    %2352 = vmatprep.subr.mxu0 0.0
    %2353 = vmatpush2.msra.mxu0 0.0
    %2354 = vmatprep.subr.mxu0 0.0
    %2355 = vmatpush2.msra.mxu0 0.0
    %2356 = vmatprep.subr.mxu0 0.0
    %2357 = vmatpush2.msra.mxu0 0.0
    %2358 = vmatprep.subr.mxu0 0.0
    %2359 = vmatpush2.msra.mxu0 0.0
    %2360 = vmatprep.subr.mxu0 0.0
    %2361 = vmatpush2.msra.mxu0 0.0
    %2362 = vmatprep.subr.mxu0 0.0
    %2363 = vmatpush2.msra.mxu0 0.0
    %2364 = vmatprep.subr.mxu0 0.0
    %2365 = vmatpush2.msra.mxu0 0.0
    %2366 = vmatprep.subr.mxu0 0.0
    %2367 = vmatpush2.msra.mxu0 0.0
    %2368 = vmatprep.subr.mxu0 0.0
    %2369 = vmatpush2.msra.mxu0 0.0
    %2370 = vmatprep.subr.mxu0 0.0
    %2371 = vmatpush2.msra.mxu0 0.0
    %2372 = vmatprep.subr.mxu0 0.0
    %2373 = vmatpush2.msra.mxu0 0.0
    %2374 = vmatprep.subr.mxu0 0.0
    %2375 = vmatpush2.msra.mxu0 0.0
    %2376 = vmatprep.subr.mxu0 0.0
    %2377 = vmatpush2.msra.mxu0 0.0
    %2378 = vmatprep.subr.mxu0 0.0
    %2379 = vmatpush2.msra.mxu0 0.0
    %2380 = vmatprep.subr.mxu0 0.0
    %2381 = vmatpush2.msra.mxu0 0.0
    %2382 = vmatprep.mubr.f32.mxu0 0.0
    %2383 = vmatmul.mubr.f32.gmra.mxu0 %v1837
    %v2384 = vpop.f32.mrf.mxu0
    %v2385 = vadd.f32 0.0, %v2384
    %v2386 = vpop.f32.mrf.mxu0
    %2387 = vdwg.mxu0
    %v2388 = vadd.f32 %v2300, %v2385
    %s2389 = scalar_lea.vmem %s7, 768
    %v2390 = vld [vmem:[%s2389] sm:$0xff]
    %v2391 = vld [vmem:[%s2389 + $0x8] sm:$0xff]
    %v2392 = vld [vmem:[%s2389 + $0x10] sm:$0xff]
    %v2393 = vld [vmem:[%s2389 + $0x18] sm:$0xff]
    %v2394 = vld [vmem:[%s2389 + $0x20] sm:$0xff]
    %v2395 = vld [vmem:[%s2389 + $0x28] sm:$0xff]
    %v2396 = vld [vmem:[%s2389 + $0x30] sm:$0xff]
    %v2397 = vld [vmem:[%s2389 + $0x38] sm:$0xff]
    %v2398 = vld [vmem:[%s2389 + $0x40] sm:$0xff]
    %v2399 = vld [vmem:[%s2389 + $0x48] sm:$0xff]
    %v2400 = vld [vmem:[%s2389 + $0x50] sm:$0xff]
    %v2401 = vld [vmem:[%s2389 + $0x58] sm:$0xff]
    %v2402 = vld [vmem:[%s2389 + $0x60] sm:$0xff]
    %v2403 = vld [vmem:[%s2389 + $0x68] sm:$0xff]
    %v2404 = vld [vmem:[%s2389 + $0x70] sm:$0xff]
    %v2405 = vld [vmem:[%s2389 + $0x78] sm:$0xff]
    %2406 = vmatprep.subr.mxu0 0.0
    %2407 = vmatpush1.msra.mxu0 %v2405
    %2408 = vmatprep.subr.mxu0 0.0
    %2409 = vmatpush1.msra.mxu0 %v2404
    %2410 = vmatprep.subr.mxu0 0.0
    %2411 = vmatpush1.msra.mxu0 %v2403
    %2412 = vmatprep.subr.mxu0 0.0
    %2413 = vmatpush1.msra.mxu0 %v2402
    %2414 = vmatprep.subr.mxu0 0.0
    %2415 = vmatpush1.msra.mxu0 %v2401
    %2416 = vmatprep.subr.mxu0 0.0
    %2417 = vmatpush1.msra.mxu0 %v2400
    %2418 = vmatprep.subr.mxu0 0.0
    %2419 = vmatpush1.msra.mxu0 %v2399
    %2420 = vmatprep.subr.mxu0 0.0
    %2421 = vmatpush1.msra.mxu0 %v2398
    %2422 = vmatprep.subr.mxu0 0.0
    %2423 = vmatpush1.msra.mxu0 %v2397
    %2424 = vmatprep.subr.mxu0 0.0
    %2425 = vmatpush1.msra.mxu0 %v2396
    %2426 = vmatprep.subr.mxu0 0.0
    %2427 = vmatpush1.msra.mxu0 %v2395
    %2428 = vmatprep.subr.mxu0 0.0
    %2429 = vmatpush1.msra.mxu0 %v2394
    %2430 = vmatprep.subr.mxu0 0.0
    %2431 = vmatpush1.msra.mxu0 %v2393
    %2432 = vmatprep.subr.mxu0 0.0
    %2433 = vmatpush1.msra.mxu0 %v2392
    %2434 = vmatprep.subr.mxu0 0.0
    %2435 = vmatpush1.msra.mxu0 %v2391
    %2436 = vmatprep.subr.mxu0 0.0
    %2437 = vmatpush1.msra.mxu0 %v2390
    %2438 = vmatprep.subr.mxu0 0.0
    %2439 = vmatpush2.msra.mxu0 0.0
    %2440 = vmatprep.subr.mxu0 0.0
    %2441 = vmatpush2.msra.mxu0 0.0
    %2442 = vmatprep.subr.mxu0 0.0
    %2443 = vmatpush2.msra.mxu0 0.0
    %2444 = vmatprep.subr.mxu0 0.0
    %2445 = vmatpush2.msra.mxu0 0.0
    %2446 = vmatprep.subr.mxu0 0.0
    %2447 = vmatpush2.msra.mxu0 0.0
    %2448 = vmatprep.subr.mxu0 0.0
    %2449 = vmatpush2.msra.mxu0 0.0
    %2450 = vmatprep.subr.mxu0 0.0
    %2451 = vmatpush2.msra.mxu0 0.0
    %2452 = vmatprep.subr.mxu0 0.0
    %2453 = vmatpush2.msra.mxu0 0.0
    %2454 = vmatprep.subr.mxu0 0.0
    %2455 = vmatpush2.msra.mxu0 0.0
    %2456 = vmatprep.subr.mxu0 0.0
    %2457 = vmatpush2.msra.mxu0 0.0
    %2458 = vmatprep.subr.mxu0 0.0
    %2459 = vmatpush2.msra.mxu0 0.0
    %2460 = vmatprep.subr.mxu0 0.0
    %2461 = vmatpush2.msra.mxu0 0.0
    %2462 = vmatprep.subr.mxu0 0.0
    %2463 = vmatpush2.msra.mxu0 0.0
    %2464 = vmatprep.subr.mxu0 0.0
    %2465 = vmatpush2.msra.mxu0 0.0
    %2466 = vmatprep.subr.mxu0 0.0
    %2467 = vmatpush2.msra.mxu0 0.0
    %2468 = vmatprep.subr.mxu0 0.0
    %2469 = vmatpush2.msra.mxu0 0.0
    %2470 = vmatprep.mubr.f32.mxu0 0.0
    %2471 = vmatmul.mubr.f32.gmra.mxu0 %v1842
    %v2472 = vpop.f32.mrf.mxu0
    %v2473 = vadd.f32 0.0, %v2472
    %v2474 = vpop.f32.mrf.mxu0
    %2475 = vdwg.mxu0
    %v2476 = vadd.f32 %v2388, %v2473
    %s2477 = scalar_lea.vmem %s7, 896
    %v2478 = vld [vmem:[%s2477] sm:$0xff]
    %v2479 = vld [vmem:[%s2477 + $0x8] sm:$0xff]
    %v2480 = vld [vmem:[%s2477 + $0x10] sm:$0xff]
    %v2481 = vld [vmem:[%s2477 + $0x18] sm:$0xff]
    %v2482 = vld [vmem:[%s2477 + $0x20] sm:$0xff]
    %v2483 = vld [vmem:[%s2477 + $0x28] sm:$0xff]
    %v2484 = vld [vmem:[%s2477 + $0x30] sm:$0xff]
    %v2485 = vld [vmem:[%s2477 + $0x38] sm:$0xff]
    %v2486 = vld [vmem:[%s2477 + $0x40] sm:$0xff]
    %v2487 = vld [vmem:[%s2477 + $0x48] sm:$0xff]
    %v2488 = vld [vmem:[%s2477 + $0x50] sm:$0xff]
    %v2489 = vld [vmem:[%s2477 + $0x58] sm:$0xff]
    %v2490 = vld [vmem:[%s2477 + $0x60] sm:$0xff]
    %v2491 = vld [vmem:[%s2477 + $0x68] sm:$0xff]
    %v2492 = vld [vmem:[%s2477 + $0x70] sm:$0xff]
    %v2493 = vld [vmem:[%s2477 + $0x78] sm:$0xff]
    %2494 = vmatprep.subr.mxu0 0.0
    %2495 = vmatpush1.msra.mxu0 %v2493
    %2496 = vmatprep.subr.mxu0 0.0
    %2497 = vmatpush1.msra.mxu0 %v2492
    %2498 = vmatprep.subr.mxu0 0.0
    %2499 = vmatpush1.msra.mxu0 %v2491
    %2500 = vmatprep.subr.mxu0 0.0
    %2501 = vmatpush1.msra.mxu0 %v2490
    %2502 = vmatprep.subr.mxu0 0.0
    %2503 = vmatpush1.msra.mxu0 %v2489
    %2504 = vmatprep.subr.mxu0 0.0
    %2505 = vmatpush1.msra.mxu0 %v2488
    %2506 = vmatprep.subr.mxu0 0.0
    %2507 = vmatpush1.msra.mxu0 %v2487
    %2508 = vmatprep.subr.mxu0 0.0
    %2509 = vmatpush1.msra.mxu0 %v2486
    %2510 = vmatprep.subr.mxu0 0.0
    %2511 = vmatpush1.msra.mxu0 %v2485
    %2512 = vmatprep.subr.mxu0 0.0
    %2513 = vmatpush1.msra.mxu0 %v2484
    %2514 = vmatprep.subr.mxu0 0.0
    %2515 = vmatpush1.msra.mxu0 %v2483
    %2516 = vmatprep.subr.mxu0 0.0
    %2517 = vmatpush1.msra.mxu0 %v2482
    %2518 = vmatprep.subr.mxu0 0.0
    %2519 = vmatpush1.msra.mxu0 %v2481
    %2520 = vmatprep.subr.mxu0 0.0
    %2521 = vmatpush1.msra.mxu0 %v2480
    %2522 = vmatprep.subr.mxu0 0.0
    %2523 = vmatpush1.msra.mxu0 %v2479
    %2524 = vmatprep.subr.mxu0 0.0
    %2525 = vmatpush1.msra.mxu0 %v2478
    %2526 = vmatprep.subr.mxu0 0.0
    %2527 = vmatpush2.msra.mxu0 0.0
    %2528 = vmatprep.subr.mxu0 0.0
    %2529 = vmatpush2.msra.mxu0 0.0
    %2530 = vmatprep.subr.mxu0 0.0
    %2531 = vmatpush2.msra.mxu0 0.0
    %2532 = vmatprep.subr.mxu0 0.0
    %2533 = vmatpush2.msra.mxu0 0.0
    %2534 = vmatprep.subr.mxu0 0.0
    %2535 = vmatpush2.msra.mxu0 0.0
    %2536 = vmatprep.subr.mxu0 0.0
    %2537 = vmatpush2.msra.mxu0 0.0
    %2538 = vmatprep.subr.mxu0 0.0
    %2539 = vmatpush2.msra.mxu0 0.0
    %2540 = vmatprep.subr.mxu0 0.0
    %2541 = vmatpush2.msra.mxu0 0.0
    %2542 = vmatprep.subr.mxu0 0.0
    %2543 = vmatpush2.msra.mxu0 0.0
    %2544 = vmatprep.subr.mxu0 0.0
    %2545 = vmatpush2.msra.mxu0 0.0
    %2546 = vmatprep.subr.mxu0 0.0
    %2547 = vmatpush2.msra.mxu0 0.0
    %2548 = vmatprep.subr.mxu0 0.0
    %2549 = vmatpush2.msra.mxu0 0.0
    %2550 = vmatprep.subr.mxu0 0.0
    %2551 = vmatpush2.msra.mxu0 0.0
    %2552 = vmatprep.subr.mxu0 0.0
    %2553 = vmatpush2.msra.mxu0 0.0
    %2554 = vmatprep.subr.mxu0 0.0
    %2555 = vmatpush2.msra.mxu0 0.0
    %2556 = vmatprep.subr.mxu0 0.0
    %2557 = vmatpush2.msra.mxu0 0.0
    %2558 = vmatprep.mubr.f32.mxu0 0.0
    %2559 = vmatmul.mubr.f32.gmra.mxu0 %v1847
    %v2560 = vpop.f32.mrf.mxu0
    %v2561 = vadd.f32 0.0, %v2560
    %v2562 = vpop.f32.mrf.mxu0
    %2563 = vdwg.mxu0
    %v2564 = vadd.f32 %v2476, %v2561
    %s2565 = scalar_lea.vmem %s7, 1024
    %v2566 = vld [vmem:[%s2565] sm:$0xff]
    %v2567 = vld [vmem:[%s2565 + $0x8] sm:$0xff]
    %v2568 = vld [vmem:[%s2565 + $0x10] sm:$0xff]
    %v2569 = vld [vmem:[%s2565 + $0x18] sm:$0xff]
    %v2570 = vld [vmem:[%s2565 + $0x20] sm:$0xff]
    %v2571 = vld [vmem:[%s2565 + $0x28] sm:$0xff]
    %v2572 = vld [vmem:[%s2565 + $0x30] sm:$0xff]
    %v2573 = vld [vmem:[%s2565 + $0x38] sm:$0xff]
    %v2574 = vld [vmem:[%s2565 + $0x40] sm:$0xff]
    %v2575 = vld [vmem:[%s2565 + $0x48] sm:$0xff]
    %v2576 = vld [vmem:[%s2565 + $0x50] sm:$0xff]
    %v2577 = vld [vmem:[%s2565 + $0x58] sm:$0xff]
    %v2578 = vld [vmem:[%s2565 + $0x60] sm:$0xff]
    %v2579 = vld [vmem:[%s2565 + $0x68] sm:$0xff]
    %v2580 = vld [vmem:[%s2565 + $0x70] sm:$0xff]
    %v2581 = vld [vmem:[%s2565 + $0x78] sm:$0xff]
    %2582 = vmatprep.subr.mxu0 0.0
    %2583 = vmatpush1.msra.mxu0 %v2581
    %2584 = vmatprep.subr.mxu0 0.0
    %2585 = vmatpush1.msra.mxu0 %v2580
    %2586 = vmatprep.subr.mxu0 0.0
    %2587 = vmatpush1.msra.mxu0 %v2579
    %2588 = vmatprep.subr.mxu0 0.0
    %2589 = vmatpush1.msra.mxu0 %v2578
    %2590 = vmatprep.subr.mxu0 0.0
    %2591 = vmatpush1.msra.mxu0 %v2577
    %2592 = vmatprep.subr.mxu0 0.0
    %2593 = vmatpush1.msra.mxu0 %v2576
    %2594 = vmatprep.subr.mxu0 0.0
    %2595 = vmatpush1.msra.mxu0 %v2575
    %2596 = vmatprep.subr.mxu0 0.0
    %2597 = vmatpush1.msra.mxu0 %v2574
    %2598 = vmatprep.subr.mxu0 0.0
    %2599 = vmatpush1.msra.mxu0 %v2573
    %2600 = vmatprep.subr.mxu0 0.0
    %2601 = vmatpush1.msra.mxu0 %v2572
    %2602 = vmatprep.subr.mxu0 0.0
    %2603 = vmatpush1.msra.mxu0 %v2571
    %2604 = vmatprep.subr.mxu0 0.0
    %2605 = vmatpush1.msra.mxu0 %v2570
    %2606 = vmatprep.subr.mxu0 0.0
    %2607 = vmatpush1.msra.mxu0 %v2569
    %2608 = vmatprep.subr.mxu0 0.0
    %2609 = vmatpush1.msra.mxu0 %v2568
    %2610 = vmatprep.subr.mxu0 0.0
    %2611 = vmatpush1.msra.mxu0 %v2567
    %2612 = vmatprep.subr.mxu0 0.0
    %2613 = vmatpush1.msra.mxu0 %v2566
    %2614 = vmatprep.subr.mxu0 0.0
    %2615 = vmatpush2.msra.mxu0 0.0
    %2616 = vmatprep.subr.mxu0 0.0
    %2617 = vmatpush2.msra.mxu0 0.0
    %2618 = vmatprep.subr.mxu0 0.0
    %2619 = vmatpush2.msra.mxu0 0.0
    %2620 = vmatprep.subr.mxu0 0.0
    %2621 = vmatpush2.msra.mxu0 0.0
    %2622 = vmatprep.subr.mxu0 0.0
    %2623 = vmatpush2.msra.mxu0 0.0
    %2624 = vmatprep.subr.mxu0 0.0
    %2625 = vmatpush2.msra.mxu0 0.0
    %2626 = vmatprep.subr.mxu0 0.0
    %2627 = vmatpush2.msra.mxu0 0.0
    %2628 = vmatprep.subr.mxu0 0.0
    %2629 = vmatpush2.msra.mxu0 0.0
    %2630 = vmatprep.subr.mxu0 0.0
    %2631 = vmatpush2.msra.mxu0 0.0
    %2632 = vmatprep.subr.mxu0 0.0
    %2633 = vmatpush2.msra.mxu0 0.0
    %2634 = vmatprep.subr.mxu0 0.0
    %2635 = vmatpush2.msra.mxu0 0.0
    %2636 = vmatprep.subr.mxu0 0.0
    %2637 = vmatpush2.msra.mxu0 0.0
    %2638 = vmatprep.subr.mxu0 0.0
    %2639 = vmatpush2.msra.mxu0 0.0
    %2640 = vmatprep.subr.mxu0 0.0
    %2641 = vmatpush2.msra.mxu0 0.0
    %2642 = vmatprep.subr.mxu0 0.0
    %2643 = vmatpush2.msra.mxu0 0.0
    %2644 = vmatprep.subr.mxu0 0.0
    %2645 = vmatpush2.msra.mxu0 0.0
    %2646 = vmatprep.mubr.f32.mxu0 0.0
    %2647 = vmatmul.mubr.f32.gmra.mxu0 %v1852
    %v2648 = vpop.f32.mrf.mxu0
    %v2649 = vadd.f32 0.0, %v2648
    %v2650 = vpop.f32.mrf.mxu0
    %2651 = vdwg.mxu0
    %v2652 = vadd.f32 %v2564, %v2649
    %v2653 = vmax.f32 %v2652, 0.0
    %v2654 = vld [vmem:[%s9] sm:$0xff]
    %v2655 = vld [vmem:[%s9 + $0x8] sm:$0xff]
    %v2656 = vld [vmem:[%s9 + $0x10] sm:$0xff]
    %v2657 = vld [vmem:[%s9 + $0x18] sm:$0xff]
    %vm2658 = vcmask 64512
    %v2660 = vsel %vm2658, %v2654, 0
    %v2663 = vsel %vm2658, %v2655, 0
    %v2666 = vsel %vm2658, %v2656, 0
    %v2669 = vsel %vm2658, %v2657, 0
    %2671 = vmatprep.subr.mxu0 0.0
    %2672 = vmatpush1.msra.mxu0 0.0
    %2673 = vmatprep.subr.mxu0 0.0
    %2674 = vmatpush1.msra.mxu0 0.0
    %2675 = vmatprep.subr.mxu0 0.0
    %2676 = vmatpush1.msra.mxu0 0.0
    %2677 = vmatprep.subr.mxu0 0.0
    %2678 = vmatpush1.msra.mxu0 0.0
    %2679 = vmatprep.subr.mxu0 0.0
    %2680 = vmatpush1.msra.mxu0 0.0
    %2681 = vmatprep.subr.mxu0 0.0
    %2682 = vmatpush1.msra.mxu0 0.0
    %2683 = vmatprep.subr.mxu0 0.0
    %2684 = vmatpush1.msra.mxu0 0.0
    %2685 = vmatprep.subr.mxu0 0.0
    %2686 = vmatpush1.msra.mxu0 0.0
    %2687 = vmatprep.subr.mxu0 0.0
    %2688 = vmatpush1.msra.mxu0 0.0
    %2689 = vmatprep.subr.mxu0 0.0
    %2690 = vmatpush1.msra.mxu0 0.0
    %2691 = vmatprep.subr.mxu0 0.0
    %2692 = vmatpush1.msra.mxu0 0.0
    %2693 = vmatprep.subr.mxu0 0.0
    %2694 = vmatpush1.msra.mxu0 0.0
    %2695 = vmatprep.subr.mxu0 0.0
    %2696 = vmatpush1.msra.mxu0 0.0
    %2697 = vmatprep.subr.mxu0 0.0
    %2698 = vmatpush1.msra.mxu0 0.0
    %2699 = vmatprep.subr.mxu0 0.0
    %2700 = vmatpush1.msra.mxu0 0.0
    %2701 = vmatprep.subr.mxu0 0.0
    %2702 = vmatpush1.msra.mxu0 %v2653
    %2703 = vmatprep.subr.mxu0 0.0
    %2704 = vmatpush2.msra.mxu0 0.0
    %2705 = vmatprep.subr.mxu0 0.0
    %2706 = vmatpush2.msra.mxu0 0.0
    %2707 = vmatprep.subr.mxu0 0.0
    %2708 = vmatpush2.msra.mxu0 0.0
    %2709 = vmatprep.subr.mxu0 0.0
    %2710 = vmatpush2.msra.mxu0 0.0
    %2711 = vmatprep.subr.mxu0 0.0
    %2712 = vmatpush2.msra.mxu0 0.0
    %2713 = vmatprep.subr.mxu0 0.0
    %2714 = vmatpush2.msra.mxu0 0.0
    %2715 = vmatprep.subr.mxu0 0.0
    %2716 = vmatpush2.msra.mxu0 0.0
    %2717 = vmatprep.subr.mxu0 0.0
    %2718 = vmatpush2.msra.mxu0 0.0
    %2719 = vmatprep.subr.mxu0 0.0
    %2720 = vmatpush2.msra.mxu0 0.0
    %2721 = vmatprep.subr.mxu0 0.0
    %2722 = vmatpush2.msra.mxu0 0.0
    %2723 = vmatprep.subr.mxu0 0.0
    %2724 = vmatpush2.msra.mxu0 0.0
    %2725 = vmatprep.subr.mxu0 0.0
    %2726 = vmatpush2.msra.mxu0 0.0
    %2727 = vmatprep.subr.mxu0 0.0
    %2728 = vmatpush2.msra.mxu0 0.0
    %2729 = vmatprep.subr.mxu0 0.0
    %2730 = vmatpush2.msra.mxu0 0.0
    %2731 = vmatprep.subr.mxu0 0.0
    %2732 = vmatpush2.msra.mxu0 0.0
    %2733 = vmatprep.subr.mxu0 0.0
    %2734 = vmatpush2.msra.mxu0 0.0
    %2735 = vmatprep.mubr.f32.mxu0 0.0
    %2736 = vmatmul.mubr.f32.gmra.mxu0 %v2660
    %v2737 = vpop.f32.mrf.mxu0
    %v2738 = vadd.f32 0.0, %v2737
    %v2739 = vpop.f32.mrf.mxu0
    %2740 = vmatprep.mubr.f32.mxu0 0.0
    %2741 = vmatmul.mubr.f32.gmra.mxu0 %v2663
    %v2742 = vpop.f32.mrf.mxu0
    %v2743 = vadd.f32 0.0, %v2742
    %v2744 = vpop.f32.mrf.mxu0
    %2745 = vmatprep.mubr.f32.mxu0 0.0
    %2746 = vmatmul.mubr.f32.gmra.mxu0 %v2666
    %v2747 = vpop.f32.mrf.mxu0
    %v2748 = vadd.f32 0.0, %v2747
    %v2749 = vpop.f32.mrf.mxu0
    %2750 = vmatprep.mubr.f32.mxu0 0.0
    %2751 = vmatmul.mubr.f32.gmra.mxu0 %v2669
    %v2752 = vpop.f32.mrf.mxu0
    %v2753 = vadd.f32 0.0, %v2752
    %v2754 = vpop.f32.mrf.mxu0
    %2755 = vdwg.mxu0
    %v2756 = vld [vmem:[%s11] sm:$0x1]
    %v2757 = vld [vmem:[%s10] sm:$0xff]
    %v2758 = vld [vmem:[%s10 + $0x8] sm:$0xff]
    %v2759 = vld [vmem:[%s10 + $0x10] sm:$0xff]
    %v2760 = vld [vmem:[%s10 + $0x18] sm:$0xff]
    %v2761 = vld [vmem:[%s10 + $0x20] sm:$0xff]
    %v2762 = vld [vmem:[%s10 + $0x28] sm:$0xff]
    %v2763 = vld [vmem:[%s10 + $0x30] sm:$0xff]
    %v2764 = vld [vmem:[%s10 + $0x38] sm:$0xff]
    %v2765 = vld [vmem:[%s10 + $0x40] sm:$0xff]
    %v2766 = vld [vmem:[%s10 + $0x48] sm:$0xff]
    %v2767 = vld [vmem:[%s10 + $0x50] sm:$0xff]
    %v2768 = vld [vmem:[%s10 + $0x58] sm:$0xff]
    %v2769 = vld [vmem:[%s10 + $0x60] sm:$0xff]
    %v2770 = vld [vmem:[%s10 + $0x68] sm:$0xff]
    %v2771 = vld [vmem:[%s10 + $0x70] sm:$0xff]
    %v2772 = vld [vmem:[%s10 + $0x78] sm:$0xff]
    %2773 = vmatprep.subr.mxu0 0.0
    %2774 = vmatpush1.msra.mxu0 %v2772
    %2775 = vmatprep.subr.mxu0 0.0
    %2776 = vmatpush1.msra.mxu0 %v2771
    %2777 = vmatprep.subr.mxu0 0.0
    %2778 = vmatpush1.msra.mxu0 %v2770
    %2779 = vmatprep.subr.mxu0 0.0
    %2780 = vmatpush1.msra.mxu0 %v2769
    %2781 = vmatprep.subr.mxu0 0.0
    %2782 = vmatpush1.msra.mxu0 %v2768
    %2783 = vmatprep.subr.mxu0 0.0
    %2784 = vmatpush1.msra.mxu0 %v2767
    %2785 = vmatprep.subr.mxu0 0.0
    %2786 = vmatpush1.msra.mxu0 %v2766
    %2787 = vmatprep.subr.mxu0 0.0
    %2788 = vmatpush1.msra.mxu0 %v2765
    %2789 = vmatprep.subr.mxu0 0.0
    %2790 = vmatpush1.msra.mxu0 %v2764
    %2791 = vmatprep.subr.mxu0 0.0
    %2792 = vmatpush1.msra.mxu0 %v2763
    %2793 = vmatprep.subr.mxu0 0.0
    %2794 = vmatpush1.msra.mxu0 %v2762
    %2795 = vmatprep.subr.mxu0 0.0
    %2796 = vmatpush1.msra.mxu0 %v2761
    %2797 = vmatprep.subr.mxu0 0.0
    %2798 = vmatpush1.msra.mxu0 %v2760
    %2799 = vmatprep.subr.mxu0 0.0
    %2800 = vmatpush1.msra.mxu0 %v2759
    %2801 = vmatprep.subr.mxu0 0.0
    %2802 = vmatpush1.msra.mxu0 %v2758
    %2803 = vmatprep.subr.mxu0 0.0
    %2804 = vmatpush1.msra.mxu0 %v2757
    %2805 = vmatprep.subr.mxu0 0.0
    %2806 = vmatpush2.msra.mxu0 0.0
    %2807 = vmatprep.subr.mxu0 0.0
    %2808 = vmatpush2.msra.mxu0 0.0
    %2809 = vmatprep.subr.mxu0 0.0
    %2810 = vmatpush2.msra.mxu0 0.0
    %2811 = vmatprep.subr.mxu0 0.0
    %2812 = vmatpush2.msra.mxu0 0.0
    %2813 = vmatprep.subr.mxu0 0.0
    %2814 = vmatpush2.msra.mxu0 0.0
    %2815 = vmatprep.subr.mxu0 0.0
    %2816 = vmatpush2.msra.mxu0 0.0
    %2817 = vmatprep.subr.mxu0 0.0
    %2818 = vmatpush2.msra.mxu0 0.0
    %2819 = vmatprep.subr.mxu0 0.0
    %2820 = vmatpush2.msra.mxu0 0.0
    %2821 = vmatprep.subr.mxu0 0.0
    %2822 = vmatpush2.msra.mxu0 0.0
    %2823 = vmatprep.subr.mxu0 0.0
    %2824 = vmatpush2.msra.mxu0 0.0
    %2825 = vmatprep.subr.mxu0 0.0
    %2826 = vmatpush2.msra.mxu0 0.0
    %2827 = vmatprep.subr.mxu0 0.0
    %2828 = vmatpush2.msra.mxu0 0.0
    %2829 = vmatprep.subr.mxu0 0.0
    %2830 = vmatpush2.msra.mxu0 0.0
    %2831 = vmatprep.subr.mxu0 0.0
    %2832 = vmatpush2.msra.mxu0 0.0
    %2833 = vmatprep.subr.mxu0 0.0
    %2834 = vmatpush2.msra.mxu0 0.0
    %2835 = vmatprep.subr.mxu0 0.0
    %2836 = vmatpush2.msra.mxu0 0.0
    %2837 = vmatprep.mubr.f32.mxu0 0.0
    %2838 = vmatmul.mubr.f32.gmra.mxu0 %v2738
    %v2839 = vpop.f32.mrf.mxu0
    %v2840 = vadd.f32 0.0, %v2839
    %v2841 = vpop.f32.mrf.mxu0
    %2842 = vdwg.mxu0
    %v2844 = vlaneseq
    %v2845 = vshrl.u32 %v2844, 7
    %v2846 = vsub.s32 0, %v2845
    %v2847 = vrot.slane %v2756, %v2846
    %v2849 = vadd.f32 %v2847, %v2840
    %s2850 = scalar_lea.vmem %s10, 128
    %v2851 = vld [vmem:[%s2850] sm:$0xff]
    %v2852 = vld [vmem:[%s2850 + $0x8] sm:$0xff]
    %v2853 = vld [vmem:[%s2850 + $0x10] sm:$0xff]
    %v2854 = vld [vmem:[%s2850 + $0x18] sm:$0xff]
    %v2855 = vld [vmem:[%s2850 + $0x20] sm:$0xff]
    %v2856 = vld [vmem:[%s2850 + $0x28] sm:$0xff]
    %v2857 = vld [vmem:[%s2850 + $0x30] sm:$0xff]
    %v2858 = vld [vmem:[%s2850 + $0x38] sm:$0xff]
    %v2859 = vld [vmem:[%s2850 + $0x40] sm:$0xff]
    %v2860 = vld [vmem:[%s2850 + $0x48] sm:$0xff]
    %v2861 = vld [vmem:[%s2850 + $0x50] sm:$0xff]
    %v2862 = vld [vmem:[%s2850 + $0x58] sm:$0xff]
    %v2863 = vld [vmem:[%s2850 + $0x60] sm:$0xff]
    %v2864 = vld [vmem:[%s2850 + $0x68] sm:$0xff]
    %v2865 = vld [vmem:[%s2850 + $0x70] sm:$0xff]
    %v2866 = vld [vmem:[%s2850 + $0x78] sm:$0xff]
    %2867 = vmatprep.subr.mxu0 0.0
    %2868 = vmatpush1.msra.mxu0 %v2866
    %2869 = vmatprep.subr.mxu0 0.0
    %2870 = vmatpush1.msra.mxu0 %v2865
    %2871 = vmatprep.subr.mxu0 0.0
    %2872 = vmatpush1.msra.mxu0 %v2864
    %2873 = vmatprep.subr.mxu0 0.0
    %2874 = vmatpush1.msra.mxu0 %v2863
    %2875 = vmatprep.subr.mxu0 0.0
    %2876 = vmatpush1.msra.mxu0 %v2862
    %2877 = vmatprep.subr.mxu0 0.0
    %2878 = vmatpush1.msra.mxu0 %v2861
    %2879 = vmatprep.subr.mxu0 0.0
    %2880 = vmatpush1.msra.mxu0 %v2860
    %2881 = vmatprep.subr.mxu0 0.0
    %2882 = vmatpush1.msra.mxu0 %v2859
    %2883 = vmatprep.subr.mxu0 0.0
    %2884 = vmatpush1.msra.mxu0 %v2858
    %2885 = vmatprep.subr.mxu0 0.0
    %2886 = vmatpush1.msra.mxu0 %v2857
    %2887 = vmatprep.subr.mxu0 0.0
    %2888 = vmatpush1.msra.mxu0 %v2856
    %2889 = vmatprep.subr.mxu0 0.0
    %2890 = vmatpush1.msra.mxu0 %v2855
    %2891 = vmatprep.subr.mxu0 0.0
    %2892 = vmatpush1.msra.mxu0 %v2854
    %2893 = vmatprep.subr.mxu0 0.0
    %2894 = vmatpush1.msra.mxu0 %v2853
    %2895 = vmatprep.subr.mxu0 0.0
    %2896 = vmatpush1.msra.mxu0 %v2852
    %2897 = vmatprep.subr.mxu0 0.0
    %2898 = vmatpush1.msra.mxu0 %v2851
    %2899 = vmatprep.subr.mxu0 0.0
    %2900 = vmatpush2.msra.mxu0 0.0
    %2901 = vmatprep.subr.mxu0 0.0
    %2902 = vmatpush2.msra.mxu0 0.0
    %2903 = vmatprep.subr.mxu0 0.0
    %2904 = vmatpush2.msra.mxu0 0.0
    %2905 = vmatprep.subr.mxu0 0.0
    %2906 = vmatpush2.msra.mxu0 0.0
    %2907 = vmatprep.subr.mxu0 0.0
    %2908 = vmatpush2.msra.mxu0 0.0
    %2909 = vmatprep.subr.mxu0 0.0
    %2910 = vmatpush2.msra.mxu0 0.0
    %2911 = vmatprep.subr.mxu0 0.0
    %2912 = vmatpush2.msra.mxu0 0.0
    %2913 = vmatprep.subr.mxu0 0.0
    %2914 = vmatpush2.msra.mxu0 0.0
    %2915 = vmatprep.subr.mxu0 0.0
    %2916 = vmatpush2.msra.mxu0 0.0
    %2917 = vmatprep.subr.mxu0 0.0
    %2918 = vmatpush2.msra.mxu0 0.0
    %2919 = vmatprep.subr.mxu0 0.0
    %2920 = vmatpush2.msra.mxu0 0.0
    %2921 = vmatprep.subr.mxu0 0.0
    %2922 = vmatpush2.msra.mxu0 0.0
    %2923 = vmatprep.subr.mxu0 0.0
    %2924 = vmatpush2.msra.mxu0 0.0
    %2925 = vmatprep.subr.mxu0 0.0
    %2926 = vmatpush2.msra.mxu0 0.0
    %2927 = vmatprep.subr.mxu0 0.0
    %2928 = vmatpush2.msra.mxu0 0.0
    %2929 = vmatprep.subr.mxu0 0.0
    %2930 = vmatpush2.msra.mxu0 0.0
    %2931 = vmatprep.mubr.f32.mxu0 0.0
    %2932 = vmatmul.mubr.f32.gmra.mxu0 %v2743
    %v2933 = vpop.f32.mrf.mxu0
    %v2934 = vadd.f32 0.0, %v2933
    %v2935 = vpop.f32.mrf.mxu0
    %2936 = vdwg.mxu0
    %v2937 = vadd.f32 %v2849, %v2934
    %s2938 = scalar_lea.vmem %s10, 256
    %v2939 = vld [vmem:[%s2938] sm:$0xff]
    %v2940 = vld [vmem:[%s2938 + $0x8] sm:$0xff]
    %v2941 = vld [vmem:[%s2938 + $0x10] sm:$0xff]
    %v2942 = vld [vmem:[%s2938 + $0x18] sm:$0xff]
    %v2943 = vld [vmem:[%s2938 + $0x20] sm:$0xff]
    %v2944 = vld [vmem:[%s2938 + $0x28] sm:$0xff]
    %v2945 = vld [vmem:[%s2938 + $0x30] sm:$0xff]
    %v2946 = vld [vmem:[%s2938 + $0x38] sm:$0xff]
    %v2947 = vld [vmem:[%s2938 + $0x40] sm:$0xff]
    %v2948 = vld [vmem:[%s2938 + $0x48] sm:$0xff]
    %v2949 = vld [vmem:[%s2938 + $0x50] sm:$0xff]
    %v2950 = vld [vmem:[%s2938 + $0x58] sm:$0xff]
    %v2951 = vld [vmem:[%s2938 + $0x60] sm:$0xff]
    %v2952 = vld [vmem:[%s2938 + $0x68] sm:$0xff]
    %v2953 = vld [vmem:[%s2938 + $0x70] sm:$0xff]
    %v2954 = vld [vmem:[%s2938 + $0x78] sm:$0xff]
    %2955 = vmatprep.subr.mxu0 0.0
    %2956 = vmatpush1.msra.mxu0 %v2954
    %2957 = vmatprep.subr.mxu0 0.0
    %2958 = vmatpush1.msra.mxu0 %v2953
    %2959 = vmatprep.subr.mxu0 0.0
    %2960 = vmatpush1.msra.mxu0 %v2952
    %2961 = vmatprep.subr.mxu0 0.0
    %2962 = vmatpush1.msra.mxu0 %v2951
    %2963 = vmatprep.subr.mxu0 0.0
    %2964 = vmatpush1.msra.mxu0 %v2950
    %2965 = vmatprep.subr.mxu0 0.0
    %2966 = vmatpush1.msra.mxu0 %v2949
    %2967 = vmatprep.subr.mxu0 0.0
    %2968 = vmatpush1.msra.mxu0 %v2948
    %2969 = vmatprep.subr.mxu0 0.0
    %2970 = vmatpush1.msra.mxu0 %v2947
    %2971 = vmatprep.subr.mxu0 0.0
    %2972 = vmatpush1.msra.mxu0 %v2946
    %2973 = vmatprep.subr.mxu0 0.0
    %2974 = vmatpush1.msra.mxu0 %v2945
    %2975 = vmatprep.subr.mxu0 0.0
    %2976 = vmatpush1.msra.mxu0 %v2944
    %2977 = vmatprep.subr.mxu0 0.0
    %2978 = vmatpush1.msra.mxu0 %v2943
    %2979 = vmatprep.subr.mxu0 0.0
    %2980 = vmatpush1.msra.mxu0 %v2942
    %2981 = vmatprep.subr.mxu0 0.0
    %2982 = vmatpush1.msra.mxu0 %v2941
    %2983 = vmatprep.subr.mxu0 0.0
    %2984 = vmatpush1.msra.mxu0 %v2940
    %2985 = vmatprep.subr.mxu0 0.0
    %2986 = vmatpush1.msra.mxu0 %v2939
    %2987 = vmatprep.subr.mxu0 0.0
    %2988 = vmatpush2.msra.mxu0 0.0
    %2989 = vmatprep.subr.mxu0 0.0
    %2990 = vmatpush2.msra.mxu0 0.0
    %2991 = vmatprep.subr.mxu0 0.0
    %2992 = vmatpush2.msra.mxu0 0.0
    %2993 = vmatprep.subr.mxu0 0.0
    %2994 = vmatpush2.msra.mxu0 0.0
    %2995 = vmatprep.subr.mxu0 0.0
    %2996 = vmatpush2.msra.mxu0 0.0
    %2997 = vmatprep.subr.mxu0 0.0
    %2998 = vmatpush2.msra.mxu0 0.0
    %2999 = vmatprep.subr.mxu0 0.0
    %3000 = vmatpush2.msra.mxu0 0.0
    %3001 = vmatprep.subr.mxu0 0.0
    %3002 = vmatpush2.msra.mxu0 0.0
    %3003 = vmatprep.subr.mxu0 0.0
    %3004 = vmatpush2.msra.mxu0 0.0
    %3005 = vmatprep.subr.mxu0 0.0
    %3006 = vmatpush2.msra.mxu0 0.0
    %3007 = vmatprep.subr.mxu0 0.0
    %3008 = vmatpush2.msra.mxu0 0.0
    %3009 = vmatprep.subr.mxu0 0.0
    %3010 = vmatpush2.msra.mxu0 0.0
    %3011 = vmatprep.subr.mxu0 0.0
    %3012 = vmatpush2.msra.mxu0 0.0
    %3013 = vmatprep.subr.mxu0 0.0
    %3014 = vmatpush2.msra.mxu0 0.0
    %3015 = vmatprep.subr.mxu0 0.0
    %3016 = vmatpush2.msra.mxu0 0.0
    %3017 = vmatprep.subr.mxu0 0.0
    %3018 = vmatpush2.msra.mxu0 0.0
    %3019 = vmatprep.mubr.f32.mxu0 0.0
    %3020 = vmatmul.mubr.f32.gmra.mxu0 %v2748
    %v3021 = vpop.f32.mrf.mxu0
    %v3022 = vadd.f32 0.0, %v3021
    %v3023 = vpop.f32.mrf.mxu0
    %3024 = vdwg.mxu0
    %v3025 = vadd.f32 %v2937, %v3022
    %s3026 = scalar_lea.vmem %s10, 384
    %v3027 = vld [vmem:[%s3026] sm:$0xff]
    %v3028 = vld [vmem:[%s3026 + $0x8] sm:$0xff]
    %v3029 = vld [vmem:[%s3026 + $0x10] sm:$0xff]
    %v3030 = vld [vmem:[%s3026 + $0x18] sm:$0xff]
    %v3031 = vld [vmem:[%s3026 + $0x20] sm:$0xff]
    %v3032 = vld [vmem:[%s3026 + $0x28] sm:$0xff]
    %v3033 = vld [vmem:[%s3026 + $0x30] sm:$0xff]
    %v3034 = vld [vmem:[%s3026 + $0x38] sm:$0xff]
    %v3035 = vld [vmem:[%s3026 + $0x40] sm:$0xff]
    %v3036 = vld [vmem:[%s3026 + $0x48] sm:$0xff]
    %v3037 = vld [vmem:[%s3026 + $0x50] sm:$0xff]
    %v3038 = vld [vmem:[%s3026 + $0x58] sm:$0xff]
    %v3039 = vld [vmem:[%s3026 + $0x60] sm:$0xff]
    %v3040 = vld [vmem:[%s3026 + $0x68] sm:$0xff]
    %v3041 = vld [vmem:[%s3026 + $0x70] sm:$0xff]
    %v3042 = vld [vmem:[%s3026 + $0x78] sm:$0xff]
    %3043 = vmatprep.subr.mxu0 0.0
    %3044 = vmatpush1.msra.mxu0 %v3042
    %3045 = vmatprep.subr.mxu0 0.0
    %3046 = vmatpush1.msra.mxu0 %v3041
    %3047 = vmatprep.subr.mxu0 0.0
    %3048 = vmatpush1.msra.mxu0 %v3040
    %3049 = vmatprep.subr.mxu0 0.0
    %3050 = vmatpush1.msra.mxu0 %v3039
    %3051 = vmatprep.subr.mxu0 0.0
    %3052 = vmatpush1.msra.mxu0 %v3038
    %3053 = vmatprep.subr.mxu0 0.0
    %3054 = vmatpush1.msra.mxu0 %v3037
    %3055 = vmatprep.subr.mxu0 0.0
    %3056 = vmatpush1.msra.mxu0 %v3036
    %3057 = vmatprep.subr.mxu0 0.0
    %3058 = vmatpush1.msra.mxu0 %v3035
    %3059 = vmatprep.subr.mxu0 0.0
    %3060 = vmatpush1.msra.mxu0 %v3034
    %3061 = vmatprep.subr.mxu0 0.0
    %3062 = vmatpush1.msra.mxu0 %v3033
    %3063 = vmatprep.subr.mxu0 0.0
    %3064 = vmatpush1.msra.mxu0 %v3032
    %3065 = vmatprep.subr.mxu0 0.0
    %3066 = vmatpush1.msra.mxu0 %v3031
    %3067 = vmatprep.subr.mxu0 0.0
    %3068 = vmatpush1.msra.mxu0 %v3030
    %3069 = vmatprep.subr.mxu0 0.0
    %3070 = vmatpush1.msra.mxu0 %v3029
    %3071 = vmatprep.subr.mxu0 0.0
    %3072 = vmatpush1.msra.mxu0 %v3028
    %3073 = vmatprep.subr.mxu0 0.0
    %3074 = vmatpush1.msra.mxu0 %v3027
    %3075 = vmatprep.subr.mxu0 0.0
    %3076 = vmatpush2.msra.mxu0 0.0
    %3077 = vmatprep.subr.mxu0 0.0
    %3078 = vmatpush2.msra.mxu0 0.0
    %3079 = vmatprep.subr.mxu0 0.0
    %3080 = vmatpush2.msra.mxu0 0.0
    %3081 = vmatprep.subr.mxu0 0.0
    %3082 = vmatpush2.msra.mxu0 0.0
    %3083 = vmatprep.subr.mxu0 0.0
    %3084 = vmatpush2.msra.mxu0 0.0
    %3085 = vmatprep.subr.mxu0 0.0
    %3086 = vmatpush2.msra.mxu0 0.0
    %3087 = vmatprep.subr.mxu0 0.0
    %3088 = vmatpush2.msra.mxu0 0.0
    %3089 = vmatprep.subr.mxu0 0.0
    %3090 = vmatpush2.msra.mxu0 0.0
    %3091 = vmatprep.subr.mxu0 0.0
    %3092 = vmatpush2.msra.mxu0 0.0
    %3093 = vmatprep.subr.mxu0 0.0
    %3094 = vmatpush2.msra.mxu0 0.0
    %3095 = vmatprep.subr.mxu0 0.0
    %3096 = vmatpush2.msra.mxu0 0.0
    %3097 = vmatprep.subr.mxu0 0.0
    %3098 = vmatpush2.msra.mxu0 0.0
    %3099 = vmatprep.subr.mxu0 0.0
    %3100 = vmatpush2.msra.mxu0 0.0
    %3101 = vmatprep.subr.mxu0 0.0
    %3102 = vmatpush2.msra.mxu0 0.0
    %3103 = vmatprep.subr.mxu0 0.0
    %3104 = vmatpush2.msra.mxu0 0.0
    %3105 = vmatprep.subr.mxu0 0.0
    %3106 = vmatpush2.msra.mxu0 0.0
    %3107 = vmatprep.mubr.f32.mxu0 0.0
    %3108 = vmatmul.mubr.f32.gmra.mxu0 %v2753
    %v3109 = vpop.f32.mrf.mxu0
    %v3110 = vadd.f32 0.0, %v3109
    %v3111 = vpop.f32.mrf.mxu0
    %3112 = vdwg.mxu0
    %v3113 = vadd.f32 %v3025, %v3110
    %v3114 = vmax.f32 %v3113, 0.0
    %v3115 = vld [vmem:[%s12] sm:$0xff]
    %v3116 = vld [vmem:[%s12 + $0x8] sm:$0xff]
    %v3117 = vld [vmem:[%s12 + $0x10] sm:$0xff]
    %v3118 = vld [vmem:[%s12 + $0x18] sm:$0xff]
    %v3119 = vld [vmem:[%s12 + $0x20] sm:$0xff]
    %v3120 = vld [vmem:[%s12 + $0x28] sm:$0xff]
    %v3121 = vld [vmem:[%s12 + $0x30] sm:$0xff]
    %v3122 = vld [vmem:[%s12 + $0x38] sm:$0xff]
    %v3123 = vld [vmem:[%s12 + $0x40] sm:$0xff]
    %v3124 = vld [vmem:[%s12 + $0x48] sm:$0xff]
    %v3125 = vld [vmem:[%s12 + $0x50] sm:$0xff]
    %v3126 = vld [vmem:[%s12 + $0x58] sm:$0xff]
    %v3127 = vld [vmem:[%s12 + $0x60] sm:$0xff]
    %v3128 = vld [vmem:[%s12 + $0x68] sm:$0xff]
    %v3129 = vld [vmem:[%s12 + $0x70] sm:$0xff]
    %v3130 = vld [vmem:[%s12 + $0x78] sm:$0xff]
    %v3131 = vld [vmem:[%s13] sm:$0x1]
    %v3133 = vlaneseq
    %v3134 = vshrl.u32 %v3133, 7
    %v3135 = vsub.s32 0, %v3134
    %v3136 = vrot.slane %v3131, %v3135
    %3138 = vmatprep.subr.mxu0 0.0
    %3139 = vmatpush1.msra.mxu0 %v3130
    %3140 = vmatprep.subr.mxu0 0.0
    %3141 = vmatpush1.msra.mxu0 %v3129
    %3142 = vmatprep.subr.mxu0 0.0
    %3143 = vmatpush1.msra.mxu0 %v3128
    %3144 = vmatprep.subr.mxu0 0.0
    %3145 = vmatpush1.msra.mxu0 %v3127
    %3146 = vmatprep.subr.mxu0 0.0
    %3147 = vmatpush1.msra.mxu0 %v3126
    %3148 = vmatprep.subr.mxu0 0.0
    %3149 = vmatpush1.msra.mxu0 %v3125
    %3150 = vmatprep.subr.mxu0 0.0
    %3151 = vmatpush1.msra.mxu0 %v3124
    %3152 = vmatprep.subr.mxu0 0.0
    %3153 = vmatpush1.msra.mxu0 %v3123
    %3154 = vmatprep.subr.mxu0 0.0
    %3155 = vmatpush1.msra.mxu0 %v3122
    %3156 = vmatprep.subr.mxu0 0.0
    %3157 = vmatpush1.msra.mxu0 %v3121
    %3158 = vmatprep.subr.mxu0 0.0
    %3159 = vmatpush1.msra.mxu0 %v3120
    %3160 = vmatprep.subr.mxu0 0.0
    %3161 = vmatpush1.msra.mxu0 %v3119
    %3162 = vmatprep.subr.mxu0 0.0
    %3163 = vmatpush1.msra.mxu0 %v3118
    %3164 = vmatprep.subr.mxu0 0.0
    %3165 = vmatpush1.msra.mxu0 %v3117
    %3166 = vmatprep.subr.mxu0 0.0
    %3167 = vmatpush1.msra.mxu0 %v3116
    %3168 = vmatprep.subr.mxu0 0.0
    %3169 = vmatpush1.msra.mxu0 %v3115
    %3170 = vmatprep.subr.mxu0 0.0
    %3171 = vmatpush2.msra.mxu0 0.0
    %3172 = vmatprep.subr.mxu0 0.0
    %3173 = vmatpush2.msra.mxu0 0.0
    %3174 = vmatprep.subr.mxu0 0.0
    %3175 = vmatpush2.msra.mxu0 0.0
    %3176 = vmatprep.subr.mxu0 0.0
    %3177 = vmatpush2.msra.mxu0 0.0
    %3178 = vmatprep.subr.mxu0 0.0
    %3179 = vmatpush2.msra.mxu0 0.0
    %3180 = vmatprep.subr.mxu0 0.0
    %3181 = vmatpush2.msra.mxu0 0.0
    %3182 = vmatprep.subr.mxu0 0.0
    %3183 = vmatpush2.msra.mxu0 0.0
    %3184 = vmatprep.subr.mxu0 0.0
    %3185 = vmatpush2.msra.mxu0 0.0
    %3186 = vmatprep.subr.mxu0 0.0
    %3187 = vmatpush2.msra.mxu0 0.0
    %3188 = vmatprep.subr.mxu0 0.0
    %3189 = vmatpush2.msra.mxu0 0.0
    %3190 = vmatprep.subr.mxu0 0.0
    %3191 = vmatpush2.msra.mxu0 0.0
    %3192 = vmatprep.subr.mxu0 0.0
    %3193 = vmatpush2.msra.mxu0 0.0
    %3194 = vmatprep.subr.mxu0 0.0
    %3195 = vmatpush2.msra.mxu0 0.0
    %3196 = vmatprep.subr.mxu0 0.0
    %3197 = vmatpush2.msra.mxu0 0.0
    %3198 = vmatprep.subr.mxu0 0.0
    %3199 = vmatpush2.msra.mxu0 0.0
    %3200 = vmatprep.subr.mxu0 0.0
    %3201 = vmatpush2.msra.mxu0 0.0
    %3202 = vmatprep.mubr.f32.mxu0 0.0
    %3203 = vmatmul.mubr.f32.gmra.mxu0 %v3114
    %v3204 = vpop.f32.mrf.mxu0
    %v3205 = vadd.f32 %v3136, %v3204
    %v3206 = vpop.f32.mrf.mxu0
    %3207 = vdwg.mxu0
    %v3208 = vmax.f32 %v3205, 0.0
    %v3209 = vld [vmem:[%s14] sm:$0xff]
    %v3210 = vld [vmem:[%s14 + $0x8] sm:$0xff]
    %v3211 = vld [vmem:[%s14 + $0x10] sm:$0xff]
    %v3212 = vld [vmem:[%s14 + $0x18] sm:$0xff]
    %v3213 = vld [vmem:[%s14 + $0x20] sm:$0xff]
    %v3214 = vld [vmem:[%s14 + $0x28] sm:$0xff]
    %v3215 = vld [vmem:[%s14 + $0x30] sm:$0xff]
    %v3216 = vld [vmem:[%s14 + $0x38] sm:$0xff]
    %v3217 = vld [vmem:[%s14 + $0x40] sm:$0xff]
    %v3218 = vld [vmem:[%s14 + $0x48] sm:$0xff]
    %v3219 = vld [vmem:[%s14 + $0x50] sm:$0xff]
    %v3220 = vld [vmem:[%s14 + $0x58] sm:$0xff]
    %v3221 = vld [vmem:[%s14 + $0x60] sm:$0xff]
    %v3222 = vld [vmem:[%s14 + $0x68] sm:$0xff]
    %v3223 = vld [vmem:[%s14 + $0x70] sm:$0xff]
    %v3224 = vld [vmem:[%s14 + $0x78] sm:$0xff]
    %v3225 = vld [vmem:[%s15] sm:$0x1]
    %v3227 = vlaneseq
    %v3228 = vshrl.u32 %v3227, 7
    %v3229 = vsub.s32 0, %v3228
    %v3230 = vrot.slane %v3225, %v3229
    %3232 = vmatprep.subr.mxu0 0.0
    %3233 = vmatpush1.msra.mxu0 %v3224
    %3234 = vmatprep.subr.mxu0 0.0
    %3235 = vmatpush1.msra.mxu0 %v3223
    %3236 = vmatprep.subr.mxu0 0.0
    %3237 = vmatpush1.msra.mxu0 %v3222
    %3238 = vmatprep.subr.mxu0 0.0
    %3239 = vmatpush1.msra.mxu0 %v3221
    %3240 = vmatprep.subr.mxu0 0.0
    %3241 = vmatpush1.msra.mxu0 %v3220
    %3242 = vmatprep.subr.mxu0 0.0
    %3243 = vmatpush1.msra.mxu0 %v3219
    %3244 = vmatprep.subr.mxu0 0.0
    %3245 = vmatpush1.msra.mxu0 %v3218
    %3246 = vmatprep.subr.mxu0 0.0
    %3247 = vmatpush1.msra.mxu0 %v3217
    %3248 = vmatprep.subr.mxu0 0.0
    %3249 = vmatpush1.msra.mxu0 %v3216
    %3250 = vmatprep.subr.mxu0 0.0
    %3251 = vmatpush1.msra.mxu0 %v3215
    %3252 = vmatprep.subr.mxu0 0.0
    %3253 = vmatpush1.msra.mxu0 %v3214
    %3254 = vmatprep.subr.mxu0 0.0
    %3255 = vmatpush1.msra.mxu0 %v3213
    %3256 = vmatprep.subr.mxu0 0.0
    %3257 = vmatpush1.msra.mxu0 %v3212
    %3258 = vmatprep.subr.mxu0 0.0
    %3259 = vmatpush1.msra.mxu0 %v3211
    %3260 = vmatprep.subr.mxu0 0.0
    %3261 = vmatpush1.msra.mxu0 %v3210
    %3262 = vmatprep.subr.mxu0 0.0
    %3263 = vmatpush1.msra.mxu0 %v3209
    %3264 = vmatprep.subr.mxu0 0.0
    %3265 = vmatpush2.msra.mxu0 0.0
    %3266 = vmatprep.subr.mxu0 0.0
    %3267 = vmatpush2.msra.mxu0 0.0
    %3268 = vmatprep.subr.mxu0 0.0
    %3269 = vmatpush2.msra.mxu0 0.0
    %3270 = vmatprep.subr.mxu0 0.0
    %3271 = vmatpush2.msra.mxu0 0.0
    %3272 = vmatprep.subr.mxu0 0.0
    %3273 = vmatpush2.msra.mxu0 0.0
    %3274 = vmatprep.subr.mxu0 0.0
    %3275 = vmatpush2.msra.mxu0 0.0
    %3276 = vmatprep.subr.mxu0 0.0
    %3277 = vmatpush2.msra.mxu0 0.0
    %3278 = vmatprep.subr.mxu0 0.0
    %3279 = vmatpush2.msra.mxu0 0.0
    %3280 = vmatprep.subr.mxu0 0.0
    %3281 = vmatpush2.msra.mxu0 0.0
    %3282 = vmatprep.subr.mxu0 0.0
    %3283 = vmatpush2.msra.mxu0 0.0
    %3284 = vmatprep.subr.mxu0 0.0
    %3285 = vmatpush2.msra.mxu0 0.0
    %3286 = vmatprep.subr.mxu0 0.0
    %3287 = vmatpush2.msra.mxu0 0.0
    %3288 = vmatprep.subr.mxu0 0.0
    %3289 = vmatpush2.msra.mxu0 0.0
    %3290 = vmatprep.subr.mxu0 0.0
    %3291 = vmatpush2.msra.mxu0 0.0
    %3292 = vmatprep.subr.mxu0 0.0
    %3293 = vmatpush2.msra.mxu0 0.0
    %3294 = vmatprep.subr.mxu0 0.0
    %3295 = vmatpush2.msra.mxu0 0.0
    %3296 = vmatprep.mubr.f32.mxu0 0.0
    %3297 = vmatmul.mubr.f32.gmra.mxu0 %v3208
    %v3298 = vpop.f32.mrf.mxu0
    %v3299 = vadd.f32 %v3230, %v3298
    %v3300 = vpop.f32.mrf.mxu0
    %3301 = vdwg.mxu0
    %v3302 = vmax.f32 %v3299, 0.0
    %3303 = vst [vmem:[#allocation4] sm:$0x3] %v3302
    // Predicated region
    $region66: #{forward.1} parent=1 // pred_check
      _
    $region67: #{forward.1} parent=1 // pred_check_branch
      %3305 = sbr.rel (0) target = $region69
    $region68: #{forward.1} parent=1 // pred_region
      _
    $region69: #{forward.1} parent=1 // pred_fallthru
      _
    // Predicated region
    $region70: #{forward.1} parent=1 // pred_check
      _
    $region71: #{forward.1} parent=1 // pred_check_branch
      %3307 = sbr.rel (0) target = $region73
    $region72: #{forward.1} parent=1 // pred_region
      %s3309 = ssub.s32 512, 512
      %3310 = vsyncadd [#allocation3], %s3309
      %s3311 = sshll.u32 [#allocation2], 4
      %s3312 = int_to_ptr.vmem [resolvable:$true] %s3311
      %3317 = dma.vmem_to_hbm [thread:$0]  %s3312, 512, %s17, [#allocation3], 128, 128, 8
    $region73: #{forward.1} parent=1 // pred_fallthru
      _
    // Predicated region
    $region74: #{forward.1} parent=1 // pred_check
      _
    $region75: #{forward.1} parent=1 // pred_check_branch
      %3319 = sbr.rel (0) target = $region77
    $region76: #{forward.1} parent=1 // pred_region
      %s3321 = ssub.s32 32, 32
      %3322 = vsyncadd [#allocation5], %s3321
      %s3324 = sshll.u32 [#allocation4], 4
      %s3325 = int_to_ptr.vmem [resolvable:$true] %s3324
      %3327 = dma.vmem_to_hbm [thread:$0]  %s3325, 32, %s18, [#allocation5]
    $region77: #{forward.1} parent=1 // pred_fallthru
      _
    // Predicated region
    $region78: #{forward.1} parent=1 // pred_check
      _
    $region79: #{forward.1} parent=1 // pred_check_branch
      %3329 = sbr.rel (0) target = $region81
    $region80: #{forward.1} parent=1 // pred_region
      _
    $region81: #{forward.1} parent=1 // pred_fallthru
      _
    // Predicated region
    $region82: #{forward.1} parent=1 // pred_check
      _
    $region83: #{forward.1} parent=1 // pred_check_branch
      %3331 = sbr.rel (0) target = $region85
    $region84: #{forward.1} parent=1 // pred_region
      %3332 = dma.done [#allocation3], 512
    $region85: #{forward.1} parent=1 // pred_fallthru
      _
    // Predicated region
    $region86: #{forward.1} parent=1 // pred_check
      _
    $region87: #{forward.1} parent=1 // pred_check_branch
      %3334 = sbr.rel (0) target = $region89
    $region88: #{forward.1} parent=1 // pred_region
      %3335 = dma.done [#allocation5], 32
    $region89: #{forward.1} parent=1 // pred_fallthru
      _
    %3336 = vsyncpa [#allocation3], 1
    %3337 = vsyncpa [#allocation5], 1

</llo_original>
